<compile_context>
chip_gen: v6e
topology: v6e:2x2x1
jax: 0.10.0
libtpu: 0.0.40
codegen_flags: <defaults>
</compile_context>

<pallas_src>
import jax
import jax.numpy as jnp
import numpy as np
from jax.experimental import pallas as pl
from jax.experimental.pallas import tpu as pltpu


def _make_encoder_layer_kernel(n_head, d_k, d_v, return_attn):
    f32 = jnp.float32
    bf16 = jnp.bfloat16

    def kernel(x_q_ref, x_kv_ref, neg_ref,
               wq_ref, wkv_ref, wo_ref,
               ln1_g_ref, ln1_b_ref,
               w1_ref, b1_ref, w2_ref, b2_ref,
               ln2_g_ref, ln2_b_ref,
               *refs):
        if return_attn:
            (out_ref, attn_ref,
             q_sc, m_sc, l_sc, acc_sc, ctx_sc, p_sc, mh_sc) = refs
        else:
            out_ref, q_sc, m_sc, l_sc, acc_sc, ctx_sc = refs
            attn_ref = p_sc = mh_sc = None

        ki = pl.program_id(2)
        last_kv = pl.num_programs(2) - 1
        tk = x_kv_ref.shape[0]
        v_off = n_head * d_k

        # ---- first KV block of this (batch, q-tile): init stats + Q projection ----
        @pl.when(ki == 0)
        def _init():
            # One flat (tq, d_model) @ (d_model, H*d_k) bf16 matmul (no broadcast of
            # x across heads); 1/sqrt(d_k) already folded into the weight.
            q2 = jnp.dot(x_q_ref[...].astype(bf16), wq_ref[...],
                         preferred_element_type=f32)
            for h in range(n_head):
                q_sc[h] = q2[:, h * d_k:(h + 1) * d_k].astype(bf16)
            m_sc[...] = jnp.full(m_sc.shape, -jnp.inf, f32)
            l_sc[...] = jnp.zeros(l_sc.shape, f32)
            acc_sc[...] = jnp.zeros(acc_sc.shape, f32)

        # ---- fused K|V projection for this KV block (one wide-N bf16 matmul) ----
        x_kv = x_kv_ref[...].astype(bf16)
        kv2 = jnp.dot(x_kv, wkv_ref[...], preferred_element_type=f32)  # (tk, H*(dk+dv))
        neg = neg_ref[...].astype(f32)                                 # (tq, tk), shared by heads

        # ---- online-softmax attention, one 2-D MXU matmul pair per head ----
        for h in range(n_head):
            k_h = kv2[:, h * d_k:(h + 1) * d_k].astype(bf16)                    # (tk, d_k)
            v_h = kv2[:, v_off + h * d_v:v_off + (h + 1) * d_v].astype(bf16)    # (tk, d_v)
            q_h = q_sc[h]                                                       # (tq, d_k)

            s = jax.lax.dot_general(q_h, k_h, (((1,), (1,)), ((), ())),
                                    preferred_element_type=f32)                 # (tq, tk)
            s = s + neg

            m_prev = m_sc[h]                                                    # (tq, 1)
            m_new = jnp.maximum(m_prev, jnp.max(s, axis=-1, keepdims=True))
            alpha = jnp.exp(m_prev - m_new)
            e = jnp.exp(s - m_new)                                              # (tq, tk)

            l_sc[h] = alpha * l_sc[h] + jnp.sum(e, axis=-1, keepdims=True)
            acc_sc[h] = alpha * acc_sc[h] + jnp.dot(e.astype(bf16), v_h,
                                                    preferred_element_type=f32)
            m_sc[h] = m_new

            if return_attn:
                # Stage this block's numerators and the running max they are
                # relative to (dynamic ki indexes a major dim -> address offset).
                p_sc[h, ki] = e
                mh_sc[h, ki] = m_new

        # ---- last KV block: normalize, out-proj, residual/LN, FFN, residual/LN ----
        @pl.when(ki == last_kv)
        def _epilogue():
            for h in range(n_head):
                inv_l = 1.0 / l_sc[h]        # exact: returned attention rows sum to 1
                ctx_sc[:, h * d_v:(h + 1) * d_v] = (acc_sc[h] * inv_l).astype(bf16)
                if return_attn:
                    m_fin = m_sc[h]
                    for kb in range(p_sc.shape[1]):                  # static unroll
                        scale = jnp.exp(mh_sc[h, kb] - m_fin) * inv_l
                        attn_ref[h, :, kb * tk:(kb + 1) * tk] = (
                            p_sc[h, kb] * scale).astype(attn_ref.dtype)

            # Fused output projection + head sum: one (tq, H*d_v) @ (H*d_v, d_model)
            # matmul; the sum over heads happens inside the MXU accumulation.
            attn_out = jnp.dot(ctx_sc[...], wo_ref[...], preferred_element_type=f32)

            x_q = x_q_ref[...]                                       # f32 residual stream
            h1 = attn_out + x_q
            mu1 = jnp.mean(h1, axis=-1, keepdims=True)
            var1 = jnp.mean(jnp.square(h1 - mu1), axis=-1, keepdims=True)
            h1n = (h1 - mu1) * jax.lax.rsqrt(var1 + 1e-6) * ln1_g_ref[...] + ln1_b_ref[...]

            f = jnp.dot(h1n.astype(bf16), w1_ref[...],
                        preferred_element_type=f32) + b1_ref[...]
            f = jnp.maximum(f, 0.0)                                  # ReLU
            f2 = jnp.dot(f.astype(bf16), w2_ref[...],
                         preferred_element_type=f32) + b2_ref[...]

            h2 = f2 + h1n
            mu2 = jnp.mean(h2, axis=-1, keepdims=True)
            var2 = jnp.mean(jnp.square(h2 - mu2), axis=-1, keepdims=True)
            out_ref[...] = ((h2 - mu2) * jax.lax.rsqrt(var2 + 1e-6)
                            * ln2_g_ref[...] + ln2_b_ref[...]).astype(out_ref.dtype)

    return kernel


def encoder_layer(x, mask, params, *, n_head, d_k, d_v,
                  block_q=256, block_k=256,
                  return_attn=True, attn_dtype=jnp.float32):
    """Pallas TPU forward for EncoderLayer.  Returns (enc_output, enc_slf_attn).

    mask: (B, L, L), nonzero = attend, 0 = masked (or None).
    return_attn=False drops the (B, H, L, L) probability output entirely (the
    largest HBM write / VMEM block); attn_dtype=jnp.bfloat16 halves it if kept.
    """
    B, L, d_model = x.shape
    f32, bf16 = jnp.float32, jnp.bfloat16

    # Sequence tiles: prefer 256 (v6e/v7x MXU is 256 wide), fall back to 128
    # (v5e), else the full (toy) sequence.
    def _pick(pref):
        for t in (pref, 256, 128):
            if t <= L and L % t == 0:
                return t
        return L
    tq, tk = _pick(block_q), _pick(block_k)
    num_kv = L // tk

    # --- trace-time weight / mask prep -------------------------------------------
    wq = (params["wq"] * (d_k ** -0.5)).astype(bf16)                  # (d_model, H*dk), scaled
    wkv = jnp.concatenate([params["wk"], params["wv"]], axis=1).astype(bf16)
    wo = params["wo"].astype(bf16)                                    # (H*dv, d_model)

    if mask is None:
        add_mask = jnp.zeros((B, L, L), bf16)
    else:
        # where(mask == 0) semantics (valid for non-binary masks); bf16 halves DMA.
        add_mask = jnp.where(mask == 0.0, -1e9, 0.0).astype(bf16)

    weights = [wq, wkv, wo,
               params["ln1_g"].astype(f32), params["ln1_b"].astype(f32),
               params["w1"].astype(bf16), params["b1"].astype(f32),
               params["w2"].astype(bf16), params["b2"].astype(f32),
               params["ln2_g"].astype(f32), params["ln2_b"].astype(f32)]

    # Weights: full-shape blocks, constant index map -> fetched once, stay resident.
    # TODO(synk): pipeline_mode=pl.Buffered(1) on these specs would drop the unused
    # second buffer of every weight and free a few MiB for larger tiles on v7x.
    weight_specs = [pl.BlockSpec(w.shape, lambda b, qi, ki: (0, 0)) for w in weights]

    in_specs = [
        pl.BlockSpec((pl.Squeezed(), tq, d_model), lambda b, qi, ki: (b, qi, 0)),   # x: Q rows
        pl.BlockSpec((pl.Squeezed(), tk, d_model), lambda b, qi, ki: (b, ki, 0)),   # x: KV rows
        pl.BlockSpec((pl.Squeezed(), tq, tk),      lambda b, qi, ki: (b, qi, ki)),  # add. mask
    ] + weight_specs

    out_shape = [jax.ShapeDtypeStruct((B, L, d_model), f32)]
    out_specs = [pl.BlockSpec((pl.Squeezed(), tq, d_model), lambda b, qi, ki: (b, qi, 0))]
    scratch_shapes = [
        pltpu.VMEM((n_head, tq, d_k), bf16),        # cached Q (per head)
        pltpu.VMEM((n_head, tq, 1), f32),           # running max m
        pltpu.VMEM((n_head, tq, 1), f32),           # running denom l
        pltpu.VMEM((n_head, tq, d_v), f32),         # context accumulator
        pltpu.VMEM((tq, n_head * d_v), bf16),       # flat context for fused out-proj
    ]
    if return_attn:
        out_shape.append(jax.ShapeDtypeStruct((B, n_head, L, L), attn_dtype))
        out_specs.append(pl.BlockSpec((pl.Squeezed(), n_head, tq, L),
                                      lambda b, qi, ki: (b, 0, qi, 0)))
        scratch_shapes += [
            pltpu.VMEM((n_head, num_kv, tq, tk), f32),   # staged softmax numerators
            pltpu.VMEM((n_head, num_kv, tq, 1), f32),    # running max at staging time
        ]

    kernel = _make_encoder_layer_kernel(n_head, d_k, d_v, return_attn)

    outs = pl.pallas_call(
        kernel,
        out_shape=tuple(out_shape),
        grid=(B, L // tq, num_kv),
        in_specs=in_specs,
        out_specs=tuple(out_specs),
        scratch_shapes=scratch_shapes,
        compiler_params=pltpu.CompilerParams(
            # batch / q-tile feed both TensorCores on v7x; KV axis is the
            # online-softmax reduction and must stay "arbitrary".
            dimension_semantics=("parallel", "parallel", "arbitrary"),
            # Raise the scoped-VMEM ceiling (v5e default is only 16 MiB); 64 MiB
            # is within every chip's physical VMEM.
            vmem_limit_bytes=64 * 1024 * 1024),
    )(x, x, add_mask, *weights)

    if not isinstance(outs, (tuple, list)):
        outs = (outs,)
    if return_attn:
        return outs[0], outs[1]
    return outs[0], None


def encoder_layer_reference(x, mask, p, n_head, d_k, d_v):
    """Pure-JAX f32 reference matching the PyTorch module (eval mode)."""
    B, L, d_model = x.shape
    q = (x @ p["wq"]).reshape(B, L, n_head, d_k).transpose(0, 2, 1, 3)
    k = (x @ p["wk"]).reshape(B, L, n_head, d_k).transpose(0, 2, 1, 3)
    v = (x @ p["wv"]).reshape(B, L, n_head, d_v).transpose(0, 2, 1, 3)
    scores = jnp.einsum("bhqd,bhkd->bhqk", q / jnp.sqrt(jnp.float32(d_k)), k)
    scores = jnp.where(mask[:, None, :, :] == 0.0, -1e9, scores)
    attn = jax.nn.softmax(scores, axis=-1)
    ctx = jnp.einsum("bhqk,bhkd->bhqd", attn, v)
    ctx = ctx.transpose(0, 2, 1, 3).reshape(B, L, n_head * d_v)

    def ln(h, g, b):
        mu = h.mean(-1, keepdims=True)
        var = ((h - mu) ** 2).mean(-1, keepdims=True)
        return (h - mu) / jnp.sqrt(var + 1e-6) * g + b

    h1n = ln(ctx @ p["wo"] + x, p["ln1_g"], p["ln1_b"])
    f = jax.nn.relu(h1n @ p["w1"] + p["b1"])
    h2 = f @ p["w2"] + p["b2"] + h1n
    return ln(h2, p["ln2_g"], p["ln2_b"]), attn


if __name__ == "__main__":
    d_model, d_inner, n_head, d_k, d_v = 32, 64, 4, 8, 8
    B, L = 2, 8

    key = jax.random.PRNGKey(0)
    keys = jax.random.split(key, 16)

    def nrm(k, shape, s=0.05):
        return jax.random.normal(k, shape, jnp.float32) * s

    params = {
        "wq": nrm(keys[0], (d_model, n_head * d_k)),
        "wk": nrm(keys[1], (d_model, n_head * d_k)),
        "wv": nrm(keys[2], (d_model, n_head * d_v)),
        "wo": nrm(keys[3], (n_head * d_v, d_model)),
        "ln1_g": jnp.ones((1, d_model), jnp.float32) + nrm(keys[4], (1, d_model)),
        "ln1_b": nrm(keys[5], (1, d_model)),
        "w1": nrm(keys[6], (d_model, d_inner)),
        "b1": nrm(keys[7], (1, d_inner)),
        "w2": nrm(keys[8], (d_inner, d_model)),
        "b2": nrm(keys[9], (1, d_model)),
        "ln2_g": jnp.ones((1, d_model), jnp.float32) + nrm(keys[10], (1, d_model)),
        "ln2_b": nrm(keys[11], (1, d_model)),
    }

    x = nrm(keys[12], (B, L, d_model), s=1.0)
    # slf_attn_mask: 1 = attend, 0 = masked. Mask out the last key position of batch 1.
    mask = jnp.ones((B, L, L), jnp.float32).at[1, :, L - 1].set(0.0)

    ref_out, ref_attn = encoder_layer_reference(x, mask, params, n_head, d_k, d_v)

    # Full module semantics: output + attention probabilities.
    out, attn = encoder_layer(x, mask, params, n_head=n_head, d_k=d_k, d_v=d_v)
    jax.block_until_ready((out, attn))
    # bf16 MXU path -> compare against f32 reference with looser tolerance.
    np.testing.assert_allclose(np.asarray(out), np.asarray(ref_out), rtol=2e-2, atol=2e-2)
    np.testing.assert_allclose(np.asarray(attn), np.asarray(ref_attn), rtol=2e-2, atol=2e-2)

    # Production/flash path: attention-map output dropped entirely.
    out2, attn2 = encoder_layer(x, mask, params, n_head=n_head, d_k=d_k, d_v=d_v,
                                return_attn=False)
    jax.block_until_ready(out2)
    assert attn2 is None
    np.testing.assert_allclose(np.asarray(out2), np.asarray(ref_out), rtol=2e-2, atol=2e-2)

    print("KERNEL_OK")
</pallas_src>

<mosaic_0001>
module attributes {stable_mosaic.version = 11 : i64} {
  func.func @kernel(%arg0: i32, %arg1: i32, %arg2: i32, %arg3: memref<1x8x32xf32, #tpu.memory_space<vmem>>, %arg4: memref<1x8x32xf32, #tpu.memory_space<vmem>>, %arg5: memref<1x8x8xbf16, #tpu.memory_space<vmem>>, %arg6: memref<32x32xbf16, #tpu.memory_space<vmem>>, %arg7: memref<32x64xbf16, #tpu.memory_space<vmem>>, %arg8: memref<32x32xbf16, #tpu.memory_space<vmem>>, %arg9: memref<1x32xf32, #tpu.memory_space<vmem>>, %arg10: memref<1x32xf32, #tpu.memory_space<vmem>>, %arg11: memref<32x64xbf16, #tpu.memory_space<vmem>>, %arg12: memref<1x64xf32, #tpu.memory_space<vmem>>, %arg13: memref<64x32xbf16, #tpu.memory_space<vmem>>, %arg14: memref<1x32xf32, #tpu.memory_space<vmem>>, %arg15: memref<1x32xf32, #tpu.memory_space<vmem>>, %arg16: memref<1x32xf32, #tpu.memory_space<vmem>>, %arg17: memref<1x8x32xf32, #tpu.memory_space<vmem>>, %arg18: memref<1x4x8x8xf32, #tpu.memory_space<vmem>>, %arg19: memref<4x8x8xbf16, #tpu.memory_space<vmem>>, %arg20: memref<4x8x1xf32, #tpu.memory_space<vmem>>, %arg21: memref<4x8x1xf32, #tpu.memory_space<vmem>>, %arg22: memref<4x8x8xf32, #tpu.memory_space<vmem>>, %arg23: memref<8x32xbf16, #tpu.memory_space<vmem>>, %arg24: memref<4x1x8x8xf32, #tpu.memory_space<vmem>>, %arg25: memref<4x1x8x1xf32, #tpu.memory_space<vmem>>) attributes {dimension_semantics = [#tpu.dimension_semantics<parallel>, #tpu.dimension_semantics<parallel>, #tpu.dimension_semantics<arbitrary>], iteration_bounds = array<i64: 2, 1, 1>, scalar_prefetch = 0 : i64, scratch_operands = 7 : i64, tpu.core_type = #tpu.core_type<tc>, window_params = [{transform_indices = @transform_0, window_bounds = array<i64: 1, 8, 32>}, {transform_indices = @transform_1, window_bounds = array<i64: 1, 8, 32>}, {transform_indices = @transform_2, window_bounds = array<i64: 1, 8, 8>}, {pipeline_mode = #tpu.pipeline_mode<synchronous>, transform_indices = @transform_3, window_bounds = array<i64: 32, 32>}, {pipeline_mode = #tpu.pipeline_mode<synchronous>, transform_indices = @transform_4, window_bounds = array<i64: 32, 64>}, {pipeline_mode = #tpu.pipeline_mode<synchronous>, transform_indices = @transform_5, window_bounds = array<i64: 32, 32>}, {pipeline_mode = #tpu.pipeline_mode<synchronous>, transform_indices = @transform_6, window_bounds = array<i64: 1, 32>}, {pipeline_mode = #tpu.pipeline_mode<synchronous>, transform_indices = @transform_7, window_bounds = array<i64: 1, 32>}, {pipeline_mode = #tpu.pipeline_mode<synchronous>, transform_indices = @transform_8, window_bounds = array<i64: 32, 64>}, {pipeline_mode = #tpu.pipeline_mode<synchronous>, transform_indices = @transform_9, window_bounds = array<i64: 1, 64>}, {pipeline_mode = #tpu.pipeline_mode<synchronous>, transform_indices = @transform_10, window_bounds = array<i64: 64, 32>}, {pipeline_mode = #tpu.pipeline_mode<synchronous>, transform_indices = @transform_11, window_bounds = array<i64: 1, 32>}, {pipeline_mode = #tpu.pipeline_mode<synchronous>, transform_indices = @transform_12, window_bounds = array<i64: 1, 32>}, {pipeline_mode = #tpu.pipeline_mode<synchronous>, transform_indices = @transform_13, window_bounds = array<i64: 1, 32>}, {transform_indices = @transform_14, window_bounds = array<i64: 1, 8, 32>}, {transform_indices = @transform_15, window_bounds = array<i64: 1, 4, 8, 8>}]} {
    %c0_i32 = arith.constant 0 : i32
    %0 = arith.cmpi eq, %arg2, %c0_i32 : i32
    %1 = arith.extui %0 : i1 to i32
    %c0_i32_0 = arith.constant 0 : i32
    %2 = arith.cmpi ne, %1, %c0_i32_0 : i32
    scf.if %2 {
      %c0_131 = arith.constant 0 : index
      %c0_132 = arith.constant 0 : index
      %c0_133 = arith.constant 0 : index
      %206 = vector.load %arg3[%c0_131, %c0_132, %c0_133] : memref<1x8x32xf32, #tpu.memory_space<vmem>>, vector<1x8x32xf32>
      %207 = vector.shape_cast %206 : vector<1x8x32xf32> to vector<8x32xf32>
      %208 = arith.truncf %207 : vector<8x32xf32> to vector<8x32xbf16>
      %c0_134 = arith.constant 0 : index
      %c0_135 = arith.constant 0 : index
      %209 = vector.load %arg6[%c0_134, %c0_135] : memref<32x32xbf16, #tpu.memory_space<vmem>>, vector<32x32xbf16>
      %cst_136 = arith.constant dense<0.000000e+00> : vector<8x32xf32>
      %210 = tpu.matmul %208, %209, %cst_136 {dimension_numbers = #tpu.dot_dimension_numbers<[1], [0], [0], [1], [0, 0, 1, 1], [], []>} : vector<8x32xbf16>, vector<32x32xbf16>, vector<8x32xf32> -> vector<8x32xf32>
      %211 = vector.extract_strided_slice %210 {offsets = [0, 0], sizes = [8, 8], strides = [1, 1]} : vector<8x32xf32> to vector<8x8xf32>
      %212 = arith.truncf %211 : vector<8x8xf32> to vector<8x8xbf16>
      %c0_137 = arith.constant 0 : index
      %c0_138 = arith.constant 0 : index
      %c0_139 = arith.constant 0 : index
      %213 = vector.load %arg19[%c0_137, %c0_138, %c0_139] : memref<4x8x8xbf16, #tpu.memory_space<vmem>>, vector<1x8x8xbf16>
      %214 = vector.shape_cast %213 : vector<1x8x8xbf16> to vector<8x8xbf16>
      %215 = vector.shape_cast %212 : vector<8x8xbf16> to vector<1x8x8xbf16>
      tpu.vector_store %arg19[%c0_137, %c0_138, %c0_139], %215 {strides = array<i32>} : memref<4x8x8xbf16, #tpu.memory_space<vmem>>, vector<1x8x8xbf16>,
      %216 = vector.extract_strided_slice %210 {offsets = [0, 8], sizes = [8, 8], strides = [1, 1]} : vector<8x32xf32> to vector<8x8xf32>
      %217 = arith.truncf %216 : vector<8x8xf32> to vector<8x8xbf16>
      %c1_140 = arith.constant 1 : index
      %c0_141 = arith.constant 0 : index
      %c0_142 = arith.constant 0 : index
      %218 = vector.load %arg19[%c1_140, %c0_141, %c0_142] : memref<4x8x8xbf16, #tpu.memory_space<vmem>>, vector<1x8x8xbf16>
      %219 = vector.shape_cast %218 : vector<1x8x8xbf16> to vector<8x8xbf16>
      %220 = vector.shape_cast %217 : vector<8x8xbf16> to vector<1x8x8xbf16>
      tpu.vector_store %arg19[%c1_140, %c0_141, %c0_142], %220 {strides = array<i32>} : memref<4x8x8xbf16, #tpu.memory_space<vmem>>, vector<1x8x8xbf16>,
      %221 = vector.extract_strided_slice %210 {offsets = [0, 16], sizes = [8, 8], strides = [1, 1]} : vector<8x32xf32> to vector<8x8xf32>
      %222 = arith.truncf %221 : vector<8x8xf32> to vector<8x8xbf16>
      %c2_143 = arith.constant 2 : index
      %c0_144 = arith.constant 0 : index
      %c0_145 = arith.constant 0 : index
      %223 = vector.load %arg19[%c2_143, %c0_144, %c0_145] : memref<4x8x8xbf16, #tpu.memory_space<vmem>>, vector<1x8x8xbf16>
      %224 = vector.shape_cast %223 : vector<1x8x8xbf16> to vector<8x8xbf16>
      %225 = vector.shape_cast %222 : vector<8x8xbf16> to vector<1x8x8xbf16>
      tpu.vector_store %arg19[%c2_143, %c0_144, %c0_145], %225 {strides = array<i32>} : memref<4x8x8xbf16, #tpu.memory_space<vmem>>, vector<1x8x8xbf16>,
      %226 = vector.extract_strided_slice %210 {offsets = [0, 24], sizes = [8, 8], strides = [1, 1]} : vector<8x32xf32> to vector<8x8xf32>
      %227 = arith.truncf %226 : vector<8x8xf32> to vector<8x8xbf16>
      %c3_146 = arith.constant 3 : index
      %c0_147 = arith.constant 0 : index
      %c0_148 = arith.constant 0 : index
      %228 = vector.load %arg19[%c3_146, %c0_147, %c0_148] : memref<4x8x8xbf16, #tpu.memory_space<vmem>>, vector<1x8x8xbf16>
      %229 = vector.shape_cast %228 : vector<1x8x8xbf16> to vector<8x8xbf16>
      %230 = vector.shape_cast %227 : vector<8x8xbf16> to vector<1x8x8xbf16>
      tpu.vector_store %arg19[%c3_146, %c0_147, %c0_148], %230 {strides = array<i32>} : memref<4x8x8xbf16, #tpu.memory_space<vmem>>, vector<1x8x8xbf16>,
      %cst_149 = arith.constant 0xFF800000 : f32
      %231 = vector.broadcast %cst_149 : f32 to vector<4x8x1xf32>
      %c0_150 = arith.constant 0 : index
      %c0_151 = arith.constant 0 : index
      %c0_152 = arith.constant 0 : index
      %232 = vector.load %arg20[%c0_150, %c0_151, %c0_152] : memref<4x8x1xf32, #tpu.memory_space<vmem>>, vector<4x8x1xf32>
      tpu.vector_store %arg20[%c0_150, %c0_151, %c0_152], %231 {strides = array<i32>} : memref<4x8x1xf32, #tpu.memory_space<vmem>>, vector<4x8x1xf32>,
      %cst_153 = arith.constant 0.000000e+00 : f32
      %233 = vector.broadcast %cst_153 : f32 to vector<4x8x1xf32>
      %c0_154 = arith.constant 0 : index
      %c0_155 = arith.constant 0 : index
      %c0_156 = arith.constant 0 : index
      %234 = vector.load %arg21[%c0_154, %c0_155, %c0_156] : memref<4x8x1xf32, #tpu.memory_space<vmem>>, vector<4x8x1xf32>
      tpu.vector_store %arg21[%c0_154, %c0_155, %c0_156], %233 {strides = array<i32>} : memref<4x8x1xf32, #tpu.memory_space<vmem>>, vector<4x8x1xf32>,
      %cst_157 = arith.constant 0.000000e+00 : f32
      %235 = vector.broadcast %cst_157 : f32 to vector<4x8x8xf32>
      %c0_158 = arith.constant 0 : index
      %c0_159 = arith.constant 0 : index
      %c0_160 = arith.constant 0 : index
      %236 = vector.load %arg22[%c0_158, %c0_159, %c0_160] : memref<4x8x8xf32, #tpu.memory_space<vmem>>, vector<4x8x8xf32>
      tpu.vector_store %arg22[%c0_158, %c0_159, %c0_160], %235 {strides = array<i32>} : memref<4x8x8xf32, #tpu.memory_space<vmem>>, vector<4x8x8xf32>,
    } else {
    }
    %c0 = arith.constant 0 : index
    %c0_1 = arith.constant 0 : index
    %c0_2 = arith.constant 0 : index
    %3 = vector.load %arg4[%c0, %c0_1, %c0_2] : memref<1x8x32xf32, #tpu.memory_space<vmem>>, vector<1x8x32xf32>
    %4 = vector.shape_cast %3 : vector<1x8x32xf32> to vector<8x32xf32>
    %5 = arith.truncf %4 : vector<8x32xf32> to vector<8x32xbf16>
    %c0_3 = arith.constant 0 : index
    %c0_4 = arith.constant 0 : index
    %6 = vector.load %arg7[%c0_3, %c0_4] : memref<32x64xbf16, #tpu.memory_space<vmem>>, vector<32x64xbf16>
    %cst = arith.constant dense<0.000000e+00> : vector<8x64xf32>
    %7 = tpu.matmul %5, %6, %cst {dimension_numbers = #tpu.dot_dimension_numbers<[1], [0], [0], [1], [0, 0, 1, 1], [], []>} : vector<8x32xbf16>, vector<32x64xbf16>, vector<8x64xf32> -> vector<8x64xf32>
    %c0_5 = arith.constant 0 : index
    %c0_6 = arith.constant 0 : index
    %c0_7 = arith.constant 0 : index
    %8 = vector.load %arg5[%c0_5, %c0_6, %c0_7] : memref<1x8x8xbf16, #tpu.memory_space<vmem>>, vector<1x8x8xbf16>
    %9 = vector.shape_cast %8 : vector<1x8x8xbf16> to vector<8x8xbf16>
    %10 = arith.extf %9 : vector<8x8xbf16> to vector<8x8xf32>
    %11 = vector.extract_strided_slice %7 {offsets = [0, 0], sizes = [8, 8], strides = [1, 1]} : vector<8x64xf32> to vector<8x8xf32>
    %12 = arith.truncf %11 : vector<8x8xf32> to vector<8x8xbf16>
    %13 = vector.extract_strided_slice %7 {offsets = [0, 32], sizes = [8, 8], strides = [1, 1]} : vector<8x64xf32> to vector<8x8xf32>
    %14 = arith.truncf %13 : vector<8x8xf32> to vector<8x8xbf16>
    %c0_8 = arith.constant 0 : index
    %c0_9 = arith.constant 0 : index
    %c0_10 = arith.constant 0 : index
    %15 = vector.load %arg19[%c0_8, %c0_9, %c0_10] : memref<4x8x8xbf16, #tpu.memory_space<vmem>>, vector<1x8x8xbf16>
    %16 = vector.shape_cast %15 : vector<1x8x8xbf16> to vector<8x8xbf16>
    %cst_11 = arith.constant dense<0.000000e+00> : vector<8x8xf32>
    %17 = tpu.matmul %16, %12, %cst_11 {dimension_numbers = #tpu.dot_dimension_numbers<[1], [1], [0], [0], [0, 0, 1, 0], [], []>} : vector<8x8xbf16>, vector<8x8xbf16>, vector<8x8xf32> -> vector<8x8xf32>
    %18 = arith.addf %17, %10 : vector<8x8xf32>
    %c0_12 = arith.constant 0 : index
    %c0_13 = arith.constant 0 : index
    %c0_14 = arith.constant 0 : index
    %19 = vector.load %arg20[%c0_12, %c0_13, %c0_14] : memref<4x8x1xf32, #tpu.memory_space<vmem>>, vector<1x8x1xf32>
    %20 = vector.shape_cast %19 : vector<1x8x1xf32> to vector<8x1xf32>
    %cst_15 = arith.constant dense<0xFF800000> : vector<8xf32>
    %21 = vector.multi_reduction <maximumf>, %18, %cst_15 [1] : vector<8x8xf32> to vector<8xf32>
    %22 = vector.shape_cast %21 : vector<8xf32> to vector<8x1xf32>
    %23 = arith.maximumf %20, %22 : vector<8x1xf32>
    %24 = arith.subf %20, %23 : vector<8x1xf32>
    %25 = math.exp %24 : vector<8x1xf32>
    %26 = vector.broadcast %23 : vector<8x1xf32> to vector<8x8xf32>
    %27 = arith.subf %18, %26 : vector<8x8xf32>
    %28 = math.exp %27 : vector<8x8xf32>
    %c0_16 = arith.constant 0 : index
    %c0_17 = arith.constant 0 : index
    %c0_18 = arith.constant 0 : index
    %29 = vector.load %arg21[%c0_16, %c0_17, %c0_18] : memref<4x8x1xf32, #tpu.memory_space<vmem>>, vector<1x8x1xf32>
    %30 = vector.shape_cast %29 : vector<1x8x1xf32> to vector<8x1xf32>
    %31 = arith.mulf %25, %30 : vector<8x1xf32>
    %cst_19 = arith.constant dense<0.000000e+00> : vector<8xf32>
    %32 = vector.multi_reduction <add>, %28, %cst_19 [1] : vector<8x8xf32> to vector<8xf32>
    %33 = vector.shape_cast %32 : vector<8xf32> to vector<8x1xf32>
    %34 = arith.addf %31, %33 : vector<8x1xf32>
    %c0_20 = arith.constant 0 : index
    %c0_21 = arith.constant 0 : index
    %c0_22 = arith.constant 0 : index
    %35 = vector.load %arg21[%c0_20, %c0_21, %c0_22] : memref<4x8x1xf32, #tpu.memory_space<vmem>>, vector<1x8x1xf32>
    %36 = vector.shape_cast %35 : vector<1x8x1xf32> to vector<8x1xf32>
    %37 = vector.shape_cast %34 : vector<8x1xf32> to vector<1x8x1xf32>
    tpu.vector_store %arg21[%c0_20, %c0_21, %c0_22], %37 {strides = array<i32>} : memref<4x8x1xf32, #tpu.memory_space<vmem>>, vector<1x8x1xf32>,
    %c0_23 = arith.constant 0 : index
    %c0_24 = arith.constant 0 : index
    %c0_25 = arith.constant 0 : index
    %38 = vector.load %arg22[%c0_23, %c0_24, %c0_25] : memref<4x8x8xf32, #tpu.memory_space<vmem>>, vector<1x8x8xf32>
    %39 = vector.shape_cast %38 : vector<1x8x8xf32> to vector<8x8xf32>
    %40 = vector.broadcast %25 : vector<8x1xf32> to vector<8x8xf32>
    %41 = arith.mulf %40, %39 : vector<8x8xf32>
    %42 = arith.truncf %28 : vector<8x8xf32> to vector<8x8xbf16>
    %cst_26 = arith.constant dense<0.000000e+00> : vector<8x8xf32>
    %43 = tpu.matmul %42, %14, %cst_26 {dimension_numbers = #tpu.dot_dimension_numbers<[1], [0], [0], [1], [0, 0, 1, 1], [], []>} : vector<8x8xbf16>, vector<8x8xbf16>, vector<8x8xf32> -> vector<8x8xf32>
    %44 = arith.addf %41, %43 : vector<8x8xf32>
    %c0_27 = arith.constant 0 : index
    %c0_28 = arith.constant 0 : index
    %c0_29 = arith.constant 0 : index
    %45 = vector.load %arg22[%c0_27, %c0_28, %c0_29] : memref<4x8x8xf32, #tpu.memory_space<vmem>>, vector<1x8x8xf32>
    %46 = vector.shape_cast %45 : vector<1x8x8xf32> to vector<8x8xf32>
    %47 = vector.shape_cast %44 : vector<8x8xf32> to vector<1x8x8xf32>
    tpu.vector_store %arg22[%c0_27, %c0_28, %c0_29], %47 {strides = array<i32>} : memref<4x8x8xf32, #tpu.memory_space<vmem>>, vector<1x8x8xf32>,
    %c0_30 = arith.constant 0 : index
    %c0_31 = arith.constant 0 : index
    %c0_32 = arith.constant 0 : index
    %48 = vector.load %arg20[%c0_30, %c0_31, %c0_32] : memref<4x8x1xf32, #tpu.memory_space<vmem>>, vector<1x8x1xf32>
    %49 = vector.shape_cast %48 : vector<1x8x1xf32> to vector<8x1xf32>
    %50 = vector.shape_cast %23 : vector<8x1xf32> to vector<1x8x1xf32>
    tpu.vector_store %arg20[%c0_30, %c0_31, %c0_32], %50 {strides = array<i32>} : memref<4x8x1xf32, #tpu.memory_space<vmem>>, vector<1x8x1xf32>,
    %c0_33 = arith.constant 0 : index
    %51 = arith.index_cast %arg2 : i32 to index
    %c0_34 = arith.constant 0 : index
    %c0_35 = arith.constant 0 : index
    %52 = vector.load %arg24[%c0_33, %51, %c0_34, %c0_35] : memref<4x1x8x8xf32, #tpu.memory_space<vmem>>, vector<1x1x8x8xf32>
    %53 = vector.shape_cast %52 : vector<1x1x8x8xf32> to vector<8x8xf32>
    %54 = vector.shape_cast %28 : vector<8x8xf32> to vector<1x1x8x8xf32>
    tpu.vector_store %arg24[%c0_33, %51, %c0_34, %c0_35], %54 {strides = array<i32>} : memref<4x1x8x8xf32, #tpu.memory_space<vmem>>, vector<1x1x8x8xf32>,
    %c0_36 = arith.constant 0 : index
    %55 = arith.index_cast %arg2 : i32 to index
    %c0_37 = arith.constant 0 : index
    %c0_38 = arith.constant 0 : index
    %56 = vector.load %arg25[%c0_36, %55, %c0_37, %c0_38] : memref<4x1x8x1xf32, #tpu.memory_space<vmem>>, vector<1x1x8x1xf32>
    %57 = vector.shape_cast %56 : vector<1x1x8x1xf32> to vector<8x1xf32>
    %58 = vector.shape_cast %23 : vector<8x1xf32> to vector<1x1x8x1xf32>
    tpu.vector_store %arg25[%c0_36, %55, %c0_37, %c0_38], %58 {strides = array<i32>} : memref<4x1x8x1xf32, #tpu.memory_space<vmem>>, vector<1x1x8x1xf32>,
    %59 = vector.extract_strided_slice %7 {offsets = [0, 8], sizes = [8, 8], strides = [1, 1]} : vector<8x64xf32> to vector<8x8xf32>
    %60 = arith.truncf %59 : vector<8x8xf32> to vector<8x8xbf16>
    %61 = vector.extract_strided_slice %7 {offsets = [0, 40], sizes = [8, 8], strides = [1, 1]} : vector<8x64xf32> to vector<8x8xf32>
    %62 = arith.truncf %61 : vector<8x8xf32> to vector<8x8xbf16>
    %c1 = arith.constant 1 : index
    %c0_39 = arith.constant 0 : index
    %c0_40 = arith.constant 0 : index
    %63 = vector.load %arg19[%c1, %c0_39, %c0_40] : memref<4x8x8xbf16, #tpu.memory_space<vmem>>, vector<1x8x8xbf16>
    %64 = vector.shape_cast %63 : vector<1x8x8xbf16> to vector<8x8xbf16>
    %cst_41 = arith.constant dense<0.000000e+00> : vector<8x8xf32>
    %65 = tpu.matmul %64, %60, %cst_41 {dimension_numbers = #tpu.dot_dimension_numbers<[1], [1], [0], [0], [0, 0, 1, 0], [], []>} : vector<8x8xbf16>, vector<8x8xbf16>, vector<8x8xf32> -> vector<8x8xf32>
    %66 = arith.addf %65, %10 : vector<8x8xf32>
    %c1_42 = arith.constant 1 : index
    %c0_43 = arith.constant 0 : index
    %c0_44 = arith.constant 0 : index
    %67 = vector.load %arg20[%c1_42, %c0_43, %c0_44] : memref<4x8x1xf32, #tpu.memory_space<vmem>>, vector<1x8x1xf32>
    %68 = vector.shape_cast %67 : vector<1x8x1xf32> to vector<8x1xf32>
    %cst_45 = arith.constant dense<0xFF800000> : vector<8xf32>
    %69 = vector.multi_reduction <maximumf>, %66, %cst_45 [1] : vector<8x8xf32> to vector<8xf32>
    %70 = vector.shape_cast %69 : vector<8xf32> to vector<8x1xf32>
    %71 = arith.maximumf %68, %70 : vector<8x1xf32>
    %72 = arith.subf %68, %71 : vector<8x1xf32>
    %73 = math.exp %72 : vector<8x1xf32>
    %74 = vector.broadcast %71 : vector<8x1xf32> to vector<8x8xf32>
    %75 = arith.subf %66, %74 : vector<8x8xf32>
    %76 = math.exp %75 : vector<8x8xf32>
    %c1_46 = arith.constant 1 : index
    %c0_47 = arith.constant 0 : index
    %c0_48 = arith.constant 0 : index
    %77 = vector.load %arg21[%c1_46, %c0_47, %c0_48] : memref<4x8x1xf32, #tpu.memory_space<vmem>>, vector<1x8x1xf32>
    %78 = vector.shape_cast %77 : vector<1x8x1xf32> to vector<8x1xf32>
    %79 = arith.mulf %73, %78 : vector<8x1xf32>
    %cst_49 = arith.constant dense<0.000000e+00> : vector<8xf32>
    %80 = vector.multi_reduction <add>, %76, %cst_49 [1] : vector<8x8xf32> to vector<8xf32>
    %81 = vector.shape_cast %80 : vector<8xf32> to vector<8x1xf32>
    %82 = arith.addf %79, %81 : vector<8x1xf32>
    %c1_50 = arith.constant 1 : index
    %c0_51 = arith.constant 0 : index
    %c0_52 = arith.constant 0 : index
    %83 = vector.load %arg21[%c1_50, %c0_51, %c0_52] : memref<4x8x1xf32, #tpu.memory_space<vmem>>, vector<1x8x1xf32>
    %84 = vector.shape_cast %83 : vector<1x8x1xf32> to vector<8x1xf32>
    %85 = vector.shape_cast %82 : vector<8x1xf32> to vector<1x8x1xf32>
    tpu.vector_store %arg21[%c1_50, %c0_51, %c0_52], %85 {strides = array<i32>} : memref<4x8x1xf32, #tpu.memory_space<vmem>>, vector<1x8x1xf32>,
    %c1_53 = arith.constant 1 : index
    %c0_54 = arith.constant 0 : index
    %c0_55 = arith.constant 0 : index
    %86 = vector.load %arg22[%c1_53, %c0_54, %c0_55] : memref<4x8x8xf32, #tpu.memory_space<vmem>>, vector<1x8x8xf32>
    %87 = vector.shape_cast %86 : vector<1x8x8xf32> to vector<8x8xf32>
    %88 = vector.broadcast %73 : vector<8x1xf32> to vector<8x8xf32>
    %89 = arith.mulf %88, %87 : vector<8x8xf32>
    %90 = arith.truncf %76 : vector<8x8xf32> to vector<8x8xbf16>
    %cst_56 = arith.constant dense<0.000000e+00> : vector<8x8xf32>
    %91 = tpu.matmul %90, %62, %cst_56 {dimension_numbers = #tpu.dot_dimension_numbers<[1], [0], [0], [1], [0, 0, 1, 1], [], []>} : vector<8x8xbf16>, vector<8x8xbf16>, vector<8x8xf32> -> vector<8x8xf32>
    %92 = arith.addf %89, %91 : vector<8x8xf32>
    %c1_57 = arith.constant 1 : index
    %c0_58 = arith.constant 0 : index
    %c0_59 = arith.constant 0 : index
    %93 = vector.load %arg22[%c1_57, %c0_58, %c0_59] : memref<4x8x8xf32, #tpu.memory_space<vmem>>, vector<1x8x8xf32>
    %94 = vector.shape_cast %93 : vector<1x8x8xf32> to vector<8x8xf32>
    %95 = vector.shape_cast %92 : vector<8x8xf32> to vector<1x8x8xf32>
    tpu.vector_store %arg22[%c1_57, %c0_58, %c0_59], %95 {strides = array<i32>} : memref<4x8x8xf32, #tpu.memory_space<vmem>>, vector<1x8x8xf32>,
    %c1_60 = arith.constant 1 : index
    %c0_61 = arith.constant 0 : index
    %c0_62 = arith.constant 0 : index
    %96 = vector.load %arg20[%c1_60, %c0_61, %c0_62] : memref<4x8x1xf32, #tpu.memory_space<vmem>>, vector<1x8x1xf32>
    %97 = vector.shape_cast %96 : vector<1x8x1xf32> to vector<8x1xf32>
    %98 = vector.shape_cast %71 : vector<8x1xf32> to vector<1x8x1xf32>
    tpu.vector_store %arg20[%c1_60, %c0_61, %c0_62], %98 {strides = array<i32>} : memref<4x8x1xf32, #tpu.memory_space<vmem>>, vector<1x8x1xf32>,
    %c1_63 = arith.constant 1 : index
    %99 = arith.index_cast %arg2 : i32 to index
    %c0_64 = arith.constant 0 : index
    %c0_65 = arith.constant 0 : index
    %100 = vector.load %arg24[%c1_63, %99, %c0_64, %c0_65] : memref<4x1x8x8xf32, #tpu.memory_space<vmem>>, vector<1x1x8x8xf32>
    %101 = vector.shape_cast %100 : vector<1x1x8x8xf32> to vector<8x8xf32>
    %102 = vector.shape_cast %76 : vector<8x8xf32> to vector<1x1x8x8xf32>
    tpu.vector_store %arg24[%c1_63, %99, %c0_64, %c0_65], %102 {strides = array<i32>} : memref<4x1x8x8xf32, #tpu.memory_space<vmem>>, vector<1x1x8x8xf32>,
    %c1_66 = arith.constant 1 : index
    %103 = arith.index_cast %arg2 : i32 to index
    %c0_67 = arith.constant 0 : index
    %c0_68 = arith.constant 0 : index
    %104 = vector.load %arg25[%c1_66, %103, %c0_67, %c0_68] : memref<4x1x8x1xf32, #tpu.memory_space<vmem>>, vector<1x1x8x1xf32>
    %105 = vector.shape_cast %104 : vector<1x1x8x1xf32> to vector<8x1xf32>
    %106 = vector.shape_cast %71 : vector<8x1xf32> to vector<1x1x8x1xf32>
    tpu.vector_store %arg25[%c1_66, %103, %c0_67, %c0_68], %106 {strides = array<i32>} : memref<4x1x8x1xf32, #tpu.memory_space<vmem>>, vector<1x1x8x1xf32>,
    %107 = vector.extract_strided_slice %7 {offsets = [0, 16], sizes = [8, 8], strides = [1, 1]} : vector<8x64xf32> to vector<8x8xf32>
    %108 = arith.truncf %107 : vector<8x8xf32> to vector<8x8xbf16>
    %109 = vector.extract_strided_slice %7 {offsets = [0, 48], sizes = [8, 8], strides = [1, 1]} : vector<8x64xf32> to vector<8x8xf32>
    %110 = arith.truncf %109 : vector<8x8xf32> to vector<8x8xbf16>
    %c2 = arith.constant 2 : index
    %c0_69 = arith.constant 0 : index
    %c0_70 = arith.constant 0 : index
    %111 = vector.load %arg19[%c2, %c0_69, %c0_70] : memref<4x8x8xbf16, #tpu.memory_space<vmem>>, vector<1x8x8xbf16>
    %112 = vector.shape_cast %111 : vector<1x8x8xbf16> to vector<8x8xbf16>
    %cst_71 = arith.constant dense<0.000000e+00> : vector<8x8xf32>
    %113 = tpu.matmul %112, %108, %cst_71 {dimension_numbers = #tpu.dot_dimension_numbers<[1], [1], [0], [0], [0, 0, 1, 0], [], []>} : vector<8x8xbf16>, vector<8x8xbf16>, vector<8x8xf32> -> vector<8x8xf32>
    %114 = arith.addf %113, %10 : vector<8x8xf32>
    %c2_72 = arith.constant 2 : index
    %c0_73 = arith.constant 0 : index
    %c0_74 = arith.constant 0 : index
    %115 = vector.load %arg20[%c2_72, %c0_73, %c0_74] : memref<4x8x1xf32, #tpu.memory_space<vmem>>, vector<1x8x1xf32>
    %116 = vector.shape_cast %115 : vector<1x8x1xf32> to vector<8x1xf32>
    %cst_75 = arith.constant dense<0xFF800000> : vector<8xf32>
    %117 = vector.multi_reduction <maximumf>, %114, %cst_75 [1] : vector<8x8xf32> to vector<8xf32>
    %118 = vector.shape_cast %117 : vector<8xf32> to vector<8x1xf32>
    %119 = arith.maximumf %116, %118 : vector<8x1xf32>
    %120 = arith.subf %116, %119 : vector<8x1xf32>
    %121 = math.exp %120 : vector<8x1xf32>
    %122 = vector.broadcast %119 : vector<8x1xf32> to vector<8x8xf32>
    %123 = arith.subf %114, %122 : vector<8x8xf32>
    %124 = math.exp %123 : vector<8x8xf32>
    %c2_76 = arith.constant 2 : index
    %c0_77 = arith.constant 0 : index
    %c0_78 = arith.constant 0 : index
    %125 = vector.load %arg21[%c2_76, %c0_77, %c0_78] : memref<4x8x1xf32, #tpu.memory_space<vmem>>, vector<1x8x1xf32>
    %126 = vector.shape_cast %125 : vector<1x8x1xf32> to vector<8x1xf32>
    %127 = arith.mulf %121, %126 : vector<8x1xf32>
    %cst_79 = arith.constant dense<0.000000e+00> : vector<8xf32>
    %128 = vector.multi_reduction <add>, %124, %cst_79 [1] : vector<8x8xf32> to vector<8xf32>
    %129 = vector.shape_cast %128 : vector<8xf32> to vector<8x1xf32>
    %130 = arith.addf %127, %129 : vector<8x1xf32>
    %c2_80 = arith.constant 2 : index
    %c0_81 = arith.constant 0 : index
    %c0_82 = arith.constant 0 : index
    %131 = vector.load %arg21[%c2_80, %c0_81, %c0_82] : memref<4x8x1xf32, #tpu.memory_space<vmem>>, vector<1x8x1xf32>
    %132 = vector.shape_cast %131 : vector<1x8x1xf32> to vector<8x1xf32>
    %133 = vector.shape_cast %130 : vector<8x1xf32> to vector<1x8x1xf32>
    tpu.vector_store %arg21[%c2_80, %c0_81, %c0_82], %133 {strides = array<i32>} : memref<4x8x1xf32, #tpu.memory_space<vmem>>, vector<1x8x1xf32>,
    %c2_83 = arith.constant 2 : index
    %c0_84 = arith.constant 0 : index
    %c0_85 = arith.constant 0 : index
    %134 = vector.load %arg22[%c2_83, %c0_84, %c0_85] : memref<4x8x8xf32, #tpu.memory_space<vmem>>, vector<1x8x8xf32>
    %135 = vector.shape_cast %134 : vector<1x8x8xf32> to vector<8x8xf32>
    %136 = vector.broadcast %121 : vector<8x1xf32> to vector<8x8xf32>
    %137 = arith.mulf %136, %135 : vector<8x8xf32>
    %138 = arith.truncf %124 : vector<8x8xf32> to vector<8x8xbf16>
    %cst_86 = arith.constant dense<0.000000e+00> : vector<8x8xf32>
    %139 = tpu.matmul %138, %110, %cst_86 {dimension_numbers = #tpu.dot_dimension_numbers<[1], [0], [0], [1], [0, 0, 1, 1], [], []>} : vector<8x8xbf16>, vector<8x8xbf16>, vector<8x8xf32> -> vector<8x8xf32>
    %140 = arith.addf %137, %139 : vector<8x8xf32>
    %c2_87 = arith.constant 2 : index
    %c0_88 = arith.constant 0 : index
    %c0_89 = arith.constant 0 : index
    %141 = vector.load %arg22[%c2_87, %c0_88, %c0_89] : memref<4x8x8xf32, #tpu.memory_space<vmem>>, vector<1x8x8xf32>
    %142 = vector.shape_cast %141 : vector<1x8x8xf32> to vector<8x8xf32>
    %143 = vector.shape_cast %140 : vector<8x8xf32> to vector<1x8x8xf32>
    tpu.vector_store %arg22[%c2_87, %c0_88, %c0_89], %143 {strides = array<i32>} : memref<4x8x8xf32, #tpu.memory_space<vmem>>, vector<1x8x8xf32>,
    %c2_90 = arith.constant 2 : index
    %c0_91 = arith.constant 0 : index
    %c0_92 = arith.constant 0 : index
    %144 = vector.load %arg20[%c2_90, %c0_91, %c0_92] : memref<4x8x1xf32, #tpu.memory_space<vmem>>, vector<1x8x1xf32>
    %145 = vector.shape_cast %144 : vector<1x8x1xf32> to vector<8x1xf32>
    %146 = vector.shape_cast %119 : vector<8x1xf32> to vector<1x8x1xf32>
    tpu.vector_store %arg20[%c2_90, %c0_91, %c0_92], %146 {strides = array<i32>} : memref<4x8x1xf32, #tpu.memory_space<vmem>>, vector<1x8x1xf32>,
    %c2_93 = arith.constant 2 : index
    %147 = arith.index_cast %arg2 : i32 to index
    %c0_94 = arith.constant 0 : index
    %c0_95 = arith.constant 0 : index
    %148 = vector.load %arg24[%c2_93, %147, %c0_94, %c0_95] : memref<4x1x8x8xf32, #tpu.memory_space<vmem>>, vector<1x1x8x8xf32>
    %149 = vector.shape_cast %148 : vector<1x1x8x8xf32> to vector<8x8xf32>
    %150 = vector.shape_cast %124 : vector<8x8xf32> to vector<1x1x8x8xf32>
    tpu.vector_store %arg24[%c2_93, %147, %c0_94, %c0_95], %150 {strides = array<i32>} : memref<4x1x8x8xf32, #tpu.memory_space<vmem>>, vector<1x1x8x8xf32>,
    %c2_96 = arith.constant 2 : index
    %151 = arith.index_cast %arg2 : i32 to index
    %c0_97 = arith.constant 0 : index
    %c0_98 = arith.constant 0 : index
    %152 = vector.load %arg25[%c2_96, %151, %c0_97, %c0_98] : memref<4x1x8x1xf32, #tpu.memory_space<vmem>>, vector<1x1x8x1xf32>
    %153 = vector.shape_cast %152 : vector<1x1x8x1xf32> to vector<8x1xf32>
    %154 = vector.shape_cast %119 : vector<8x1xf32> to vector<1x1x8x1xf32>
    tpu.vector_store %arg25[%c2_96, %151, %c0_97, %c0_98], %154 {strides = array<i32>} : memref<4x1x8x1xf32, #tpu.memory_space<vmem>>, vector<1x1x8x1xf32>,
    %155 = vector.extract_strided_slice %7 {offsets = [0, 24], sizes = [8, 8], strides = [1, 1]} : vector<8x64xf32> to vector<8x8xf32>
    %156 = arith.truncf %155 : vector<8x8xf32> to vector<8x8xbf16>
    %157 = vector.extract_strided_slice %7 {offsets = [0, 56], sizes = [8, 8], strides = [1, 1]} : vector<8x64xf32> to vector<8x8xf32>
    %158 = arith.truncf %157 : vector<8x8xf32> to vector<8x8xbf16>
    %c3 = arith.constant 3 : index
    %c0_99 = arith.constant 0 : index
    %c0_100 = arith.constant 0 : index
    %159 = vector.load %arg19[%c3, %c0_99, %c0_100] : memref<4x8x8xbf16, #tpu.memory_space<vmem>>, vector<1x8x8xbf16>
    %160 = vector.shape_cast %159 : vector<1x8x8xbf16> to vector<8x8xbf16>
    %cst_101 = arith.constant dense<0.000000e+00> : vector<8x8xf32>
    %161 = tpu.matmul %160, %156, %cst_101 {dimension_numbers = #tpu.dot_dimension_numbers<[1], [1], [0], [0], [0, 0, 1, 0], [], []>} : vector<8x8xbf16>, vector<8x8xbf16>, vector<8x8xf32> -> vector<8x8xf32>
    %162 = arith.addf %161, %10 : vector<8x8xf32>
    %c3_102 = arith.constant 3 : index
    %c0_103 = arith.constant 0 : index
    %c0_104 = arith.constant 0 : index
    %163 = vector.load %arg20[%c3_102, %c0_103, %c0_104] : memref<4x8x1xf32, #tpu.memory_space<vmem>>, vector<1x8x1xf32>
    %164 = vector.shape_cast %163 : vector<1x8x1xf32> to vector<8x1xf32>
    %cst_105 = arith.constant dense<0xFF800000> : vector<8xf32>
    %165 = vector.multi_reduction <maximumf>, %162, %cst_105 [1] : vector<8x8xf32> to vector<8xf32>
    %166 = vector.shape_cast %165 : vector<8xf32> to vector<8x1xf32>
    %167 = arith.maximumf %164, %166 : vector<8x1xf32>
    %168 = arith.subf %164, %167 : vector<8x1xf32>
    %169 = math.exp %168 : vector<8x1xf32>
    %170 = vector.broadcast %167 : vector<8x1xf32> to vector<8x8xf32>
    %171 = arith.subf %162, %170 : vector<8x8xf32>
    %172 = math.exp %171 : vector<8x8xf32>
    %c3_106 = arith.constant 3 : index
    %c0_107 = arith.constant 0 : index
    %c0_108 = arith.constant 0 : index
    %173 = vector.load %arg21[%c3_106, %c0_107, %c0_108] : memref<4x8x1xf32, #tpu.memory_space<vmem>>, vector<1x8x1xf32>
    %174 = vector.shape_cast %173 : vector<1x8x1xf32> to vector<8x1xf32>
    %175 = arith.mulf %169, %174 : vector<8x1xf32>
    %cst_109 = arith.constant dense<0.000000e+00> : vector<8xf32>
    %176 = vector.multi_reduction <add>, %172, %cst_109 [1] : vector<8x8xf32> to vector<8xf32>
    %177 = vector.shape_cast %176 : vector<8xf32> to vector<8x1xf32>
    %178 = arith.addf %175, %177 : vector<8x1xf32>
    %c3_110 = arith.constant 3 : index
    %c0_111 = arith.constant 0 : index
    %c0_112 = arith.constant 0 : index
    %179 = vector.load %arg21[%c3_110, %c0_111, %c0_112] : memref<4x8x1xf32, #tpu.memory_space<vmem>>, vector<1x8x1xf32>
    %180 = vector.shape_cast %179 : vector<1x8x1xf32> to vector<8x1xf32>
    %181 = vector.shape_cast %178 : vector<8x1xf32> to vector<1x8x1xf32>
    tpu.vector_store %arg21[%c3_110, %c0_111, %c0_112], %181 {strides = array<i32>} : memref<4x8x1xf32, #tpu.memory_space<vmem>>, vector<1x8x1xf32>,
    %c3_113 = arith.constant 3 : index
    %c0_114 = arith.constant 0 : index
    %c0_115 = arith.constant 0 : index
    %182 = vector.load %arg22[%c3_113, %c0_114, %c0_115] : memref<4x8x8xf32, #tpu.memory_space<vmem>>, vector<1x8x8xf32>
    %183 = vector.shape_cast %182 : vector<1x8x8xf32> to vector<8x8xf32>
    %184 = vector.broadcast %169 : vector<8x1xf32> to vector<8x8xf32>
    %185 = arith.mulf %184, %183 : vector<8x8xf32>
    %186 = arith.truncf %172 : vector<8x8xf32> to vector<8x8xbf16>
    %cst_116 = arith.constant dense<0.000000e+00> : vector<8x8xf32>
    %187 = tpu.matmul %186, %158, %cst_116 {dimension_numbers = #tpu.dot_dimension_numbers<[1], [0], [0], [1], [0, 0, 1, 1], [], []>} : vector<8x8xbf16>, vector<8x8xbf16>, vector<8x8xf32> -> vector<8x8xf32>
    %188 = arith.addf %185, %187 : vector<8x8xf32>
    %c3_117 = arith.constant 3 : index
    %c0_118 = arith.constant 0 : index
    %c0_119 = arith.constant 0 : index
    %189 = vector.load %arg22[%c3_117, %c0_118, %c0_119] : memref<4x8x8xf32, #tpu.memory_space<vmem>>, vector<1x8x8xf32>
    %190 = vector.shape_cast %189 : vector<1x8x8xf32> to vector<8x8xf32>
    %191 = vector.shape_cast %188 : vector<8x8xf32> to vector<1x8x8xf32>
    tpu.vector_store %arg22[%c3_117, %c0_118, %c0_119], %191 {strides = array<i32>} : memref<4x8x8xf32, #tpu.memory_space<vmem>>, vector<1x8x8xf32>,
    %c3_120 = arith.constant 3 : index
    %c0_121 = arith.constant 0 : index
    %c0_122 = arith.constant 0 : index
    %192 = vector.load %arg20[%c3_120, %c0_121, %c0_122] : memref<4x8x1xf32, #tpu.memory_space<vmem>>, vector<1x8x1xf32>
    %193 = vector.shape_cast %192 : vector<1x8x1xf32> to vector<8x1xf32>
    %194 = vector.shape_cast %167 : vector<8x1xf32> to vector<1x8x1xf32>
    tpu.vector_store %arg20[%c3_120, %c0_121, %c0_122], %194 {strides = array<i32>} : memref<4x8x1xf32, #tpu.memory_space<vmem>>, vector<1x8x1xf32>,
    %c3_123 = arith.constant 3 : index
    %195 = arith.index_cast %arg2 : i32 to index
    %c0_124 = arith.constant 0 : index
    %c0_125 = arith.constant 0 : index
    %196 = vector.load %arg24[%c3_123, %195, %c0_124, %c0_125] : memref<4x1x8x8xf32, #tpu.memory_space<vmem>>, vector<1x1x8x8xf32>
    %197 = vector.shape_cast %196 : vector<1x1x8x8xf32> to vector<8x8xf32>
    %198 = vector.shape_cast %172 : vector<8x8xf32> to vector<1x1x8x8xf32>
    tpu.vector_store %arg24[%c3_123, %195, %c0_124, %c0_125], %198 {strides = array<i32>} : memref<4x1x8x8xf32, #tpu.memory_space<vmem>>, vector<1x1x8x8xf32>,
    %c3_126 = arith.constant 3 : index
    %199 = arith.index_cast %arg2 : i32 to index
    %c0_127 = arith.constant 0 : index
    %c0_128 = arith.constant 0 : index
    %200 = vector.load %arg25[%c3_126, %199, %c0_127, %c0_128] : memref<4x1x8x1xf32, #tpu.memory_space<vmem>>, vector<1x1x8x1xf32>
    %201 = vector.shape_cast %200 : vector<1x1x8x1xf32> to vector<8x1xf32>
    %202 = vector.shape_cast %167 : vector<8x1xf32> to vector<1x1x8x1xf32>
    tpu.vector_store %arg25[%c3_126, %199, %c0_127, %c0_128], %202 {strides = array<i32>} : memref<4x1x8x1xf32, #tpu.memory_space<vmem>>, vector<1x1x8x1xf32>,
    %c0_i32_129 = arith.constant 0 : i32
    %203 = arith.cmpi eq, %arg2, %c0_i32_129 : i32
    %204 = arith.extui %203 : i1 to i32
    %c0_i32_130 = arith.constant 0 : i32
    %205 = arith.cmpi ne, %204, %c0_i32_130 : i32
    scf.if %205 {
      %c0_131 = arith.constant 0 : index
      %c0_132 = arith.constant 0 : index
      %c0_133 = arith.constant 0 : index
      %206 = vector.load %arg21[%c0_131, %c0_132, %c0_133] : memref<4x8x1xf32, #tpu.memory_space<vmem>>, vector<1x8x1xf32>
      %207 = vector.shape_cast %206 : vector<1x8x1xf32> to vector<8x1xf32>
      %cst_134 = arith.constant 1.000000e+00 : f32
      %208 = vector.broadcast %cst_134 : f32 to vector<8x1xf32>
      %209 = arith.divf %208, %207 : vector<8x1xf32>
      %c0_135 = arith.constant 0 : index
      %c0_136 = arith.constant 0 : index
      %c0_137 = arith.constant 0 : index
      %210 = vector.load %arg22[%c0_135, %c0_136, %c0_137] : memref<4x8x8xf32, #tpu.memory_space<vmem>>, vector<1x8x8xf32>
      %211 = vector.shape_cast %210 : vector<1x8x8xf32> to vector<8x8xf32>
      %212 = vector.broadcast %209 : vector<8x1xf32> to vector<8x8xf32>
      %213 = arith.mulf %211, %212 : vector<8x8xf32>
      %214 = arith.truncf %213 : vector<8x8xf32> to vector<8x8xbf16>
      %c0_138 = arith.constant 0 : index
      %c0_139 = arith.constant 0 : index
      %215 = vector.load %arg23[%c0_138, %c0_139] : memref<8x32xbf16, #tpu.memory_space<vmem>>, vector<8x8xbf16>
      tpu.vector_store %arg23[%c0_138, %c0_139], %214 {strides = array<i32>} : memref<8x32xbf16, #tpu.memory_space<vmem>>, vector<8x8xbf16>,
      %c0_140 = arith.constant 0 : index
      %c0_141 = arith.constant 0 : index
      %c0_142 = arith.constant 0 : index
      %216 = vector.load %arg20[%c0_140, %c0_141, %c0_142] : memref<4x8x1xf32, #tpu.memory_space<vmem>>, vector<1x8x1xf32>
      %217 = vector.shape_cast %216 : vector<1x8x1xf32> to vector<8x1xf32>
      %c0_143 = arith.constant 0 : index
      %c0_144 = arith.constant 0 : index
      %c0_145 = arith.constant 0 : index
      %c0_146 = arith.constant 0 : index
      %218 = vector.load %arg25[%c0_143, %c0_144, %c0_145, %c0_146] : memref<4x1x8x1xf32, #tpu.memory_space<vmem>>, vector<1x1x8x1xf32>
      %219 = vector.shape_cast %218 : vector<1x1x8x1xf32> to vector<8x1xf32>
      %220 = arith.subf %219, %217 : vector<8x1xf32>
      %221 = math.exp %220 : vector<8x1xf32>
      %222 = arith.mulf %221, %209 : vector<8x1xf32>
      %c0_147 = arith.constant 0 : index
      %c0_148 = arith.constant 0 : index
      %c0_149 = arith.constant 0 : index
      %c0_150 = arith.constant 0 : index
      %223 = vector.load %arg24[%c0_147, %c0_148, %c0_149, %c0_150] : memref<4x1x8x8xf32, #tpu.memory_space<vmem>>, vector<1x1x8x8xf32>
      %224 = vector.shape_cast %223 : vector<1x1x8x8xf32> to vector<8x8xf32>
      %225 = vector.broadcast %222 : vector<8x1xf32> to vector<8x8xf32>
      %226 = arith.mulf %224, %225 : vector<8x8xf32>
      %c0_151 = arith.constant 0 : index
      %c0_152 = arith.constant 0 : index
      %c0_153 = arith.constant 0 : index
      %c0_154 = arith.constant 0 : index
      %227 = vector.load %arg18[%c0_151, %c0_152, %c0_153, %c0_154] : memref<1x4x8x8xf32, #tpu.memory_space<vmem>>, vector<1x1x8x8xf32>
      %228 = vector.shape_cast %227 : vector<1x1x8x8xf32> to vector<8x8xf32>
      %229 = vector.shape_cast %226 : vector<8x8xf32> to vector<1x1x8x8xf32>
      tpu.vector_store %arg18[%c0_151, %c0_152, %c0_153, %c0_154], %229 {strides = array<i32>} : memref<1x4x8x8xf32, #tpu.memory_space<vmem>>, vector<1x1x8x8xf32>,
      %c1_155 = arith.constant 1 : index
      %c0_156 = arith.constant 0 : index
      %c0_157 = arith.constant 0 : index
      %230 = vector.load %arg21[%c1_155, %c0_156, %c0_157] : memref<4x8x1xf32, #tpu.memory_space<vmem>>, vector<1x8x1xf32>
      %231 = vector.shape_cast %230 : vector<1x8x1xf32> to vector<8x1xf32>
      %cst_158 = arith.constant 1.000000e+00 : f32
      %232 = vector.broadcast %cst_158 : f32 to vector<8x1xf32>
      %233 = arith.divf %232, %231 : vector<8x1xf32>
      %c1_159 = arith.constant 1 : index
      %c0_160 = arith.constant 0 : index
      %c0_161 = arith.constant 0 : index
      %234 = vector.load %arg22[%c1_159, %c0_160, %c0_161] : memref<4x8x8xf32, #tpu.memory_space<vmem>>, vector<1x8x8xf32>
      %235 = vector.shape_cast %234 : vector<1x8x8xf32> to vector<8x8xf32>
      %236 = vector.broadcast %233 : vector<8x1xf32> to vector<8x8xf32>
      %237 = arith.mulf %235, %236 : vector<8x8xf32>
      %238 = arith.truncf %237 : vector<8x8xf32> to vector<8x8xbf16>
      %c0_162 = arith.constant 0 : index
      %c8 = arith.constant 8 : index
      %239 = vector.load %arg23[%c0_162, %c8] : memref<8x32xbf16, #tpu.memory_space<vmem>>, vector<8x8xbf16>
      tpu.vector_store %arg23[%c0_162, %c8], %238 {strides = array<i32>} : memref<8x32xbf16, #tpu.memory_space<vmem>>, vector<8x8xbf16>,
      %c1_163 = arith.constant 1 : index
      %c0_164 = arith.constant 0 : index
      %c0_165 = arith.constant 0 : index
      %240 = vector.load %arg20[%c1_163, %c0_164, %c0_165] : memref<4x8x1xf32, #tpu.memory_space<vmem>>, vector<1x8x1xf32>
      %241 = vector.shape_cast %240 : vector<1x8x1xf32> to vector<8x1xf32>
      %c1_166 = arith.constant 1 : index
      %c0_167 = arith.constant 0 : index
      %c0_168 = arith.constant 0 : index
      %c0_169 = arith.constant 0 : index
      %242 = vector.load %arg25[%c1_166, %c0_167, %c0_168, %c0_169] : memref<4x1x8x1xf32, #tpu.memory_space<vmem>>, vector<1x1x8x1xf32>
      %243 = vector.shape_cast %242 : vector<1x1x8x1xf32> to vector<8x1xf32>
      %244 = arith.subf %243, %241 : vector<8x1xf32>
      %245 = math.exp %244 : vector<8x1xf32>
      %246 = arith.mulf %245, %233 : vector<8x1xf32>
      %c1_170 = arith.constant 1 : index
      %c0_171 = arith.constant 0 : index
      %c0_172 = arith.constant 0 : index
      %c0_173 = arith.constant 0 : index
      %247 = vector.load %arg24[%c1_170, %c0_171, %c0_172, %c0_173] : memref<4x1x8x8xf32, #tpu.memory_space<vmem>>, vector<1x1x8x8xf32>
      %248 = vector.shape_cast %247 : vector<1x1x8x8xf32> to vector<8x8xf32>
      %249 = vector.broadcast %246 : vector<8x1xf32> to vector<8x8xf32>
      %250 = arith.mulf %248, %249 : vector<8x8xf32>
      %c0_174 = arith.constant 0 : index
      %c1_175 = arith.constant 1 : index
      %c0_176 = arith.constant 0 : index
      %c0_177 = arith.constant 0 : index
      %251 = vector.load %arg18[%c0_174, %c1_175, %c0_176, %c0_177] : memref<1x4x8x8xf32, #tpu.memory_space<vmem>>, vector<1x1x8x8xf32>
      %252 = vector.shape_cast %251 : vector<1x1x8x8xf32> to vector<8x8xf32>
      %253 = vector.shape_cast %250 : vector<8x8xf32> to vector<1x1x8x8xf32>
      tpu.vector_store %arg18[%c0_174, %c1_175, %c0_176, %c0_177], %253 {strides = array<i32>} : memref<1x4x8x8xf32, #tpu.memory_space<vmem>>, vector<1x1x8x8xf32>,
      %c2_178 = arith.constant 2 : index
      %c0_179 = arith.constant 0 : index
      %c0_180 = arith.constant 0 : index
      %254 = vector.load %arg21[%c2_178, %c0_179, %c0_180] : memref<4x8x1xf32, #tpu.memory_space<vmem>>, vector<1x8x1xf32>
      %255 = vector.shape_cast %254 : vector<1x8x1xf32> to vector<8x1xf32>
      %cst_181 = arith.constant 1.000000e+00 : f32
      %256 = vector.broadcast %cst_181 : f32 to vector<8x1xf32>
      %257 = arith.divf %256, %255 : vector<8x1xf32>
      %c2_182 = arith.constant 2 : index
      %c0_183 = arith.constant 0 : index
      %c0_184 = arith.constant 0 : index
      %258 = vector.load %arg22[%c2_182, %c0_183, %c0_184] : memref<4x8x8xf32, #tpu.memory_space<vmem>>, vector<1x8x8xf32>
      %259 = vector.shape_cast %258 : vector<1x8x8xf32> to vector<8x8xf32>
      %260 = vector.broadcast %257 : vector<8x1xf32> to vector<8x8xf32>
      %261 = arith.mulf %259, %260 : vector<8x8xf32>
      %262 = arith.truncf %261 : vector<8x8xf32> to vector<8x8xbf16>
      %c0_185 = arith.constant 0 : index
      %c16 = arith.constant 16 : index
      %263 = vector.load %arg23[%c0_185, %c16] : memref<8x32xbf16, #tpu.memory_space<vmem>>, vector<8x8xbf16>
      tpu.vector_store %arg23[%c0_185, %c16], %262 {strides = array<i32>} : memref<8x32xbf16, #tpu.memory_space<vmem>>, vector<8x8xbf16>,
      %c2_186 = arith.constant 2 : index
      %c0_187 = arith.constant 0 : index
      %c0_188 = arith.constant 0 : index
      %264 = vector.load %arg20[%c2_186, %c0_187, %c0_188] : memref<4x8x1xf32, #tpu.memory_space<vmem>>, vector<1x8x1xf32>
      %265 = vector.shape_cast %264 : vector<1x8x1xf32> to vector<8x1xf32>
      %c2_189 = arith.constant 2 : index
      %c0_190 = arith.constant 0 : index
      %c0_191 = arith.constant 0 : index
      %c0_192 = arith.constant 0 : index
      %266 = vector.load %arg25[%c2_189, %c0_190, %c0_191, %c0_192] : memref<4x1x8x1xf32, #tpu.memory_space<vmem>>, vector<1x1x8x1xf32>
      %267 = vector.shape_cast %266 : vector<1x1x8x1xf32> to vector<8x1xf32>
      %268 = arith.subf %267, %265 : vector<8x1xf32>
      %269 = math.exp %268 : vector<8x1xf32>
      %270 = arith.mulf %269, %257 : vector<8x1xf32>
      %c2_193 = arith.constant 2 : index
      %c0_194 = arith.constant 0 : index
      %c0_195 = arith.constant 0 : index
      %c0_196 = arith.constant 0 : index
      %271 = vector.load %arg24[%c2_193, %c0_194, %c0_195, %c0_196] : memref<4x1x8x8xf32, #tpu.memory_space<vmem>>, vector<1x1x8x8xf32>
      %272 = vector.shape_cast %271 : vector<1x1x8x8xf32> to vector<8x8xf32>
      %273 = vector.broadcast %270 : vector<8x1xf32> to vector<8x8xf32>
      %274 = arith.mulf %272, %273 : vector<8x8xf32>
      %c0_197 = arith.constant 0 : index
      %c2_198 = arith.constant 2 : index
      %c0_199 = arith.constant 0 : index
      %c0_200 = arith.constant 0 : index
      %275 = vector.load %arg18[%c0_197, %c2_198, %c0_199, %c0_200] : memref<1x4x8x8xf32, #tpu.memory_space<vmem>>, vector<1x1x8x8xf32>
      %276 = vector.shape_cast %275 : vector<1x1x8x8xf32> to vector<8x8xf32>
      %277 = vector.shape_cast %274 : vector<8x8xf32> to vector<1x1x8x8xf32>
      tpu.vector_store %arg18[%c0_197, %c2_198, %c0_199, %c0_200], %277 {strides = array<i32>} : memref<1x4x8x8xf32, #tpu.memory_space<vmem>>, vector<1x1x8x8xf32>,
      %c3_201 = arith.constant 3 : index
      %c0_202 = arith.constant 0 : index
      %c0_203 = arith.constant 0 : index
      %278 = vector.load %arg21[%c3_201, %c0_202, %c0_203] : memref<4x8x1xf32, #tpu.memory_space<vmem>>, vector<1x8x1xf32>
      %279 = vector.shape_cast %278 : vector<1x8x1xf32> to vector<8x1xf32>
      %cst_204 = arith.constant 1.000000e+00 : f32
      %280 = vector.broadcast %cst_204 : f32 to vector<8x1xf32>
      %281 = arith.divf %280, %279 : vector<8x1xf32>
      %c3_205 = arith.constant 3 : index
      %c0_206 = arith.constant 0 : index
      %c0_207 = arith.constant 0 : index
      %282 = vector.load %arg22[%c3_205, %c0_206, %c0_207] : memref<4x8x8xf32, #tpu.memory_space<vmem>>, vector<1x8x8xf32>
      %283 = vector.shape_cast %282 : vector<1x8x8xf32> to vector<8x8xf32>
      %284 = vector.broadcast %281 : vector<8x1xf32> to vector<8x8xf32>
      %285 = arith.mulf %283, %284 : vector<8x8xf32>
      %286 = arith.truncf %285 : vector<8x8xf32> to vector<8x8xbf16>
      %c0_208 = arith.constant 0 : index
      %c24 = arith.constant 24 : index
      %287 = vector.load %arg23[%c0_208, %c24] : memref<8x32xbf16, #tpu.memory_space<vmem>>, vector<8x8xbf16>
      tpu.vector_store %arg23[%c0_208, %c24], %286 {strides = array<i32>} : memref<8x32xbf16, #tpu.memory_space<vmem>>, vector<8x8xbf16>,
      %c3_209 = arith.constant 3 : index
      %c0_210 = arith.constant 0 : index
      %c0_211 = arith.constant 0 : index
      %288 = vector.load %arg20[%c3_209, %c0_210, %c0_211] : memref<4x8x1xf32, #tpu.memory_space<vmem>>, vector<1x8x1xf32>
      %289 = vector.shape_cast %288 : vector<1x8x1xf32> to vector<8x1xf32>
      %c3_212 = arith.constant 3 : index
      %c0_213 = arith.constant 0 : index
      %c0_214 = arith.constant 0 : index
      %c0_215 = arith.constant 0 : index
      %290 = vector.load %arg25[%c3_212, %c0_213, %c0_214, %c0_215] : memref<4x1x8x1xf32, #tpu.memory_space<vmem>>, vector<1x1x8x1xf32>
      %291 = vector.shape_cast %290 : vector<1x1x8x1xf32> to vector<8x1xf32>
      %292 = arith.subf %291, %289 : vector<8x1xf32>
      %293 = math.exp %292 : vector<8x1xf32>
      %294 = arith.mulf %293, %281 : vector<8x1xf32>
      %c3_216 = arith.constant 3 : index
      %c0_217 = arith.constant 0 : index
      %c0_218 = arith.constant 0 : index
      %c0_219 = arith.constant 0 : index
      %295 = vector.load %arg24[%c3_216, %c0_217, %c0_218, %c0_219] : memref<4x1x8x8xf32, #tpu.memory_space<vmem>>, vector<1x1x8x8xf32>
      %296 = vector.shape_cast %295 : vector<1x1x8x8xf32> to vector<8x8xf32>
      %297 = vector.broadcast %294 : vector<8x1xf32> to vector<8x8xf32>
      %298 = arith.mulf %296, %297 : vector<8x8xf32>
      %c0_220 = arith.constant 0 : index
      %c3_221 = arith.constant 3 : index
      %c0_222 = arith.constant 0 : index
      %c0_223 = arith.constant 0 : index
      %299 = vector.load %arg18[%c0_220, %c3_221, %c0_222, %c0_223] : memref<1x4x8x8xf32, #tpu.memory_space<vmem>>, vector<1x1x8x8xf32>
      %300 = vector.shape_cast %299 : vector<1x1x8x8xf32> to vector<8x8xf32>
      %301 = vector.shape_cast %298 : vector<8x8xf32> to vector<1x1x8x8xf32>
      tpu.vector_store %arg18[%c0_220, %c3_221, %c0_222, %c0_223], %301 {strides = array<i32>} : memref<1x4x8x8xf32, #tpu.memory_space<vmem>>, vector<1x1x8x8xf32>,
      %c0_224 = arith.constant 0 : index
      %c0_225 = arith.constant 0 : index
      %302 = vector.load %arg23[%c0_224, %c0_225] : memref<8x32xbf16, #tpu.memory_space<vmem>>, vector<8x32xbf16>
      %c0_226 = arith.constant 0 : index
      %c0_227 = arith.constant 0 : index
      %303 = vector.load %arg8[%c0_226, %c0_227] : memref<32x32xbf16, #tpu.memory_space<vmem>>, vector<32x32xbf16>
      %cst_228 = arith.constant dense<0.000000e+00> : vector<8x32xf32>
      %304 = tpu.matmul %302, %303, %cst_228 {dimension_numbers = #tpu.dot_dimension_numbers<[1], [0], [0], [1], [0, 0, 1, 1], [], []>} : vector<8x32xbf16>, vector<32x32xbf16>, vector<8x32xf32> -> vector<8x32xf32>
      %c0_229 = arith.constant 0 : index
      %c0_230 = arith.constant 0 : index
      %c0_231 = arith.constant 0 : index
      %305 = vector.load %arg3[%c0_229, %c0_230, %c0_231] : memref<1x8x32xf32, #tpu.memory_space<vmem>>, vector<1x8x32xf32>
      %306 = vector.shape_cast %305 : vector<1x8x32xf32> to vector<8x32xf32>
      %307 = arith.addf %304, %306 : vector<8x32xf32>
      %cst_232 = arith.constant dense<0.000000e+00> : vector<8xf32>
      %308 = vector.multi_reduction <add>, %307, %cst_232 [1] : vector<8x32xf32> to vector<8xf32>
      %309 = vector.shape_cast %308 : vector<8xf32> to vector<8x1xf32>
      %cst_233 = arith.constant 3.200000e+01 : f32
      %310 = vector.broadcast %cst_233 : f32 to vector<8x1xf32>
      %311 = arith.divf %309, %310 : vector<8x1xf32>
      %312 = vector.broadcast %311 : vector<8x1xf32> to vector<8x32xf32>
      %313 = arith.subf %307, %312 : vector<8x32xf32>
      %314 = arith.mulf %313, %313 : vector<8x32xf32>
      %cst_234 = arith.constant dense<0.000000e+00> : vector<8xf32>
      %315 = vector.multi_reduction <add>, %314, %cst_234 [1] : vector<8x32xf32> to vector<8xf32>
      %316 = vector.shape_cast %315 : vector<8xf32> to vector<8x1xf32>
      %cst_235 = arith.constant 3.200000e+01 : f32
      %317 = vector.broadcast %cst_235 : f32 to vector<8x1xf32>
      %318 = arith.divf %316, %317 : vector<8x1xf32>
      %319 = vector.broadcast %311 : vector<8x1xf32> to vector<8x32xf32>
      %320 = arith.subf %307, %319 : vector<8x32xf32>
      %cst_236 = arith.constant 9.99999997E-7 : f32
      %321 = vector.broadcast %cst_236 : f32 to vector<8x1xf32>
      %322 = arith.addf %318, %321 : vector<8x1xf32>
      %323 = math.rsqrt %322 : vector<8x1xf32>
      %324 = vector.broadcast %323 : vector<8x1xf32> to vector<8x32xf32>
      %325 = arith.mulf %320, %324 : vector<8x32xf32>
      %c0_237 = arith.constant 0 : index
      %c0_238 = arith.constant 0 : index
      %326 = vector.load %arg9[%c0_237, %c0_238] : memref<1x32xf32, #tpu.memory_space<vmem>>, vector<1x32xf32>
      %327 = vector.broadcast %326 : vector<1x32xf32> to vector<8x32xf32>
      %328 = arith.mulf %325, %327 : vector<8x32xf32>
      %c0_239 = arith.constant 0 : index
      %c0_240 = arith.constant 0 : index
      %329 = vector.load %arg10[%c0_239, %c0_240] : memref<1x32xf32, #tpu.memory_space<vmem>>, vector<1x32xf32>
      %330 = vector.broadcast %329 : vector<1x32xf32> to vector<8x32xf32>
      %331 = arith.addf %328, %330 : vector<8x32xf32>
      %332 = arith.truncf %331 : vector<8x32xf32> to vector<8x32xbf16>
      %c0_241 = arith.constant 0 : index
      %c0_242 = arith.constant 0 : index
      %333 = vector.load %arg11[%c0_241, %c0_242] : memref<32x64xbf16, #tpu.memory_space<vmem>>, vector<32x64xbf16>
      %cst_243 = arith.constant dense<0.000000e+00> : vector<8x64xf32>
      %334 = tpu.matmul %332, %333, %cst_243 {dimension_numbers = #tpu.dot_dimension_numbers<[1], [0], [0], [1], [0, 0, 1, 1], [], []>} : vector<8x32xbf16>, vector<32x64xbf16>, vector<8x64xf32> -> vector<8x64xf32>
      %c0_244 = arith.constant 0 : index
      %c0_245 = arith.constant 0 : index
      %335 = vector.load %arg12[%c0_244, %c0_245] : memref<1x64xf32, #tpu.memory_space<vmem>>, vector<1x64xf32>
      %336 = vector.broadcast %335 : vector<1x64xf32> to vector<8x64xf32>
      %337 = arith.addf %334, %336 : vector<8x64xf32>
      %cst_246 = arith.constant 0.000000e+00 : f32
      %338 = vector.broadcast %cst_246 : f32 to vector<8x64xf32>
      %339 = arith.maximumf %337, %338 : vector<8x64xf32>
      %340 = arith.truncf %339 : vector<8x64xf32> to vector<8x64xbf16>
      %c0_247 = arith.constant 0 : index
      %c0_248 = arith.constant 0 : index
      %341 = vector.load %arg13[%c0_247, %c0_248] : memref<64x32xbf16, #tpu.memory_space<vmem>>, vector<64x32xbf16>
      %cst_249 = arith.constant dense<0.000000e+00> : vector<8x32xf32>
      %342 = tpu.matmul %340, %341, %cst_249 {dimension_numbers = #tpu.dot_dimension_numbers<[1], [0], [0], [1], [0, 0, 1, 1], [], []>} : vector<8x64xbf16>, vector<64x32xbf16>, vector<8x32xf32> -> vector<8x32xf32>
      %c0_250 = arith.constant 0 : index
      %c0_251 = arith.constant 0 : index
      %343 = vector.load %arg14[%c0_250, %c0_251] : memref<1x32xf32, #tpu.memory_space<vmem>>, vector<1x32xf32>
      %344 = vector.broadcast %343 : vector<1x32xf32> to vector<8x32xf32>
      %345 = arith.addf %342, %344 : vector<8x32xf32>
      %346 = arith.addf %345, %331 : vector<8x32xf32>
      %cst_252 = arith.constant dense<0.000000e+00> : vector<8xf32>
      %347 = vector.multi_reduction <add>, %346, %cst_252 [1] : vector<8x32xf32> to vector<8xf32>
      %348 = vector.shape_cast %347 : vector<8xf32> to vector<8x1xf32>
      %cst_253 = arith.constant 3.200000e+01 : f32
      %349 = vector.broadcast %cst_253 : f32 to vector<8x1xf32>
      %350 = arith.divf %348, %349 : vector<8x1xf32>
      %351 = vector.broadcast %350 : vector<8x1xf32> to vector<8x32xf32>
      %352 = arith.subf %346, %351 : vector<8x32xf32>
      %353 = arith.mulf %352, %352 : vector<8x32xf32>
      %cst_254 = arith.constant dense<0.000000e+00> : vector<8xf32>
      %354 = vector.multi_reduction <add>, %353, %cst_254 [1] : vector<8x32xf32> to vector<8xf32>
      %355 = vector.shape_cast %354 : vector<8xf32> to vector<8x1xf32>
      %cst_255 = arith.constant 3.200000e+01 : f32
      %356 = vector.broadcast %cst_255 : f32 to vector<8x1xf32>
      %357 = arith.divf %355, %356 : vector<8x1xf32>
      %358 = vector.broadcast %350 : vector<8x1xf32> to vector<8x32xf32>
      %359 = arith.subf %346, %358 : vector<8x32xf32>
      %cst_256 = arith.constant 9.99999997E-7 : f32
      %360 = vector.broadcast %cst_256 : f32 to vector<8x1xf32>
      %361 = arith.addf %357, %360 : vector<8x1xf32>
      %362 = math.rsqrt %361 : vector<8x1xf32>
      %363 = vector.broadcast %362 : vector<8x1xf32> to vector<8x32xf32>
      %364 = arith.mulf %359, %363 : vector<8x32xf32>
      %c0_257 = arith.constant 0 : index
      %c0_258 = arith.constant 0 : index
      %365 = vector.load %arg15[%c0_257, %c0_258] : memref<1x32xf32, #tpu.memory_space<vmem>>, vector<1x32xf32>
      %366 = vector.broadcast %365 : vector<1x32xf32> to vector<8x32xf32>
      %367 = arith.mulf %364, %366 : vector<8x32xf32>
      %c0_259 = arith.constant 0 : index
      %c0_260 = arith.constant 0 : index
      %368 = vector.load %arg16[%c0_259, %c0_260] : memref<1x32xf32, #tpu.memory_space<vmem>>, vector<1x32xf32>
      %369 = vector.broadcast %368 : vector<1x32xf32> to vector<8x32xf32>
      %370 = arith.addf %367, %369 : vector<8x32xf32>
      %c0_261 = arith.constant 0 : index
      %c0_262 = arith.constant 0 : index
      %c0_263 = arith.constant 0 : index
      %371 = vector.load %arg17[%c0_261, %c0_262, %c0_263] : memref<1x8x32xf32, #tpu.memory_space<vmem>>, vector<1x8x32xf32>
      %372 = vector.shape_cast %371 : vector<1x8x32xf32> to vector<8x32xf32>
      %373 = vector.shape_cast %370 : vector<8x32xf32> to vector<1x8x32xf32>
      tpu.vector_store %arg17[%c0_261, %c0_262, %c0_263], %373 {strides = array<i32>} : memref<1x8x32xf32, #tpu.memory_space<vmem>>, vector<1x8x32xf32>,
    } else {
    }
    return
  }
  func.func @transform_0(%arg0: i32, %arg1: i32, %arg2: i32) -> (i32, i32, i32) {
    %c0_i32 = arith.constant 0 : i32
    %c0_i32_0 = arith.constant 0 : i32
    return %arg0, %arg1, %c0_i32 : i32, i32, i32
  }
  func.func @transform_1(%arg0: i32, %arg1: i32, %arg2: i32) -> (i32, i32, i32) {
    %c0_i32 = arith.constant 0 : i32
    %c0_i32_0 = arith.constant 0 : i32
    return %arg0, %arg2, %c0_i32 : i32, i32, i32
  }
  func.func @transform_2(%arg0: i32, %arg1: i32, %arg2: i32) -> (i32, i32, i32) {
    %c0_i32 = arith.constant 0 : i32
    return %arg0, %arg1, %arg2 : i32, i32, i32
  }
  func.func @transform_3(%arg0: i32, %arg1: i32, %arg2: i32) -> (i32, i32) {
    %c0_i32 = arith.constant 0 : i32
    %c0_i32_0 = arith.constant 0 : i32
    %c0_i32_1 = arith.constant 0 : i32
    return %c0_i32, %c0_i32_0 : i32, i32
  }
  func.func @transform_4(%arg0: i32, %arg1: i32, %arg2: i32) -> (i32, i32) {
    %c0_i32 = arith.constant 0 : i32
    %c0_i32_0 = arith.constant 0 : i32
    %c0_i32_1 = arith.constant 0 : i32
    return %c0_i32, %c0_i32_0 : i32, i32
  }
  func.func @transform_5(%arg0: i32, %arg1: i32, %arg2: i32) -> (i32, i32) {
    %c0_i32 = arith.constant 0 : i32
    %c0_i32_0 = arith.constant 0 : i32
    %c0_i32_1 = arith.constant 0 : i32
    return %c0_i32, %c0_i32_0 : i32, i32
  }
  func.func @transform_6(%arg0: i32, %arg1: i32, %arg2: i32) -> (i32, i32) {
    %c0_i32 = arith.constant 0 : i32
    %c0_i32_0 = arith.constant 0 : i32
    %c0_i32_1 = arith.constant 0 : i32
    return %c0_i32, %c0_i32_0 : i32, i32
  }
  func.func @transform_7(%arg0: i32, %arg1: i32, %arg2: i32) -> (i32, i32) {
    %c0_i32 = arith.constant 0 : i32
    %c0_i32_0 = arith.constant 0 : i32
    %c0_i32_1 = arith.constant 0 : i32
    return %c0_i32, %c0_i32_0 : i32, i32
  }
  func.func @transform_8(%arg0: i32, %arg1: i32, %arg2: i32) -> (i32, i32) {
    %c0_i32 = arith.constant 0 : i32
    %c0_i32_0 = arith.constant 0 : i32
    %c0_i32_1 = arith.constant 0 : i32
    return %c0_i32, %c0_i32_0 : i32, i32
  }
  func.func @transform_9(%arg0: i32, %arg1: i32, %arg2: i32) -> (i32, i32) {
    %c0_i32 = arith.constant 0 : i32
    %c0_i32_0 = arith.constant 0 : i32
    %c0_i32_1 = arith.constant 0 : i32
    return %c0_i32, %c0_i32_0 : i32, i32
  }
  func.func @transform_10(%arg0: i32, %arg1: i32, %arg2: i32) -> (i32, i32) {
    %c0_i32 = arith.constant 0 : i32
    %c0_i32_0 = arith.constant 0 : i32
    %c0_i32_1 = arith.constant 0 : i32
    return %c0_i32, %c0_i32_0 : i32, i32
  }
  func.func @transform_11(%arg0: i32, %arg1: i32, %arg2: i32) -> (i32, i32) {
    %c0_i32 = arith.constant 0 : i32
    %c0_i32_0 = arith.constant 0 : i32
    %c0_i32_1 = arith.constant 0 : i32
    return %c0_i32, %c0_i32_0 : i32, i32
  }
  func.func @transform_12(%arg0: i32, %arg1: i32, %arg2: i32) -> (i32, i32) {
    %c0_i32 = arith.constant 0 : i32
    %c0_i32_0 = arith.constant 0 : i32
    %c0_i32_1 = arith.constant 0 : i32
    return %c0_i32, %c0_i32_0 : i32, i32
  }
  func.func @transform_13(%arg0: i32, %arg1: i32, %arg2: i32) -> (i32, i32) {
    %c0_i32 = arith.constant 0 : i32
    %c0_i32_0 = arith.constant 0 : i32
    %c0_i32_1 = arith.constant 0 : i32
    return %c0_i32, %c0_i32_0 : i32, i32
  }
  func.func @transform_14(%arg0: i32, %arg1: i32, %arg2: i32) -> (i32, i32, i32) {
    %c0_i32 = arith.constant 0 : i32
    %c0_i32_0 = arith.constant 0 : i32
    return %arg0, %arg1, %c0_i32 : i32, i32, i32
  }
  func.func @transform_15(%arg0: i32, %arg1: i32, %arg2: i32) -> (i32, i32, i32, i32) {
    %c0_i32 = arith.constant 0 : i32
    %c0_i32_0 = arith.constant 0 : i32
    %c0_i32_1 = arith.constant 0 : i32
    return %arg0, %c0_i32, %arg1, %c0_i32_0 : i32, i32, i32, i32
  }
}

</mosaic_0001>

<llo_original>
// kernel: tpu_custom_call.1
$region0: #{tpu_custom_call.1}
  #allocation0 [shape = 'u32[]', space=smem, size = 0x4, offset = 0x4, fixed_abs, tag = 'smem constant byte address 0x4 - core index']
  #allocation1 [shape = 'u32[144,128]{1,0:T(1,128)}', space=vmem, size = 0x12000, scoped, tag = 'internal scratch']
  #allocation2 [shape = 'bf16[4,8,8]{2,1,0:T(8,128)(2,1)}', space=vmem, size = 0x2000, scoped, tag = 'scratch operand']
  #allocation3 [shape = 'f32[4,8,1]{2,1,0:T(8,128)}', space=vmem, size = 0x4000, scoped, tag = 'scratch operand']
  #allocation4 [shape = 'f32[4,8,1]{2,1,0:T(8,128)}', space=vmem, size = 0x4000, scoped, tag = 'scratch operand']
  #allocation5 [shape = 'f32[4,8,8]{2,1,0:T(8,128)}', space=vmem, size = 0x4000, scoped, tag = 'scratch operand']
  #allocation6 [shape = 'bf16[8,32]{1,0:T(8,128)(2,1)}', space=vmem, size = 0x800, scoped, tag = 'scratch operand']
  #allocation7 [shape = 'f32[4,1,8,8]{3,2,1,0:T(8,128)}', space=vmem, size = 0x4000, scoped, tag = 'scratch operand']
  #allocation8 [shape = 'f32[4,1,8,1]{3,2,1,0:T(8,128)}', space=vmem, size = 0x4000, scoped, tag = 'scratch operand']
  %s0 = inlined_call_operand.vmem [shape: f32[2,8,32], index: 0, kind: input, shape index: {}]
  %s1 = inlined_call_operand.vmem [shape: f32[2,8,32], index: 1, kind: input, shape index: {}]
  %s2 = inlined_call_operand.hbm [shape: bf16[2,8,8], index: 2, kind: input, shape index: {}]
  %s3 = inlined_call_operand.vmem [shape: bf16[32,32], index: 3, kind: input, shape index: {}]
  %s4 = inlined_call_operand.hbm [shape: bf16[32,64], index: 4, kind: input, shape index: {}]
  %s5 = inlined_call_operand.hbm [shape: bf16[32,32], index: 5, kind: input, shape index: {}]
  %s6 = inlined_call_operand.vmem [shape: f32[1,32], index: 6, kind: input, shape index: {}]
  %s7 = inlined_call_operand.vmem [shape: f32[1,32], index: 7, kind: input, shape index: {}]
  %s8 = inlined_call_operand.hbm [shape: bf16[32,64], index: 8, kind: input, shape index: {}]
  %s9 = inlined_call_operand.hbm [shape: f32[1,64], index: 9, kind: input, shape index: {}]
  %s10 = inlined_call_operand.vmem [shape: bf16[64,32], index: 10, kind: input, shape index: {}]
  %s11 = inlined_call_operand.vmem [shape: f32[1,32], index: 11, kind: input, shape index: {}]
  %s12 = inlined_call_operand.vmem [shape: f32[1,32], index: 12, kind: input, shape index: {}]
  %s13 = inlined_call_operand.vmem [shape: f32[1,32], index: 13, kind: input, shape index: {}]
  %s14 = inlined_call_operand.hbm [shape: f32[2,8,32], index: 14, kind: output, shape index: {0}]
  %s15 = inlined_call_operand.hbm [shape: f32[2,4,8,8], index: 15, kind: output, shape index: {1}]
  %16 = xla_tuple %s14, %s15
  %s17 = sld [smem:[#allocation0]]
  $region125: #{tpu_custom_call.1} parent=0
    _
  %s19 = ssub.s32 1, %s17
  %s20 = scalar_select 0, %s19, %s17
  $region1: #{tpu_custom_call.1} parent=0
    #allocation9 [shape = 'u8[4096]{0}', space=vmem, size = 0x1000, scoped, tag = 'input window, operand 2']
    #allocation10 [shape = 's32[2]{0}', space=sflag, size = 0x8, scoped, tag = 'scoped memory for tpu_custom_call.1']
    #allocation11 [shape = 's32[2]{0}', space=sflag, size = 0x8, scoped, tag = 'scoped memory for tpu_custom_call.1']
    #allocation12 [shape = 'u8[8192]{0}', space=vmem, size = 0x2000, scoped, tag = 'input window, operand 4, single buffered']
    #allocation13 [shape = 's32[1]{0}', space=sflag, size = 0x4, scoped, tag = 'scoped memory for tpu_custom_call.1']
    #allocation14 [shape = 'u8[8192]{0}', space=vmem, size = 0x2000, scoped, tag = 'input window, operand 5, single buffered']
    #allocation15 [shape = 'u8[8192]{0}', space=vmem, size = 0x2000, scoped, tag = 'input window, operand 8, single buffered']
    #allocation16 [shape = 's32[1]{0}', space=sflag, size = 0x4, scoped, tag = 'scoped memory for tpu_custom_call.1']
    #allocation17 [shape = 'u8[512]{0}', space=vmem, size = 0x400, scoped, tag = 'input window, operand 9, single buffered']
    #allocation18 [shape = 'u8[8192]{0}', space=vmem, size = 0x2000, scoped, tag = 'output window, operand 0']
    #allocation19 [shape = 'u8[32768]{0}', space=vmem, size = 0x8000, scoped, tag = 'output window, operand 1']
    #allocation20 [shape = 's32[2]{0}', space=sflag, size = 0x8, scoped, tag = 'scoped memory for tpu_custom_call.1']
    %21 = vsyncpa [#allocation10], 0
    %s22 = scalar_lea.sflag [#allocation10], 1
    %23 = vsyncpa %s22, 0
    %24 = vsyncpa [#allocation13], 0
    %25 = vsyncpa [#allocation16], 0
    %26 = vsyncpa [#allocation11], 0
    %s27 = scalar_lea.sflag [#allocation11], 1
    %28 = vsyncpa %s27, 0
    %29 = vsyncpa [#allocation20], 0
    %s30 = scalar_lea.sflag [#allocation20], 1
    %31 = vsyncpa %s30, 0
    loop: start=0, step=1, limit=4
    $region2: #{tpu_custom_call.1} parent=1 // loop_pre_header
      _
    $region3: #{tpu_custom_call.1} parent=1 // loop_header
      %s33 = sphi 0, %s37
      %p34 = scmp.ge.s32.totalorder %s33, 4
      %s40 = sphi 0, %s59
      %s41 = sphi 0, %s55
      %s42 = sphi 0, %s51
      %s43 = sphi 0, %s40
      %s44 = sphi 0, %s41
      %s45 = sphi 0, %s42
      %s46 = sphi 0, %s43
      %s47 = sphi 0, %s44
      %s48 = sphi 0, %s45
      %s64 = sphi 0, %s66
      %s67 = sphi 0, %s64
      %s68 = sphi 0, %s67
      %s84 = sphi 0, %s68
      %s92 = sphi 0, %s94
      %s95 = sphi 0, %s92
      %s96 = sphi 0, %s95
      %s112 = sphi 0, %s96
      %s122 = sphi 0, %s124
      %s125 = sphi 0, %s122
      %s126 = sphi 0, %s125
      %s142 = sphi 0, %s126
      %s146 = sphi 0, %s146
      %s148 = sphi 0, %s146
      %s149 = sphi 0, %s148
      %s163 = sphi 0, %s149
      %s167 = sphi 0, %s167
      %s169 = sphi 0, %s167
      %s170 = sphi 0, %s169
      %s184 = sphi 0, %s170
      %s188 = sphi 0, %s188
      %s190 = sphi 0, %s188
      %s191 = sphi 0, %s190
      %s205 = sphi 0, %s191
      %s209 = sphi 0, %s209
      %s211 = sphi 0, %s209
      %s212 = sphi 0, %s211
      %s226 = sphi 0, %s212
      %s230 = sphi 0, %s230
      %s232 = sphi 0, %s230
      %s233 = sphi 0, %s232
      %s247 = sphi 0, %s233
      %s251 = sphi 0, %s251
      %s253 = sphi 0, %s251
      %s254 = sphi 0, %s253
      %s268 = sphi 0, %s254
      %s272 = sphi 0, %s272
      %s274 = sphi 0, %s272
      %s275 = sphi 0, %s274
      %s289 = sphi 0, %s275
      %s293 = sphi 0, %s293
      %s295 = sphi 0, %s293
      %s296 = sphi 0, %s295
      %s310 = sphi 0, %s296
      %s314 = sphi 0, %s314
      %s316 = sphi 0, %s314
      %s317 = sphi 0, %s316
      %s331 = sphi 0, %s317
      %s335 = sphi 0, %s335
      %s337 = sphi 0, %s335
      %s338 = sphi 0, %s337
      %s352 = sphi 0, %s338
      %s356 = sphi 0, %s356
      %s358 = sphi 0, %s356
      %s359 = sphi 0, %s358
      %s373 = sphi 0, %s359
      %s381 = sphi 0, %s383
      %s384 = sphi 0, %s381
      %s385 = sphi 0, %s384
      %s401 = sphi 0, %s385
      %s409 = sphi 0, %s411
      %s412 = sphi 0, %s409
      %s413 = sphi 0, %s412
      %s429 = sphi 0, %s413
    $region4: #{tpu_custom_call.1} parent=1 // loop_header_branch
      %36 = sbr.rel (%p34) target = $region8
    $region5: #{tpu_custom_call.1} parent=1 // loop_body
      %s38 = ssub.s32 %s33, 1
      %s39 = ssub.s32 %s33, 2
      %s49 = sadd.s32 1, %s42
      %p50 = scmp.ge.s32.totalorder %s49, 1
      %s51 = scalar_select %p50, 0, %s49
      %s52 = sadd.s32 1, %s41
      %s53 = scalar_select %p50, %s52, %s41
      %p54 = scmp.ge.s32.totalorder %s53, 1
      %s55 = scalar_select %p54, 0, %s53
      %s56 = sadd.s32 1, %s40
      %s57 = scalar_select %p54, %s56, %s40
      %p58 = scmp.ge.s32.totalorder %s57, 2
      %s59 = scalar_select %p58, 0, %s57
      %s60 = ssub.s32 %s40, %s59
      %s61 = ssub.s32 %s41, %s55
      %s62 = sor.u32 %s60, %s61
      %p63 = scmp.eq.s32.totalorder %s62, 0
      %s65 = sadd.s32 %s64, 1
      %s66 = scalar_select %p63, %s64, %s65
      %p69 = pneg %p63
      %p70 = scmp.eq.s32.totalorder %s33, 1
      %p71 = por %p69, %p70
      %p72 = scmp.ne.s32.totalorder %s64, %s67
      %p73 = scmp.eq.s32.totalorder %s33, 0
      %p74 = por %p72, %p73
      %p75 = scmp.ne.s32.totalorder %s64, %s67
      %p76 = scmp.eq.s32.totalorder %s38, 1
      %p77 = por %p75, %p76
      %p78 = scmp.ne.s32.totalorder %s67, %s68
      %p79 = scmp.eq.s32.totalorder %s38, 0
      %p80 = por %p78, %p79
      %p81 = scmp.ne.s32.totalorder %s67, %s68
      %p82 = scmp.eq.s32.totalorder %s39, 1
      %p83 = por %p81, %p82
      %p85 = scmp.ne.s32.totalorder %s68, %s84
      %p86 = scmp.eq.s32.totalorder %s39, 0
      %p87 = por %p85, %p86
      %s88 = ssub.s32 %s40, %s59
      %s89 = ssub.s32 %s42, %s51
      %s90 = sor.u32 %s88, %s89
      %p91 = scmp.eq.s32.totalorder %s90, 0
      %s93 = sadd.s32 %s92, 1
      %s94 = scalar_select %p91, %s92, %s93
      %p97 = pneg %p91
      %p98 = scmp.eq.s32.totalorder %s33, 1
      %p99 = por %p97, %p98
      %p100 = scmp.ne.s32.totalorder %s92, %s95
      %p101 = scmp.eq.s32.totalorder %s33, 0
      %p102 = por %p100, %p101
      %p103 = scmp.ne.s32.totalorder %s92, %s95
      %p104 = scmp.eq.s32.totalorder %s38, 1
      %p105 = por %p103, %p104
      %p106 = scmp.ne.s32.totalorder %s95, %s96
      %p107 = scmp.eq.s32.totalorder %s38, 0
      %p108 = por %p106, %p107
      %p109 = scmp.ne.s32.totalorder %s95, %s96
      %p110 = scmp.eq.s32.totalorder %s39, 1
      %p111 = por %p109, %p110
      %p113 = scmp.ne.s32.totalorder %s96, %s112
      %p114 = scmp.eq.s32.totalorder %s39, 0
      %p115 = por %p113, %p114
      %s116 = ssub.s32 %s40, %s59
      %s117 = ssub.s32 %s41, %s55
      %s118 = sor.u32 %s116, %s117
      %s119 = ssub.s32 %s42, %s51
      %s120 = sor.u32 %s118, %s119
      %p121 = scmp.eq.s32.totalorder %s120, 0
      %s123 = sadd.s32 %s122, 1
      %s124 = scalar_select %p121, %s122, %s123
      %p127 = pneg %p121
      %p128 = scmp.eq.s32.totalorder %s33, 1
      %p129 = por %p127, %p128
      %p130 = scmp.ne.s32.totalorder %s122, %s125
      %p131 = scmp.eq.s32.totalorder %s33, 0
      %p132 = por %p130, %p131
      %p133 = scmp.ne.s32.totalorder %s122, %s125
      %p134 = scmp.eq.s32.totalorder %s38, 1
      %p135 = por %p133, %p134
      %p136 = scmp.ne.s32.totalorder %s125, %s126
      %p137 = scmp.eq.s32.totalorder %s38, 0
      %p138 = por %p136, %p137
      %p139 = scmp.ne.s32.totalorder %s125, %s126
      %p140 = scmp.eq.s32.totalorder %s39, 1
      %p141 = por %p139, %p140
      %p143 = scmp.ne.s32.totalorder %s126, %s142
      %p144 = scmp.eq.s32.totalorder %s39, 0
      %p145 = por %p143, %p144
      %s147 = sadd.s32 %s146, 1
      %p150 = scmp.eq.s32.totalorder %s33, 1
      %p151 = scmp.ne.s32.totalorder %s146, %s148
      %p152 = scmp.eq.s32.totalorder %s33, 0
      %p153 = por %p151, %p152
      %p154 = scmp.ne.s32.totalorder %s146, %s148
      %p155 = scmp.eq.s32.totalorder %s38, 1
      %p156 = por %p154, %p155
      %p157 = scmp.ne.s32.totalorder %s148, %s149
      %p158 = scmp.eq.s32.totalorder %s38, 0
      %p159 = por %p157, %p158
      %p160 = scmp.ne.s32.totalorder %s148, %s149
      %p161 = scmp.eq.s32.totalorder %s39, 1
      %p162 = por %p160, %p161
      %p164 = scmp.ne.s32.totalorder %s149, %s163
      %p165 = scmp.eq.s32.totalorder %s39, 0
      %p166 = por %p164, %p165
      %s168 = sadd.s32 %s167, 1
      %p171 = scmp.eq.s32.totalorder %s33, 1
      %p172 = scmp.ne.s32.totalorder %s167, %s169
      %p173 = scmp.eq.s32.totalorder %s33, 0
      %p174 = por %p172, %p173
      %p175 = scmp.ne.s32.totalorder %s167, %s169
      %p176 = scmp.eq.s32.totalorder %s38, 1
      %p177 = por %p175, %p176
      %p178 = scmp.ne.s32.totalorder %s169, %s170
      %p179 = scmp.eq.s32.totalorder %s38, 0
      %p180 = por %p178, %p179
      %p181 = scmp.ne.s32.totalorder %s169, %s170
      %p182 = scmp.eq.s32.totalorder %s39, 1
      %p183 = por %p181, %p182
      %p185 = scmp.ne.s32.totalorder %s170, %s184
      %p186 = scmp.eq.s32.totalorder %s39, 0
      %p187 = por %p185, %p186
      %s189 = sadd.s32 %s188, 1
      %p192 = scmp.eq.s32.totalorder %s33, 1
      %p193 = scmp.ne.s32.totalorder %s188, %s190
      %p194 = scmp.eq.s32.totalorder %s33, 0
      %p195 = por %p193, %p194
      %p196 = scmp.ne.s32.totalorder %s188, %s190
      %p197 = scmp.eq.s32.totalorder %s38, 1
      %p198 = por %p196, %p197
      %p199 = scmp.ne.s32.totalorder %s190, %s191
      %p200 = scmp.eq.s32.totalorder %s38, 0
      %p201 = por %p199, %p200
      %p202 = scmp.ne.s32.totalorder %s190, %s191
      %p203 = scmp.eq.s32.totalorder %s39, 1
      %p204 = por %p202, %p203
      %p206 = scmp.ne.s32.totalorder %s191, %s205
      %p207 = scmp.eq.s32.totalorder %s39, 0
      %p208 = por %p206, %p207
      %s210 = sadd.s32 %s209, 1
      %p213 = scmp.eq.s32.totalorder %s33, 1
      %p214 = scmp.ne.s32.totalorder %s209, %s211
      %p215 = scmp.eq.s32.totalorder %s33, 0
      %p216 = por %p214, %p215
      %p217 = scmp.ne.s32.totalorder %s209, %s211
      %p218 = scmp.eq.s32.totalorder %s38, 1
      %p219 = por %p217, %p218
      %p220 = scmp.ne.s32.totalorder %s211, %s212
      %p221 = scmp.eq.s32.totalorder %s38, 0
      %p222 = por %p220, %p221
      %p223 = scmp.ne.s32.totalorder %s211, %s212
      %p224 = scmp.eq.s32.totalorder %s39, 1
      %p225 = por %p223, %p224
      %p227 = scmp.ne.s32.totalorder %s212, %s226
      %p228 = scmp.eq.s32.totalorder %s39, 0
      %p229 = por %p227, %p228
      %s231 = sadd.s32 %s230, 1
      %p234 = scmp.eq.s32.totalorder %s33, 1
      %p235 = scmp.ne.s32.totalorder %s230, %s232
      %p236 = scmp.eq.s32.totalorder %s33, 0
      %p237 = por %p235, %p236
      %p238 = scmp.ne.s32.totalorder %s230, %s232
      %p239 = scmp.eq.s32.totalorder %s38, 1
      %p240 = por %p238, %p239
      %p241 = scmp.ne.s32.totalorder %s232, %s233
      %p242 = scmp.eq.s32.totalorder %s38, 0
      %p243 = por %p241, %p242
      %p244 = scmp.ne.s32.totalorder %s232, %s233
      %p245 = scmp.eq.s32.totalorder %s39, 1
      %p246 = por %p244, %p245
      %p248 = scmp.ne.s32.totalorder %s233, %s247
      %p249 = scmp.eq.s32.totalorder %s39, 0
      %p250 = por %p248, %p249
      %s252 = sadd.s32 %s251, 1
      %p255 = scmp.eq.s32.totalorder %s33, 1
      %p256 = scmp.ne.s32.totalorder %s251, %s253
      %p257 = scmp.eq.s32.totalorder %s33, 0
      %p258 = por %p256, %p257
      %p259 = scmp.ne.s32.totalorder %s251, %s253
      %p260 = scmp.eq.s32.totalorder %s38, 1
      %p261 = por %p259, %p260
      %p262 = scmp.ne.s32.totalorder %s253, %s254
      %p263 = scmp.eq.s32.totalorder %s38, 0
      %p264 = por %p262, %p263
      %p265 = scmp.ne.s32.totalorder %s253, %s254
      %p266 = scmp.eq.s32.totalorder %s39, 1
      %p267 = por %p265, %p266
      %p269 = scmp.ne.s32.totalorder %s254, %s268
      %p270 = scmp.eq.s32.totalorder %s39, 0
      %p271 = por %p269, %p270
      %s273 = sadd.s32 %s272, 1
      %p276 = scmp.eq.s32.totalorder %s33, 1
      %p277 = scmp.ne.s32.totalorder %s272, %s274
      %p278 = scmp.eq.s32.totalorder %s33, 0
      %p279 = por %p277, %p278
      %p280 = scmp.ne.s32.totalorder %s272, %s274
      %p281 = scmp.eq.s32.totalorder %s38, 1
      %p282 = por %p280, %p281
      %p283 = scmp.ne.s32.totalorder %s274, %s275
      %p284 = scmp.eq.s32.totalorder %s38, 0
      %p285 = por %p283, %p284
      %p286 = scmp.ne.s32.totalorder %s274, %s275
      %p287 = scmp.eq.s32.totalorder %s39, 1
      %p288 = por %p286, %p287
      %p290 = scmp.ne.s32.totalorder %s275, %s289
      %p291 = scmp.eq.s32.totalorder %s39, 0
      %p292 = por %p290, %p291
      %s294 = sadd.s32 %s293, 1
      %p297 = scmp.eq.s32.totalorder %s33, 1
      %p298 = scmp.ne.s32.totalorder %s293, %s295
      %p299 = scmp.eq.s32.totalorder %s33, 0
      %p300 = por %p298, %p299
      %p301 = scmp.ne.s32.totalorder %s293, %s295
      %p302 = scmp.eq.s32.totalorder %s38, 1
      %p303 = por %p301, %p302
      %p304 = scmp.ne.s32.totalorder %s295, %s296
      %p305 = scmp.eq.s32.totalorder %s38, 0
      %p306 = por %p304, %p305
      %p307 = scmp.ne.s32.totalorder %s295, %s296
      %p308 = scmp.eq.s32.totalorder %s39, 1
      %p309 = por %p307, %p308
      %p311 = scmp.ne.s32.totalorder %s296, %s310
      %p312 = scmp.eq.s32.totalorder %s39, 0
      %p313 = por %p311, %p312
      %s315 = sadd.s32 %s314, 1
      %p318 = scmp.eq.s32.totalorder %s33, 1
      %p319 = scmp.ne.s32.totalorder %s314, %s316
      %p320 = scmp.eq.s32.totalorder %s33, 0
      %p321 = por %p319, %p320
      %p322 = scmp.ne.s32.totalorder %s314, %s316
      %p323 = scmp.eq.s32.totalorder %s38, 1
      %p324 = por %p322, %p323
      %p325 = scmp.ne.s32.totalorder %s316, %s317
      %p326 = scmp.eq.s32.totalorder %s38, 0
      %p327 = por %p325, %p326
      %p328 = scmp.ne.s32.totalorder %s316, %s317
      %p329 = scmp.eq.s32.totalorder %s39, 1
      %p330 = por %p328, %p329
      %p332 = scmp.ne.s32.totalorder %s317, %s331
      %p333 = scmp.eq.s32.totalorder %s39, 0
      %p334 = por %p332, %p333
      %s336 = sadd.s32 %s335, 1
      %p339 = scmp.eq.s32.totalorder %s33, 1
      %p340 = scmp.ne.s32.totalorder %s335, %s337
      %p341 = scmp.eq.s32.totalorder %s33, 0
      %p342 = por %p340, %p341
      %p343 = scmp.ne.s32.totalorder %s335, %s337
      %p344 = scmp.eq.s32.totalorder %s38, 1
      %p345 = por %p343, %p344
      %p346 = scmp.ne.s32.totalorder %s337, %s338
      %p347 = scmp.eq.s32.totalorder %s38, 0
      %p348 = por %p346, %p347
      %p349 = scmp.ne.s32.totalorder %s337, %s338
      %p350 = scmp.eq.s32.totalorder %s39, 1
      %p351 = por %p349, %p350
      %p353 = scmp.ne.s32.totalorder %s338, %s352
      %p354 = scmp.eq.s32.totalorder %s39, 0
      %p355 = por %p353, %p354
      %s357 = sadd.s32 %s356, 1
      %p360 = scmp.eq.s32.totalorder %s33, 1
      %p361 = scmp.ne.s32.totalorder %s356, %s358
      %p362 = scmp.eq.s32.totalorder %s33, 0
      %p363 = por %p361, %p362
      %p364 = scmp.ne.s32.totalorder %s356, %s358
      %p365 = scmp.eq.s32.totalorder %s38, 1
      %p366 = por %p364, %p365
      %p367 = scmp.ne.s32.totalorder %s358, %s359
      %p368 = scmp.eq.s32.totalorder %s38, 0
      %p369 = por %p367, %p368
      %p370 = scmp.ne.s32.totalorder %s358, %s359
      %p371 = scmp.eq.s32.totalorder %s39, 1
      %p372 = por %p370, %p371
      %p374 = scmp.ne.s32.totalorder %s359, %s373
      %p375 = scmp.eq.s32.totalorder %s39, 0
      %p376 = por %p374, %p375
      %s377 = ssub.s32 %s40, %s59
      %s378 = ssub.s32 %s41, %s55
      %s379 = sor.u32 %s377, %s378
      %p380 = scmp.eq.s32.totalorder %s379, 0
      %s382 = sadd.s32 %s381, 1
      %s383 = scalar_select %p380, %s381, %s382
      %p386 = pneg %p380
      %p387 = scmp.eq.s32.totalorder %s33, 1
      %p388 = por %p386, %p387
      %p389 = scmp.ne.s32.totalorder %s381, %s384
      %p390 = scmp.eq.s32.totalorder %s33, 0
      %p391 = por %p389, %p390
      %p392 = scmp.ne.s32.totalorder %s381, %s384
      %p393 = scmp.eq.s32.totalorder %s38, 1
      %p394 = por %p392, %p393
      %p395 = scmp.ne.s32.totalorder %s384, %s385
      %p396 = scmp.eq.s32.totalorder %s38, 0
      %p397 = por %p395, %p396
      %p398 = scmp.ne.s32.totalorder %s384, %s385
      %p399 = scmp.eq.s32.totalorder %s39, 1
      %p400 = por %p398, %p399
      %p402 = scmp.ne.s32.totalorder %s385, %s401
      %p403 = scmp.eq.s32.totalorder %s39, 0
      %p404 = por %p402, %p403
      %s405 = ssub.s32 %s40, %s59
      %s406 = ssub.s32 %s41, %s55
      %s407 = sor.u32 %s405, %s406
      %p408 = scmp.eq.s32.totalorder %s407, 0
      %s410 = sadd.s32 %s409, 1
      %s411 = scalar_select %p408, %s409, %s410
      %p414 = pneg %p408
      %p415 = scmp.eq.s32.totalorder %s33, 1
      %p416 = por %p414, %p415
      %p417 = scmp.ne.s32.totalorder %s409, %s412
      %p418 = scmp.eq.s32.totalorder %s33, 0
      %p419 = por %p417, %p418
      %p420 = scmp.ne.s32.totalorder %s409, %s412
      %p421 = scmp.eq.s32.totalorder %s38, 1
      %p422 = por %p420, %p421
      %p423 = scmp.ne.s32.totalorder %s412, %s413
      %p424 = scmp.eq.s32.totalorder %s38, 0
      %p425 = por %p423, %p424
      %p426 = scmp.ne.s32.totalorder %s412, %s413
      %p427 = scmp.eq.s32.totalorder %s39, 1
      %p428 = por %p426, %p427
      %p430 = scmp.ne.s32.totalorder %s413, %s429
      %p431 = scmp.eq.s32.totalorder %s39, 0
      %p432 = por %p430, %p431
      %p433 = scmp.le.s32.totalorder 1, %s33
      %p434 = scmp.lt.s32.totalorder %s33, 3
      %p435 = pnand %p433, %p434
      %p436 = pneg %p435
      // Predicated region
      $region9: #{tpu_custom_call.1} parent=5 // pred_check
        _
      $region10: #{tpu_custom_call.1} parent=5 // pred_check_branch
        %438 = sbr.rel (%p435) target = $region12
      $region11: #{tpu_custom_call.1} parent=5 // pred_region
        %s439 = ssub.s32 %s33, 1
        // Predicated region
        $region13: #{tpu_custom_call.1} parent=11 // pred_check
          %p440 = pneg %p159
        $region14: #{tpu_custom_call.1} parent=11 // pred_check_branch
          %442 = sbr.rel (%p440) target = $region16
        $region15: #{tpu_custom_call.1} parent=11 // pred_region
          _
        $region16: #{tpu_custom_call.1} parent=11 // pred_fallthru
          _
        // Predicated region
        $region17: #{tpu_custom_call.1} parent=11 // pred_check
          %p443 = pneg %p180
        $region18: #{tpu_custom_call.1} parent=11 // pred_check_branch
          %445 = sbr.rel (%p443) target = $region20
        $region19: #{tpu_custom_call.1} parent=11 // pred_region
          %s447 = ssub.s32 256, 256
          %448 = vsyncadd [#allocation13], %s447
          %s449 = sshll.u32 [#allocation12], 4
          %s450 = int_to_ptr.vmem [resolvable:$true] %s449
          %455 = dma.hbm_to_vmem [thread:$0]  %s4, 256, %s450, [#allocation13], 64, 64, 4
        $region20: #{tpu_custom_call.1} parent=11 // pred_fallthru
          _
        // Predicated region
        $region21: #{tpu_custom_call.1} parent=11 // pred_check
          %p456 = pneg %p201
        $region22: #{tpu_custom_call.1} parent=11 // pred_check_branch
          %458 = sbr.rel (%p456) target = $region24
        $region23: #{tpu_custom_call.1} parent=11 // pred_region
          %s460 = ssub.s32 256, 256
          %461 = vsyncadd [#allocation13], %s460
          %s462 = sshll.u32 [#allocation14], 4
          %s463 = int_to_ptr.vmem [resolvable:$true] %s462
          %468 = dma.hbm_to_vmem [thread:$0]  %s5, 256, %s463, [#allocation13], 64, 64, 4
        $region24: #{tpu_custom_call.1} parent=11 // pred_fallthru
          _
        // Predicated region
        $region25: #{tpu_custom_call.1} parent=11 // pred_check
          %p469 = pneg %p222
        $region26: #{tpu_custom_call.1} parent=11 // pred_check_branch
          %471 = sbr.rel (%p469) target = $region28
        $region27: #{tpu_custom_call.1} parent=11 // pred_region
          _
        $region28: #{tpu_custom_call.1} parent=11 // pred_fallthru
          _
        // Predicated region
        $region29: #{tpu_custom_call.1} parent=11 // pred_check
          %p472 = pneg %p243
        $region30: #{tpu_custom_call.1} parent=11 // pred_check_branch
          %474 = sbr.rel (%p472) target = $region32
        $region31: #{tpu_custom_call.1} parent=11 // pred_region
          _
        $region32: #{tpu_custom_call.1} parent=11 // pred_fallthru
          _
        // Predicated region
        $region33: #{tpu_custom_call.1} parent=11 // pred_check
          %p475 = pneg %p264
        $region34: #{tpu_custom_call.1} parent=11 // pred_check_branch
          %477 = sbr.rel (%p475) target = $region36
        $region35: #{tpu_custom_call.1} parent=11 // pred_region
          %s479 = ssub.s32 256, 256
          %480 = vsyncadd [#allocation16], %s479
          %s481 = sshll.u32 [#allocation15], 4
          %s482 = int_to_ptr.vmem [resolvable:$true] %s481
          %487 = dma.hbm_to_vmem [thread:$0]  %s8, 256, %s482, [#allocation16], 64, 64, 4
        $region36: #{tpu_custom_call.1} parent=11 // pred_fallthru
          _
        // Predicated region
        $region37: #{tpu_custom_call.1} parent=11 // pred_check
          %p488 = pneg %p285
        $region38: #{tpu_custom_call.1} parent=11 // pred_check_branch
          %490 = sbr.rel (%p488) target = $region40
        $region39: #{tpu_custom_call.1} parent=11 // pred_region
          %s492 = ssub.s32 16, 16
          %493 = vsyncadd [#allocation16], %s492
          %s495 = sshll.u32 [#allocation17], 4
          %s496 = int_to_ptr.vmem [resolvable:$true] %s495
          %498 = dma.hbm_to_vmem [thread:$0]  %s9, 16, %s496, [#allocation16]
        $region40: #{tpu_custom_call.1} parent=11 // pred_fallthru
          _
        // Predicated region
        $region41: #{tpu_custom_call.1} parent=11 // pred_check
          %p499 = pneg %p306
        $region42: #{tpu_custom_call.1} parent=11 // pred_check_branch
          %501 = sbr.rel (%p499) target = $region44
        $region43: #{tpu_custom_call.1} parent=11 // pred_region
          _
        $region44: #{tpu_custom_call.1} parent=11 // pred_fallthru
          _
        // Predicated region
        $region45: #{tpu_custom_call.1} parent=11 // pred_check
          %p502 = pneg %p327
        $region46: #{tpu_custom_call.1} parent=11 // pred_check_branch
          %504 = sbr.rel (%p502) target = $region48
        $region47: #{tpu_custom_call.1} parent=11 // pred_region
          _
        $region48: #{tpu_custom_call.1} parent=11 // pred_fallthru
          _
        // Predicated region
        $region49: #{tpu_custom_call.1} parent=11 // pred_check
          %p505 = pneg %p348
        $region50: #{tpu_custom_call.1} parent=11 // pred_check_branch
          %507 = sbr.rel (%p505) target = $region52
        $region51: #{tpu_custom_call.1} parent=11 // pred_region
          _
        $region52: #{tpu_custom_call.1} parent=11 // pred_fallthru
          _
        // Predicated region
        $region53: #{tpu_custom_call.1} parent=11 // pred_check
          %p508 = pneg %p369
        $region54: #{tpu_custom_call.1} parent=11 // pred_check_branch
          %510 = sbr.rel (%p508) target = $region56
        $region55: #{tpu_custom_call.1} parent=11 // pred_region
          _
        $region56: #{tpu_custom_call.1} parent=11 // pred_fallthru
          _
      $region12: #{tpu_custom_call.1} parent=5 // pred_fallthru
        _
      %p511 = scmp.lt.s32.totalorder %s33, 2
      // Predicated region
      $region57: #{tpu_custom_call.1} parent=5 // pred_check
        %p512 = pneg %p511
      $region58: #{tpu_custom_call.1} parent=5 // pred_check_branch
        %514 = sbr.rel (%p512) target = $region60
      $region59: #{tpu_custom_call.1} parent=5 // pred_region
        // Predicated region
        $region61: #{tpu_custom_call.1} parent=59 // pred_check
          %p515 = pneg %p74
        $region62: #{tpu_custom_call.1} parent=59 // pred_check_branch
          %517 = sbr.rel (%p515) target = $region64
        $region63: #{tpu_custom_call.1} parent=59 // pred_region
          %p518 = scmp.lt.s32.totalorder %s40, 1
          %s519 = scalar_select %p518, %s40, 1
          %p520 = scmp.lt.s32.totalorder %s41, 0
          %s521 = scalar_select %p520, %s41, 0
          %s522 = sadd.s32 %s521, %s519
          %s523 = smul.addr %s522, 8
          %s524 = scalar_lea.vmem %s0, %s523
        $region64: #{tpu_custom_call.1} parent=59 // pred_fallthru
          _
        // Predicated region
        $region65: #{tpu_custom_call.1} parent=59 // pred_check
          %p525 = pneg %p102
        $region66: #{tpu_custom_call.1} parent=59 // pred_check_branch
          %527 = sbr.rel (%p525) target = $region68
        $region67: #{tpu_custom_call.1} parent=59 // pred_region
          %p528 = scmp.lt.s32.totalorder %s40, 1
          %s529 = scalar_select %p528, %s40, 1
          %p530 = scmp.lt.s32.totalorder %s42, 0
          %s531 = scalar_select %p530, %s42, 0
          %s532 = sadd.s32 %s531, %s529
          %s533 = smul.addr %s532, 8
          %s534 = scalar_lea.vmem %s1, %s533
        $region68: #{tpu_custom_call.1} parent=59 // pred_fallthru
          _
        // Predicated region
        $region69: #{tpu_custom_call.1} parent=59 // pred_check
          %p535 = pneg %p132
        $region70: #{tpu_custom_call.1} parent=59 // pred_check_branch
          %537 = sbr.rel (%p535) target = $region72
        $region71: #{tpu_custom_call.1} parent=59 // pred_region
          %s538 = sand.u32 %s122, 1
          %s539 = scalar_lea.sflag [#allocation10], %s538
          %s540 = sand.u32 %s122, 1
          %s541 = smul.addr %s540, 4
          %s542 = scalar_lea.vmem [#allocation9], %s541
          %s544 = ssub.s32 64, 64
          %545 = vsyncadd %s539, %s544
          %s546 = sadd.s32 %s42, %s41
          %s547 = sadd.s32 %s546, %s40
          %s548 = smul.addr %s547, 64
          %s549 = scalar_lea.hbm %s2, %s548
          %s551 = sshll.u32 %s542, 4
          %s552 = int_to_ptr.vmem [resolvable:$true] %s551
          %554 = dma.hbm_to_vmem [thread:$0]  %s549, 64, %s552, %s539
        $region72: #{tpu_custom_call.1} parent=59 // pred_fallthru
          _
      $region60: #{tpu_custom_call.1} parent=5 // pred_fallthru
        _
      %p555 = scmp.le.s32.totalorder 1, %s33
      %p556 = scmp.lt.s32.totalorder %s33, 3
      %p557 = pnand %p555, %p556
      %p558 = pneg %p557
      // Predicated region
      $region73: #{tpu_custom_call.1} parent=5 // pred_check
        _
      $region74: #{tpu_custom_call.1} parent=5 // pred_check_branch
        %560 = sbr.rel (%p557) target = $region76
      $region75: #{tpu_custom_call.1} parent=5 // pred_region
        %s561 = ssub.s32 %s33, 1
        %s562 = sand.u32 %s125, 1
        %s563 = scalar_lea.sflag [#allocation10], %s562
        %s564 = sand.u32 %s125, 1
        %s565 = smul.addr %s564, 4
        %s566 = scalar_lea.vmem [#allocation9], %s565
        // Predicated region
        $region77: #{tpu_custom_call.1} parent=75 // pred_check
          %p567 = pneg %p138
        $region78: #{tpu_custom_call.1} parent=75 // pred_check_branch
          %569 = sbr.rel (%p567) target = $region80
        $region79: #{tpu_custom_call.1} parent=75 // pred_region
          %570 = dma.done %s563, 64
        $region80: #{tpu_custom_call.1} parent=75 // pred_fallthru
          _
        // Predicated region
        $region81: #{tpu_custom_call.1} parent=75 // pred_check
          %p571 = pneg %p180
        $region82: #{tpu_custom_call.1} parent=75 // pred_check_branch
          %573 = sbr.rel (%p571) target = $region84
        $region83: #{tpu_custom_call.1} parent=75 // pred_region
          %574 = dma.done [#allocation13], 256
        $region84: #{tpu_custom_call.1} parent=75 // pred_fallthru
          _
        // Predicated region
        $region85: #{tpu_custom_call.1} parent=75 // pred_check
          %p575 = pneg %p201
        $region86: #{tpu_custom_call.1} parent=75 // pred_check_branch
          %577 = sbr.rel (%p575) target = $region88
        $region87: #{tpu_custom_call.1} parent=75 // pred_region
          %578 = dma.done [#allocation13], 256
        $region88: #{tpu_custom_call.1} parent=75 // pred_fallthru
          _
        // Predicated region
        $region89: #{tpu_custom_call.1} parent=75 // pred_check
          %p579 = pneg %p264
        $region90: #{tpu_custom_call.1} parent=75 // pred_check_branch
          %581 = sbr.rel (%p579) target = $region92
        $region91: #{tpu_custom_call.1} parent=75 // pred_region
          %582 = dma.done [#allocation16], 256
        $region92: #{tpu_custom_call.1} parent=75 // pred_fallthru
          _
        // Predicated region
        $region93: #{tpu_custom_call.1} parent=75 // pred_check
          %p583 = pneg %p285
        $region94: #{tpu_custom_call.1} parent=75 // pred_check_branch
          %585 = sbr.rel (%p583) target = $region96
        $region95: #{tpu_custom_call.1} parent=75 // pred_region
          %586 = dma.done [#allocation16], 16
        $region96: #{tpu_custom_call.1} parent=75 // pred_fallthru
          _
        %p587 = scmp.lt.s32.totalorder %s43, 1
        %s588 = scalar_select %p587, %s43, 1
        %p589 = scmp.lt.s32.totalorder %s44, 0
        %s590 = scalar_select %p589, %s44, 0
        %s591 = sadd.s32 %s590, %s588
        %s592 = smul.addr %s591, 8
        %s593 = scalar_lea.vmem %s0, %s592
        %p594 = pneg %p80
        %p595 = pneg %p77
        %p596 = scmp.lt.s32.totalorder %s43, 1
        %s597 = scalar_select %p596, %s43, 1
        %p598 = scmp.lt.s32.totalorder %s45, 0
        %s599 = scalar_select %p598, %s45, 0
        %s600 = sadd.s32 %s599, %s597
        %s601 = smul.addr %s600, 8
        %s602 = scalar_lea.vmem %s1, %s601
        %p603 = pneg %p108
        %p604 = pneg %p105
        %s605 = sand.u32 %s125, 1
        %s606 = scalar_lea.sflag [#allocation10], %s605
        %s607 = sand.u32 %s125, 1
        %s608 = smul.addr %s607, 4
        %s609 = scalar_lea.vmem [#allocation9], %s608
        %p610 = pneg %p138
        %p611 = pneg %p135
        %p612 = pneg %p159
        %p613 = pneg %p156
        %p614 = pneg %p180
        %p615 = pneg %p177
        %p616 = pneg %p201
        %p617 = pneg %p198
        %p618 = pneg %p222
        %p619 = pneg %p219
        %p620 = pneg %p243
        %p621 = pneg %p240
        %p622 = pneg %p264
        %p623 = pneg %p261
        %p624 = pneg %p285
        %p625 = pneg %p282
        %p626 = pneg %p306
        %p627 = pneg %p303
        %p628 = pneg %p327
        %p629 = pneg %p324
        %p630 = pneg %p348
        %p631 = pneg %p345
        %p632 = pneg %p369
        %p633 = pneg %p366
        %p634 = pneg %p397
        %p635 = pneg %p394
        %s636 = sand.u32 %s384, 1
        %s637 = scalar_lea.sflag [#allocation11], %s636
        %s638 = sand.u32 %s384, 1
        %s639 = smul.addr %s638, 8
        %s640 = scalar_lea.vmem [#allocation18], %s639
        %p641 = pneg %p425
        %p642 = pneg %p422
        %s643 = sand.u32 %s412, 1
        %s644 = scalar_lea.sflag [#allocation20], %s643
        %s645 = sand.u32 %s412, 1
        %s646 = smul.addr %s645, 32
        %s647 = scalar_lea.vmem [#allocation19], %s646
        %p648 = scmp.lt.s32.totalorder %s43, 1
        %s649 = scalar_select %p648, %s43, 1
        %p650 = scmp.lt.s32.totalorder %s44, 0
        %s651 = scalar_select %p650, %s44, 0
        %s652 = sadd.s32 %s651, %s649
        %s653 = smul.addr %s652, 8
        %s654 = scalar_lea.vmem %s0, %s653
        %p655 = scmp.lt.s32.totalorder %s43, 1
        %s656 = scalar_select %p655, %s43, 1
        %p657 = scmp.lt.s32.totalorder %s45, 0
        %s658 = scalar_select %p657, %s45, 0
        %s659 = sadd.s32 %s658, %s656
        %s660 = smul.addr %s659, 8
        %s661 = scalar_lea.vmem %s1, %s660
        %p663 = scmp.eq.s32.totalorder %s45, 0
        // Predicated region
        $region97: #{tpu_custom_call.1} parent=75 // pred_check
          %p664 = pneg %p663
        $region98: #{tpu_custom_call.1} parent=75 // pred_check_branch
          %666 = sbr.rel (%p664) target = $region100
        $region99: #{tpu_custom_call.1} parent=75 // pred_region
          %v667 = vld [vmem:[%s654] sm:$0xff]
          %v668 = vpack.c.bf16 %v667, %v667
          %v669 = vld [vmem:[%s3] sm:$0xf]
          %v670 = vld [vmem:[%s3 + $0x4] sm:$0xf]
          %v671 = vld [vmem:[%s3 + $0x8] sm:$0xf]
          %v672 = vld [vmem:[%s3 + $0xc] sm:$0xf]
          %v677 = vunpack.c.l.b16 %v669
          %v678 = vunpack.c.l.b16 %v670
          %v679 = vunpack.c.l.b16 %v671
          %v680 = vunpack.c.l.b16 %v672
          %v681 = vpack.c.b16 %v678, %v677
          %v682 = vpack.c.b16 %v680, %v679
          %vm685 = vcmask 261120
          %v687 = vsel %vm685, %v668, 0
          %689 = vmatprep.subr.bf16.mxu0 0
          %690 = vmatpush1.bf16.msra.mxu0 0
          %691 = vmatprep.subr.bf16.mxu0 0
          %692 = vmatpush1.bf16.msra.mxu0 0
          %693 = vmatprep.subr.bf16.mxu0 0
          %694 = vmatpush1.bf16.msra.mxu0 0
          %695 = vmatprep.subr.bf16.mxu0 0
          %696 = vmatpush1.bf16.msra.mxu0 0
          %697 = vmatprep.subr.bf16.mxu0 0
          %698 = vmatpush1.bf16.msra.mxu0 0
          %699 = vmatprep.subr.bf16.mxu0 0
          %700 = vmatpush1.bf16.msra.mxu0 0
          %701 = vmatprep.subr.bf16.mxu0 0
          %702 = vmatpush1.bf16.msra.mxu0 %v682
          %703 = vmatprep.subr.bf16.mxu0 0
          %704 = vmatpush1.bf16.msra.mxu0 %v681
          %705 = vmatprep.subr.bf16.mxu0 0
          %706 = vmatpush2.bf16.msra.mxu0 0
          %707 = vmatprep.subr.bf16.mxu0 0
          %708 = vmatpush2.bf16.msra.mxu0 0
          %709 = vmatprep.subr.bf16.mxu0 0
          %710 = vmatpush2.bf16.msra.mxu0 0
          %711 = vmatprep.subr.bf16.mxu0 0
          %712 = vmatpush2.bf16.msra.mxu0 0
          %713 = vmatprep.subr.bf16.mxu0 0
          %714 = vmatpush2.bf16.msra.mxu0 0
          %715 = vmatprep.subr.bf16.mxu0 0
          %716 = vmatpush2.bf16.msra.mxu0 0
          %717 = vmatprep.subr.bf16.mxu0 0
          %718 = vmatpush2.bf16.msra.mxu0 0
          %719 = vmatprep.subr.bf16.mxu0 0
          %720 = vmatpush2.bf16.msra.mxu0 0
          %721 = vmatprep.mubr.bf16.mxu0 0
          %722 = vmatmul.mubr.bf16.gmra.mxu0 %v687
          %v723 = vpop.f32.mrf.mxu0
          %v724 = vadd.f32 0.0, %v723
          %v725 = vpop.f32.mrf.mxu0
          %v726 = vpop.f32.mrf.mxu0
          %v727 = vpop.f32.mrf.mxu0
          %728 = vdwg.mxu0
          %v729 = vpack.c.bf16 %v724, %v724
          %vm730 = vcmask 60416
          %731 = vst.msk [vmem:[#allocation2] sm:$0xf] %vm730, %v729
          %v733 = vunpack.c.l.b16 %v729
          %v734 = vpack.c.b16 %v733, %v733
          %735 = vrot.lane.b32.xlu0 %v734, 120
          %v736 = vpop.permute.xlu0 %735
          %s738 = scalar_lea.vmem [#allocation2], 4
          %739 = vst.msk [vmem:[%s738] sm:$0xf] %vm730, %v736
          %740 = vrot.lane.b32.xlu0 %v734, 112
          %v741 = vpop.permute.xlu0 %740
          %s743 = scalar_lea.vmem [#allocation2], 8
          %744 = vst.msk [vmem:[%s743] sm:$0xf] %vm730, %v741
          %745 = vrot.lane.b32.xlu0 %v734, 104
          %v746 = vpop.permute.xlu0 %745
          %s748 = scalar_lea.vmem [#allocation2], 12
          %749 = vst.msk [vmem:[%s748] sm:$0xf] %vm730, %v746
          %vm750 = vcmask 7168
          %751 = vst.msk [vmem:[#allocation3] sm:$0xff] %vm750, -inf
          %752 = vst.msk [vmem:[#allocation3 + $0x8] sm:$0xff] %vm750, -inf
          %753 = vst.msk [vmem:[#allocation3 + $0x10] sm:$0xff] %vm750, -inf
          %754 = vst.msk [vmem:[#allocation3 + $0x18] sm:$0xff] %vm750, -inf
          %755 = vst.msk [vmem:[#allocation4] sm:$0xff] %vm750, 0.0
          %756 = vst.msk [vmem:[#allocation4 + $0x8] sm:$0xff] %vm750, 0.0
          %757 = vst.msk [vmem:[#allocation4 + $0x10] sm:$0xff] %vm750, 0.0
          %758 = vst.msk [vmem:[#allocation4 + $0x18] sm:$0xff] %vm750, 0.0
          %vm759 = vcmask 64512
          %760 = vst.msk [vmem:[#allocation5] sm:$0xff] %vm759, 0.0
          %761 = vst.msk [vmem:[#allocation5 + $0x8] sm:$0xff] %vm759, 0.0
          %762 = vst.msk [vmem:[#allocation5 + $0x10] sm:$0xff] %vm759, 0.0
          %763 = vst.msk [vmem:[#allocation5 + $0x18] sm:$0xff] %vm759, 0.0
        $region100: #{tpu_custom_call.1} parent=75 // pred_fallthru
          _
        %v764 = vld [vmem:[%s661] sm:$0xff]
        %v765 = vpack.c.bf16 %v764, %v764
        %v766 = vld [vmem:[#allocation12] sm:$0xf]
        %v767 = vld [vmem:[#allocation12 + $0x4] sm:$0xf]
        %v768 = vld [vmem:[#allocation12 + $0x8] sm:$0xf]
        %v769 = vld [vmem:[#allocation12 + $0xc] sm:$0xf]
        %v774 = vunpack.c.l.b16 %v766
        %v775 = vunpack.c.l.b16 %v767
        %v776 = vunpack.c.l.b16 %v768
        %v777 = vunpack.c.l.b16 %v769
        %v778 = vpack.c.b16 %v775, %v774
        %v779 = vpack.c.b16 %v777, %v776
        %vm782 = vcmask 261120
        %v784 = vsel %vm782, %v765, 0
        %786 = vmatprep.subr.bf16.mxu0 0
        %787 = vmatpush1.bf16.msra.mxu0 0
        %788 = vmatprep.subr.bf16.mxu0 0
        %789 = vmatpush1.bf16.msra.mxu0 0
        %790 = vmatprep.subr.bf16.mxu0 0
        %791 = vmatpush1.bf16.msra.mxu0 0
        %792 = vmatprep.subr.bf16.mxu0 0
        %793 = vmatpush1.bf16.msra.mxu0 0
        %794 = vmatprep.subr.bf16.mxu0 0
        %795 = vmatpush1.bf16.msra.mxu0 0
        %796 = vmatprep.subr.bf16.mxu0 0
        %797 = vmatpush1.bf16.msra.mxu0 0
        %798 = vmatprep.subr.bf16.mxu0 0
        %799 = vmatpush1.bf16.msra.mxu0 %v779
        %800 = vmatprep.subr.bf16.mxu0 0
        %801 = vmatpush1.bf16.msra.mxu0 %v778
        %802 = vmatprep.subr.bf16.mxu0 0
        %803 = vmatpush2.bf16.msra.mxu0 0
        %804 = vmatprep.subr.bf16.mxu0 0
        %805 = vmatpush2.bf16.msra.mxu0 0
        %806 = vmatprep.subr.bf16.mxu0 0
        %807 = vmatpush2.bf16.msra.mxu0 0
        %808 = vmatprep.subr.bf16.mxu0 0
        %809 = vmatpush2.bf16.msra.mxu0 0
        %810 = vmatprep.subr.bf16.mxu0 0
        %811 = vmatpush2.bf16.msra.mxu0 0
        %812 = vmatprep.subr.bf16.mxu0 0
        %813 = vmatpush2.bf16.msra.mxu0 0
        %814 = vmatprep.subr.bf16.mxu0 0
        %815 = vmatpush2.bf16.msra.mxu0 0
        %816 = vmatprep.subr.bf16.mxu0 0
        %817 = vmatpush2.bf16.msra.mxu0 0
        %818 = vmatprep.mubr.bf16.mxu0 0
        %819 = vmatmul.mubr.bf16.gmra.mxu0 %v784
        %v820 = vpop.f32.mrf.mxu0
        %v821 = vadd.f32 0.0, %v820
        %v822 = vpop.f32.mrf.mxu0
        %v823 = vpop.f32.mrf.mxu0
        %v824 = vpop.f32.mrf.mxu0
        %825 = vdwg.mxu0
        %v826 = vld [vmem:[%s566] sm:$0xf]
        %v827 = vunpack.c.l.bf16 %v826
        %v828 = vpack.c.bf16 %v821, %v821
        %v829 = vld [vmem:[#allocation2] sm:$0xf]
        %vm830 = vcmask 64512
        %v832 = vsel %vm830, %v829, 0
        %v835 = vsel %vm830, %v828, 0
        %837 = vmatprep.subr.bf16.mxu0 0
        %838 = vmatpush1.bf16.xpose.msra.mxu0 0
        %839 = vmatprep.subr.bf16.mxu0 0
        %840 = vmatpush1.bf16.xpose.msra.mxu0 0
        %841 = vmatprep.subr.bf16.mxu0 0
        %842 = vmatpush1.bf16.xpose.msra.mxu0 0
        %843 = vmatprep.subr.bf16.mxu0 0
        %844 = vmatpush1.bf16.xpose.msra.mxu0 0
        %845 = vmatprep.subr.bf16.mxu0 0
        %846 = vmatpush1.bf16.xpose.msra.mxu0 0
        %847 = vmatprep.subr.bf16.mxu0 0
        %848 = vmatpush1.bf16.xpose.msra.mxu0 0
        %849 = vmatprep.subr.bf16.mxu0 0
        %850 = vmatpush1.bf16.xpose.msra.mxu0 0
        %851 = vmatprep.subr.bf16.mxu0 0
        %852 = vmatpush1.bf16.xpose.msra.mxu0 %v835
        %853 = vmatprep.subr.bf16.mxu0 0
        %854 = vmatpush2.bf16.xpose.msra.mxu0 0
        %855 = vmatprep.subr.bf16.mxu0 0
        %856 = vmatpush2.bf16.xpose.msra.mxu0 0
        %857 = vmatprep.subr.bf16.mxu0 0
        %858 = vmatpush2.bf16.xpose.msra.mxu0 0
        %859 = vmatprep.subr.bf16.mxu0 0
        %860 = vmatpush2.bf16.xpose.msra.mxu0 0
        %861 = vmatprep.subr.bf16.mxu0 0
        %862 = vmatpush2.bf16.xpose.msra.mxu0 0
        %863 = vmatprep.subr.bf16.mxu0 0
        %864 = vmatpush2.bf16.xpose.msra.mxu0 0
        %865 = vmatprep.subr.bf16.mxu0 0
        %866 = vmatpush2.bf16.xpose.msra.mxu0 0
        %867 = vmatprep.subr.bf16.mxu0 0
        %868 = vmatpush2.bf16.xpose.msra.mxu0 0
        %869 = vmatprep.mubr.bf16.mxu0 0
        %870 = vmatmul.mubr.bf16.gmra.mxu0 %v832
        %v871 = vpop.f32.mrf.mxu0
        %v872 = vadd.f32 %v827, %v871
        %v873 = vpop.f32.mrf.mxu0
        %v874 = vpop.f32.mrf.mxu0
        %v875 = vpop.f32.mrf.mxu0
        %876 = vdwg.mxu0
        %v877 = vld [vmem:[#allocation3] sm:$0xff]
        %v878 = vsel %vm830, %v872, -inf
        %879 = vmax.xlane.f32.xlu0 %v878
        %v880 = vpop.xlane.xlu0 %879
        %v881 = vmax.f32 %v877, %v880
        %v882 = vsub.f32 %v877, %v881
        %v883 = vmul.f32 %v882, 1.442695
        %v884 = vpow.pop %v883
        %886 = vset.pattern.permute.xlu0 0
        %887 = vperm.xlu0 %886, %v881
        %v888 = vpop.permute.xlu0 %887
        %v890 = vsub.f32 %v872, %v888
        %v891 = vmul.f32 %v890, 1.442695
        %v892 = vpow.pop %v891
        %v893 = vld [vmem:[#allocation4] sm:$0xff]
        %v894 = vmul.f32 %v884, %v893
        %v895 = vsel %vm830, %v892, 0.0
        %896 = vadd.xlane.f32.xlu0 %v895
        %v897 = vpop.xlane.xlu0 %896
        %v898 = vadd.f32 %v894, %v897
        %vm899 = vcmask 7168
        %900 = vst.msk [vmem:[#allocation4] sm:$0xff] %vm899, %v898
        %v901 = vld [vmem:[#allocation5] sm:$0xff]
        %903 = vset.pattern.permute.xlu0 0
        %904 = vperm.xlu0 %903, %v884
        %v905 = vpop.permute.xlu0 %904
        %v907 = vmul.f32 %v905, %v901
        %v908 = vpack.c.bf16 %v892, %v892
        %910 = vrot.lane.b32.xlu0 %v828, 96
        %v911 = vpop.permute.xlu0 %910
        %v913 = vsel %vm830, %v908, 0
        %vm915 = vcmask 1043456
        %v917 = vsel %vm915, %v911, 0
        %919 = vmatprep.subr.bf16.mxu0 0
        %920 = vmatpush1.bf16.msra.mxu0 0
        %921 = vmatprep.subr.bf16.mxu0 0
        %922 = vmatpush1.bf16.msra.mxu0 0
        %923 = vmatprep.subr.bf16.mxu0 0
        %924 = vmatpush1.bf16.msra.mxu0 0
        %925 = vmatprep.subr.bf16.mxu0 0
        %926 = vmatpush1.bf16.msra.mxu0 0
        %927 = vmatprep.subr.bf16.mxu0 0
        %928 = vmatpush1.bf16.msra.mxu0 0
        %929 = vmatprep.subr.bf16.mxu0 0
        %930 = vmatpush1.bf16.msra.mxu0 0
        %931 = vmatprep.subr.bf16.mxu0 0
        %932 = vmatpush1.bf16.msra.mxu0 0
        %933 = vmatprep.subr.bf16.mxu0 0
        %934 = vmatpush1.bf16.msra.mxu0 %v917
        %935 = vmatprep.subr.bf16.mxu0 0
        %936 = vmatpush2.bf16.msra.mxu0 0
        %937 = vmatprep.subr.bf16.mxu0 0
        %938 = vmatpush2.bf16.msra.mxu0 0
        %939 = vmatprep.subr.bf16.mxu0 0
        %940 = vmatpush2.bf16.msra.mxu0 0
        %941 = vmatprep.subr.bf16.mxu0 0
        %942 = vmatpush2.bf16.msra.mxu0 0
        %943 = vmatprep.subr.bf16.mxu0 0
        %944 = vmatpush2.bf16.msra.mxu0 0
        %945 = vmatprep.subr.bf16.mxu0 0
        %946 = vmatpush2.bf16.msra.mxu0 0
        %947 = vmatprep.subr.bf16.mxu0 0
        %948 = vmatpush2.bf16.msra.mxu0 0
        %949 = vmatprep.subr.bf16.mxu0 0
        %950 = vmatpush2.bf16.msra.mxu0 0
        %951 = vmatprep.mubr.bf16.mxu0 0
        %952 = vmatmul.mubr.bf16.gmra.mxu0 %v913
        %v953 = vpop.f32.mrf.mxu0
        %v954 = vadd.f32 0.0, %v953
        %v955 = vpop.f32.mrf.mxu0
        %v956 = vpop.f32.mrf.mxu0
        %v957 = vpop.f32.mrf.mxu0
        %958 = vdwg.mxu0
        %v959 = vadd.f32 %v907, %v954
        %960 = vst.msk [vmem:[#allocation5] sm:$0xff] %vm830, %v959
        %961 = vst.msk [vmem:[#allocation3] sm:$0xff] %vm899, %v881
        %s962 = smul.u32 %s45, 8
        %s963 = scalar_lea.vmem [#allocation7], %s962
        %964 = vst.msk [vmem:[%s963] sm:$0xff] %vm830, %v892
        %s965 = scalar_lea.vmem [#allocation8], %s962
        %966 = vst.msk [vmem:[%s965] sm:$0xff] %vm899, %v881
        %s967 = scalar_lea.vmem [#allocation2], 4
        %v968 = vld [vmem:[%s967] sm:$0xf]
        %969 = vrot.lane.b32.xlu0 %v828, 120
        %v970 = vpop.permute.xlu0 %969
        %v972 = vsel %vm830, %v968, 0
        %v975 = vsel %vm830, %v970, 0
        %977 = vmatprep.subr.bf16.mxu0 0
        %978 = vmatpush1.bf16.xpose.msra.mxu0 0
        %979 = vmatprep.subr.bf16.mxu0 0
        %980 = vmatpush1.bf16.xpose.msra.mxu0 0
        %981 = vmatprep.subr.bf16.mxu0 0
        %982 = vmatpush1.bf16.xpose.msra.mxu0 0
        %983 = vmatprep.subr.bf16.mxu0 0
        %984 = vmatpush1.bf16.xpose.msra.mxu0 0
        %985 = vmatprep.subr.bf16.mxu0 0
        %986 = vmatpush1.bf16.xpose.msra.mxu0 0
        %987 = vmatprep.subr.bf16.mxu0 0
        %988 = vmatpush1.bf16.xpose.msra.mxu0 0
        %989 = vmatprep.subr.bf16.mxu0 0
        %990 = vmatpush1.bf16.xpose.msra.mxu0 0
        %991 = vmatprep.subr.bf16.mxu0 0
        %992 = vmatpush1.bf16.xpose.msra.mxu0 %v975
        %993 = vmatprep.subr.bf16.mxu0 0
        %994 = vmatpush2.bf16.xpose.msra.mxu0 0
        %995 = vmatprep.subr.bf16.mxu0 0
        %996 = vmatpush2.bf16.xpose.msra.mxu0 0
        %997 = vmatprep.subr.bf16.mxu0 0
        %998 = vmatpush2.bf16.xpose.msra.mxu0 0
        %999 = vmatprep.subr.bf16.mxu0 0
        %1000 = vmatpush2.bf16.xpose.msra.mxu0 0
        %1001 = vmatprep.subr.bf16.mxu0 0
        %1002 = vmatpush2.bf16.xpose.msra.mxu0 0
        %1003 = vmatprep.subr.bf16.mxu0 0
        %1004 = vmatpush2.bf16.xpose.msra.mxu0 0
        %1005 = vmatprep.subr.bf16.mxu0 0
        %1006 = vmatpush2.bf16.xpose.msra.mxu0 0
        %1007 = vmatprep.subr.bf16.mxu0 0
        %1008 = vmatpush2.bf16.xpose.msra.mxu0 0
        %1009 = vmatprep.mubr.bf16.mxu0 0
        %1010 = vmatmul.mubr.bf16.gmra.mxu0 %v972
        %v1011 = vpop.f32.mrf.mxu0
        %v1012 = vadd.f32 %v827, %v1011
        %v1013 = vpop.f32.mrf.mxu0
        %v1014 = vpop.f32.mrf.mxu0
        %v1015 = vpop.f32.mrf.mxu0
        %1016 = vdwg.mxu0
        %s1017 = scalar_lea.vmem [#allocation3], 8
        %v1018 = vld [vmem:[%s1017] sm:$0xff]
        %v1019 = vsel %vm830, %v1012, -inf
        %1020 = vmax.xlane.f32.xlu0 %v1019
        %v1021 = vpop.xlane.xlu0 %1020
        %v1022 = vmax.f32 %v1018, %v1021
        %v1023 = vsub.f32 %v1018, %v1022
        %v1024 = vmul.f32 %v1023, 1.442695
        %v1025 = vpow.pop %v1024
        %1027 = vset.pattern.permute.xlu0 0
        %1028 = vperm.xlu0 %1027, %v1022
        %v1029 = vpop.permute.xlu0 %1028
        %v1031 = vsub.f32 %v1012, %v1029
        %v1032 = vmul.f32 %v1031, 1.442695
        %v1033 = vpow.pop %v1032
        %s1034 = scalar_lea.vmem [#allocation4], 8
        %v1035 = vld [vmem:[%s1034] sm:$0xff]
        %v1036 = vmul.f32 %v1025, %v1035
        %v1037 = vsel %vm830, %v1033, 0.0
        %1038 = vadd.xlane.f32.xlu0 %v1037
        %v1039 = vpop.xlane.xlu0 %1038
        %v1040 = vadd.f32 %v1036, %v1039
        %1041 = vst.msk [vmem:[%s1034] sm:$0xff] %vm899, %v1040
        %s1042 = scalar_lea.vmem [#allocation5], 8
        %v1043 = vld [vmem:[%s1042] sm:$0xff]
        %1045 = vset.pattern.permute.xlu0 0
        %1046 = vperm.xlu0 %1045, %v1025
        %v1047 = vpop.permute.xlu0 %1046
        %v1049 = vmul.f32 %v1047, %v1043
        %v1050 = vpack.c.bf16 %v1033, %v1033
        %1051 = vrot.lane.b32.xlu0 %v828, 88
        %v1052 = vpop.permute.xlu0 %1051
        %v1054 = vsel %vm830, %v1050, 0
        %v1057 = vsel %vm915, %v1052, 0
        %1059 = vmatprep.subr.bf16.mxu0 0
        %1060 = vmatpush1.bf16.msra.mxu0 0
        %1061 = vmatprep.subr.bf16.mxu0 0
        %1062 = vmatpush1.bf16.msra.mxu0 0
        %1063 = vmatprep.subr.bf16.mxu0 0
        %1064 = vmatpush1.bf16.msra.mxu0 0
        %1065 = vmatprep.subr.bf16.mxu0 0
        %1066 = vmatpush1.bf16.msra.mxu0 0
        %1067 = vmatprep.subr.bf16.mxu0 0
        %1068 = vmatpush1.bf16.msra.mxu0 0
        %1069 = vmatprep.subr.bf16.mxu0 0
        %1070 = vmatpush1.bf16.msra.mxu0 0
        %1071 = vmatprep.subr.bf16.mxu0 0
        %1072 = vmatpush1.bf16.msra.mxu0 0
        %1073 = vmatprep.subr.bf16.mxu0 0
        %1074 = vmatpush1.bf16.msra.mxu0 %v1057
        %1075 = vmatprep.subr.bf16.mxu0 0
        %1076 = vmatpush2.bf16.msra.mxu0 0
        %1077 = vmatprep.subr.bf16.mxu0 0
        %1078 = vmatpush2.bf16.msra.mxu0 0
        %1079 = vmatprep.subr.bf16.mxu0 0
        %1080 = vmatpush2.bf16.msra.mxu0 0
        %1081 = vmatprep.subr.bf16.mxu0 0
        %1082 = vmatpush2.bf16.msra.mxu0 0
        %1083 = vmatprep.subr.bf16.mxu0 0
        %1084 = vmatpush2.bf16.msra.mxu0 0
        %1085 = vmatprep.subr.bf16.mxu0 0
        %1086 = vmatpush2.bf16.msra.mxu0 0
        %1087 = vmatprep.subr.bf16.mxu0 0
        %1088 = vmatpush2.bf16.msra.mxu0 0
        %1089 = vmatprep.subr.bf16.mxu0 0
        %1090 = vmatpush2.bf16.msra.mxu0 0
        %1091 = vmatprep.mubr.bf16.mxu0 0
        %1092 = vmatmul.mubr.bf16.gmra.mxu0 %v1054
        %v1093 = vpop.f32.mrf.mxu0
        %v1094 = vadd.f32 0.0, %v1093
        %v1095 = vpop.f32.mrf.mxu0
        %v1096 = vpop.f32.mrf.mxu0
        %v1097 = vpop.f32.mrf.mxu0
        %1098 = vdwg.mxu0
        %v1099 = vadd.f32 %v1049, %v1094
        %1100 = vst.msk [vmem:[%s1042] sm:$0xff] %vm830, %v1099
        %1101 = vst.msk [vmem:[%s1017] sm:$0xff] %vm899, %v1022
        %s1102 = sadd.s32 %s962, 8
        %s1103 = scalar_lea.vmem [#allocation7], %s1102
        %1104 = vst.msk [vmem:[%s1103] sm:$0xff] %vm830, %v1033
        %s1105 = scalar_lea.vmem [#allocation8], %s1102
        %1106 = vst.msk [vmem:[%s1105] sm:$0xff] %vm899, %v1022
        %s1107 = scalar_lea.vmem [#allocation2], 8
        %v1108 = vld [vmem:[%s1107] sm:$0xf]
        %1109 = vrot.lane.b32.xlu0 %v828, 112
        %v1110 = vpop.permute.xlu0 %1109
        %v1112 = vsel %vm830, %v1108, 0
        %v1115 = vsel %vm830, %v1110, 0
        %1117 = vmatprep.subr.bf16.mxu0 0
        %1118 = vmatpush1.bf16.xpose.msra.mxu0 0
        %1119 = vmatprep.subr.bf16.mxu0 0
        %1120 = vmatpush1.bf16.xpose.msra.mxu0 0
        %1121 = vmatprep.subr.bf16.mxu0 0
        %1122 = vmatpush1.bf16.xpose.msra.mxu0 0
        %1123 = vmatprep.subr.bf16.mxu0 0
        %1124 = vmatpush1.bf16.xpose.msra.mxu0 0
        %1125 = vmatprep.subr.bf16.mxu0 0
        %1126 = vmatpush1.bf16.xpose.msra.mxu0 0
        %1127 = vmatprep.subr.bf16.mxu0 0
        %1128 = vmatpush1.bf16.xpose.msra.mxu0 0
        %1129 = vmatprep.subr.bf16.mxu0 0
        %1130 = vmatpush1.bf16.xpose.msra.mxu0 0
        %1131 = vmatprep.subr.bf16.mxu0 0
        %1132 = vmatpush1.bf16.xpose.msra.mxu0 %v1115
        %1133 = vmatprep.subr.bf16.mxu0 0
        %1134 = vmatpush2.bf16.xpose.msra.mxu0 0
        %1135 = vmatprep.subr.bf16.mxu0 0
        %1136 = vmatpush2.bf16.xpose.msra.mxu0 0
        %1137 = vmatprep.subr.bf16.mxu0 0
        %1138 = vmatpush2.bf16.xpose.msra.mxu0 0
        %1139 = vmatprep.subr.bf16.mxu0 0
        %1140 = vmatpush2.bf16.xpose.msra.mxu0 0
        %1141 = vmatprep.subr.bf16.mxu0 0
        %1142 = vmatpush2.bf16.xpose.msra.mxu0 0
        %1143 = vmatprep.subr.bf16.mxu0 0
        %1144 = vmatpush2.bf16.xpose.msra.mxu0 0
        %1145 = vmatprep.subr.bf16.mxu0 0
        %1146 = vmatpush2.bf16.xpose.msra.mxu0 0
        %1147 = vmatprep.subr.bf16.mxu0 0
        %1148 = vmatpush2.bf16.xpose.msra.mxu0 0
        %1149 = vmatprep.mubr.bf16.mxu0 0
        %1150 = vmatmul.mubr.bf16.gmra.mxu0 %v1112
        %v1151 = vpop.f32.mrf.mxu0
        %v1152 = vadd.f32 %v827, %v1151
        %v1153 = vpop.f32.mrf.mxu0
        %v1154 = vpop.f32.mrf.mxu0
        %v1155 = vpop.f32.mrf.mxu0
        %1156 = vdwg.mxu0
        %s1157 = scalar_lea.vmem [#allocation3], 16
        %v1158 = vld [vmem:[%s1157] sm:$0xff]
        %v1159 = vsel %vm830, %v1152, -inf
        %1160 = vmax.xlane.f32.xlu0 %v1159
        %v1161 = vpop.xlane.xlu0 %1160
        %v1162 = vmax.f32 %v1158, %v1161
        %v1163 = vsub.f32 %v1158, %v1162
        %v1164 = vmul.f32 %v1163, 1.442695
        %v1165 = vpow.pop %v1164
        %1167 = vset.pattern.permute.xlu0 0
        %1168 = vperm.xlu0 %1167, %v1162
        %v1169 = vpop.permute.xlu0 %1168
        %v1171 = vsub.f32 %v1152, %v1169
        %v1172 = vmul.f32 %v1171, 1.442695
        %v1173 = vpow.pop %v1172
        %s1174 = scalar_lea.vmem [#allocation4], 16
        %v1175 = vld [vmem:[%s1174] sm:$0xff]
        %v1176 = vmul.f32 %v1165, %v1175
        %v1177 = vsel %vm830, %v1173, 0.0
        %1178 = vadd.xlane.f32.xlu0 %v1177
        %v1179 = vpop.xlane.xlu0 %1178
        %v1180 = vadd.f32 %v1176, %v1179
        %1181 = vst.msk [vmem:[%s1174] sm:$0xff] %vm899, %v1180
        %s1182 = scalar_lea.vmem [#allocation5], 16
        %v1183 = vld [vmem:[%s1182] sm:$0xff]
        %1185 = vset.pattern.permute.xlu0 0
        %1186 = vperm.xlu0 %1185, %v1165
        %v1187 = vpop.permute.xlu0 %1186
        %v1189 = vmul.f32 %v1187, %v1183
        %v1190 = vpack.c.bf16 %v1173, %v1173
        %1191 = vrot.lane.b32.xlu0 %v828, 80
        %v1192 = vpop.permute.xlu0 %1191
        %v1194 = vsel %vm830, %v1190, 0
        %v1197 = vsel %vm915, %v1192, 0
        %1199 = vmatprep.subr.bf16.mxu0 0
        %1200 = vmatpush1.bf16.msra.mxu0 0
        %1201 = vmatprep.subr.bf16.mxu0 0
        %1202 = vmatpush1.bf16.msra.mxu0 0
        %1203 = vmatprep.subr.bf16.mxu0 0
        %1204 = vmatpush1.bf16.msra.mxu0 0
        %1205 = vmatprep.subr.bf16.mxu0 0
        %1206 = vmatpush1.bf16.msra.mxu0 0
        %1207 = vmatprep.subr.bf16.mxu0 0
        %1208 = vmatpush1.bf16.msra.mxu0 0
        %1209 = vmatprep.subr.bf16.mxu0 0
        %1210 = vmatpush1.bf16.msra.mxu0 0
        %1211 = vmatprep.subr.bf16.mxu0 0
        %1212 = vmatpush1.bf16.msra.mxu0 0
        %1213 = vmatprep.subr.bf16.mxu0 0
        %1214 = vmatpush1.bf16.msra.mxu0 %v1197
        %1215 = vmatprep.subr.bf16.mxu0 0
        %1216 = vmatpush2.bf16.msra.mxu0 0
        %1217 = vmatprep.subr.bf16.mxu0 0
        %1218 = vmatpush2.bf16.msra.mxu0 0
        %1219 = vmatprep.subr.bf16.mxu0 0
        %1220 = vmatpush2.bf16.msra.mxu0 0
        %1221 = vmatprep.subr.bf16.mxu0 0
        %1222 = vmatpush2.bf16.msra.mxu0 0
        %1223 = vmatprep.subr.bf16.mxu0 0
        %1224 = vmatpush2.bf16.msra.mxu0 0
        %1225 = vmatprep.subr.bf16.mxu0 0
        %1226 = vmatpush2.bf16.msra.mxu0 0
        %1227 = vmatprep.subr.bf16.mxu0 0
        %1228 = vmatpush2.bf16.msra.mxu0 0
        %1229 = vmatprep.subr.bf16.mxu0 0
        %1230 = vmatpush2.bf16.msra.mxu0 0
        %1231 = vmatprep.mubr.bf16.mxu0 0
        %1232 = vmatmul.mubr.bf16.gmra.mxu0 %v1194
        %v1233 = vpop.f32.mrf.mxu0
        %v1234 = vadd.f32 0.0, %v1233
        %v1235 = vpop.f32.mrf.mxu0
        %v1236 = vpop.f32.mrf.mxu0
        %v1237 = vpop.f32.mrf.mxu0
        %1238 = vdwg.mxu0
        %v1239 = vadd.f32 %v1189, %v1234
        %1240 = vst.msk [vmem:[%s1182] sm:$0xff] %vm830, %v1239
        %1241 = vst.msk [vmem:[%s1157] sm:$0xff] %vm899, %v1162
        %s1242 = sadd.s32 %s962, 16
        %s1243 = scalar_lea.vmem [#allocation7], %s1242
        %1244 = vst.msk [vmem:[%s1243] sm:$0xff] %vm830, %v1173
        %s1245 = scalar_lea.vmem [#allocation8], %s1242
        %1246 = vst.msk [vmem:[%s1245] sm:$0xff] %vm899, %v1162
        %s1247 = scalar_lea.vmem [#allocation2], 12
        %v1248 = vld [vmem:[%s1247] sm:$0xf]
        %1249 = vrot.lane.b32.xlu0 %v828, 104
        %v1250 = vpop.permute.xlu0 %1249
        %v1252 = vsel %vm830, %v1248, 0
        %v1255 = vsel %vm830, %v1250, 0
        %1257 = vmatprep.subr.bf16.mxu0 0
        %1258 = vmatpush1.bf16.xpose.msra.mxu0 0
        %1259 = vmatprep.subr.bf16.mxu0 0
        %1260 = vmatpush1.bf16.xpose.msra.mxu0 0
        %1261 = vmatprep.subr.bf16.mxu0 0
        %1262 = vmatpush1.bf16.xpose.msra.mxu0 0
        %1263 = vmatprep.subr.bf16.mxu0 0
        %1264 = vmatpush1.bf16.xpose.msra.mxu0 0
        %1265 = vmatprep.subr.bf16.mxu0 0
        %1266 = vmatpush1.bf16.xpose.msra.mxu0 0
        %1267 = vmatprep.subr.bf16.mxu0 0
        %1268 = vmatpush1.bf16.xpose.msra.mxu0 0
        %1269 = vmatprep.subr.bf16.mxu0 0
        %1270 = vmatpush1.bf16.xpose.msra.mxu0 0
        %1271 = vmatprep.subr.bf16.mxu0 0
        %1272 = vmatpush1.bf16.xpose.msra.mxu0 %v1255
        %1273 = vmatprep.subr.bf16.mxu0 0
        %1274 = vmatpush2.bf16.xpose.msra.mxu0 0
        %1275 = vmatprep.subr.bf16.mxu0 0
        %1276 = vmatpush2.bf16.xpose.msra.mxu0 0
        %1277 = vmatprep.subr.bf16.mxu0 0
        %1278 = vmatpush2.bf16.xpose.msra.mxu0 0
        %1279 = vmatprep.subr.bf16.mxu0 0
        %1280 = vmatpush2.bf16.xpose.msra.mxu0 0
        %1281 = vmatprep.subr.bf16.mxu0 0
        %1282 = vmatpush2.bf16.xpose.msra.mxu0 0
        %1283 = vmatprep.subr.bf16.mxu0 0
        %1284 = vmatpush2.bf16.xpose.msra.mxu0 0
        %1285 = vmatprep.subr.bf16.mxu0 0
        %1286 = vmatpush2.bf16.xpose.msra.mxu0 0
        %1287 = vmatprep.subr.bf16.mxu0 0
        %1288 = vmatpush2.bf16.xpose.msra.mxu0 0
        %1289 = vmatprep.mubr.bf16.mxu0 0
        %1290 = vmatmul.mubr.bf16.gmra.mxu0 %v1252
        %v1291 = vpop.f32.mrf.mxu0
        %v1292 = vadd.f32 %v827, %v1291
        %v1293 = vpop.f32.mrf.mxu0
        %v1294 = vpop.f32.mrf.mxu0
        %v1295 = vpop.f32.mrf.mxu0
        %1296 = vdwg.mxu0
        %s1297 = scalar_lea.vmem [#allocation3], 24
        %v1298 = vld [vmem:[%s1297] sm:$0xff]
        %v1299 = vsel %vm830, %v1292, -inf
        %1300 = vmax.xlane.f32.xlu0 %v1299
        %v1301 = vpop.xlane.xlu0 %1300
        %v1302 = vmax.f32 %v1298, %v1301
        %v1303 = vsub.f32 %v1298, %v1302
        %v1304 = vmul.f32 %v1303, 1.442695
        %v1305 = vpow.pop %v1304
        %1307 = vset.pattern.permute.xlu0 0
        %1308 = vperm.xlu0 %1307, %v1302
        %v1309 = vpop.permute.xlu0 %1308
        %v1311 = vsub.f32 %v1292, %v1309
        %v1312 = vmul.f32 %v1311, 1.442695
        %v1313 = vpow.pop %v1312
        %s1314 = scalar_lea.vmem [#allocation4], 24
        %v1315 = vld [vmem:[%s1314] sm:$0xff]
        %v1316 = vmul.f32 %v1305, %v1315
        %v1317 = vsel %vm830, %v1313, 0.0
        %1318 = vadd.xlane.f32.xlu0 %v1317
        %v1319 = vpop.xlane.xlu0 %1318
        %v1320 = vadd.f32 %v1316, %v1319
        %1321 = vst.msk [vmem:[%s1314] sm:$0xff] %vm899, %v1320
        %s1322 = scalar_lea.vmem [#allocation5], 24
        %v1323 = vld [vmem:[%s1322] sm:$0xff]
        %1325 = vset.pattern.permute.xlu0 0
        %1326 = vperm.xlu0 %1325, %v1305
        %v1327 = vpop.permute.xlu0 %1326
        %v1329 = vmul.f32 %v1327, %v1323
        %v1330 = vpack.c.bf16 %v1313, %v1313
        %1331 = vrot.lane.b32.xlu0 %v828, 72
        %v1332 = vpop.permute.xlu0 %1331
        %v1334 = vsel %vm830, %v1330, 0
        %v1337 = vsel %vm915, %v1332, 0
        %1339 = vmatprep.subr.bf16.mxu0 0
        %1340 = vmatpush1.bf16.msra.mxu0 0
        %1341 = vmatprep.subr.bf16.mxu0 0
        %1342 = vmatpush1.bf16.msra.mxu0 0
        %1343 = vmatprep.subr.bf16.mxu0 0
        %1344 = vmatpush1.bf16.msra.mxu0 0
        %1345 = vmatprep.subr.bf16.mxu0 0
        %1346 = vmatpush1.bf16.msra.mxu0 0
        %1347 = vmatprep.subr.bf16.mxu0 0
        %1348 = vmatpush1.bf16.msra.mxu0 0
        %1349 = vmatprep.subr.bf16.mxu0 0
        %1350 = vmatpush1.bf16.msra.mxu0 0
        %1351 = vmatprep.subr.bf16.mxu0 0
        %1352 = vmatpush1.bf16.msra.mxu0 0
        %1353 = vmatprep.subr.bf16.mxu0 0
        %1354 = vmatpush1.bf16.msra.mxu0 %v1337
        %1355 = vmatprep.subr.bf16.mxu0 0
        %1356 = vmatpush2.bf16.msra.mxu0 0
        %1357 = vmatprep.subr.bf16.mxu0 0
        %1358 = vmatpush2.bf16.msra.mxu0 0
        %1359 = vmatprep.subr.bf16.mxu0 0
        %1360 = vmatpush2.bf16.msra.mxu0 0
        %1361 = vmatprep.subr.bf16.mxu0 0
        %1362 = vmatpush2.bf16.msra.mxu0 0
        %1363 = vmatprep.subr.bf16.mxu0 0
        %1364 = vmatpush2.bf16.msra.mxu0 0
        %1365 = vmatprep.subr.bf16.mxu0 0
        %1366 = vmatpush2.bf16.msra.mxu0 0
        %1367 = vmatprep.subr.bf16.mxu0 0
        %1368 = vmatpush2.bf16.msra.mxu0 0
        %1369 = vmatprep.subr.bf16.mxu0 0
        %1370 = vmatpush2.bf16.msra.mxu0 0
        %1371 = vmatprep.mubr.bf16.mxu0 0
        %1372 = vmatmul.mubr.bf16.gmra.mxu0 %v1334
        %v1373 = vpop.f32.mrf.mxu0
        %v1374 = vadd.f32 0.0, %v1373
        %v1375 = vpop.f32.mrf.mxu0
        %v1376 = vpop.f32.mrf.mxu0
        %v1377 = vpop.f32.mrf.mxu0
        %1378 = vdwg.mxu0
        %v1379 = vadd.f32 %v1329, %v1374
        %1380 = vst.msk [vmem:[%s1322] sm:$0xff] %vm830, %v1379
        %1381 = vst.msk [vmem:[%s1297] sm:$0xff] %vm899, %v1302
        %s1382 = sadd.s32 %s962, 24
        %s1383 = scalar_lea.vmem [#allocation7], %s1382
        %1384 = vst.msk [vmem:[%s1383] sm:$0xff] %vm830, %v1313
        %s1385 = scalar_lea.vmem [#allocation8], %s1382
        %1386 = vst.msk [vmem:[%s1385] sm:$0xff] %vm899, %v1302
        // Predicated region
        $region101: #{tpu_custom_call.1} parent=75 // pred_check
          %p1387 = pneg %p663
        $region102: #{tpu_custom_call.1} parent=75 // pred_check_branch
          %1389 = sbr.rel (%p1387) target = $region104
        $region103: #{tpu_custom_call.1} parent=75 // pred_region
          %v1390 = vld [vmem:[#allocation4] sm:$0xff]
          %v1391 = vrcp.pop %v1390
          %v1392 = vmul.f32 1.0, %v1391
          %v1393 = vld [vmem:[#allocation5] sm:$0xff]
          %1395 = vset.pattern.permute.xlu0 0
          %1396 = vperm.xlu0 %1395, %v1392
          %v1397 = vpop.permute.xlu0 %1396
          %v1399 = vmul.f32 %v1393, %v1397
          %v1400 = vpack.c.bf16 %v1399, %v1399
          %vm1401 = vcmask 60416
          %1402 = vst.msk [vmem:[#allocation6] sm:$0xf] %vm1401, %v1400
          %v1403 = vld [vmem:[#allocation3] sm:$0xff]
          %v1404 = vld [vmem:[#allocation8] sm:$0xff]
          %v1405 = vsub.f32 %v1404, %v1403
          %v1406 = vmul.f32 %v1405, 1.442695
          %v1407 = vpow.pop %v1406
          %v1408 = vmul.f32 %v1407, %v1392
          %v1409 = vld [vmem:[#allocation7] sm:$0xff]
          %1411 = vset.pattern.permute.xlu0 0
          %1412 = vperm.xlu0 %1411, %v1408
          %v1413 = vpop.permute.xlu0 %1412
          %v1415 = vmul.f32 %v1409, %v1413
          %1416 = vst.msk [vmem:[%s647] sm:$0xff] %vm830, %v1415
          %v1417 = vld [vmem:[%s1034] sm:$0xff]
          %v1418 = vrcp.pop %v1417
          %v1419 = vmul.f32 1.0, %v1418
          %v1420 = vld [vmem:[%s1042] sm:$0xff]
          %1422 = vset.pattern.permute.xlu0 0
          %1423 = vperm.xlu0 %1422, %v1419
          %v1424 = vpop.permute.xlu0 %1423
          %v1426 = vmul.f32 %v1420, %v1424
          %v1427 = vpack.c.bf16 %v1426, %v1426
          %v1429 = vunpack.c.l.b16 %v1427
          %v1430 = vpack.c.b16 %v1429, %v1429
          %1431 = vrot.lane.b32.xlu0 %v1430, 8
          %v1432 = vpop.permute.xlu0 %1431
          %vm1434 = vcmask 126016
          %1435 = vst.msk [vmem:[#allocation6] sm:$0xf] %vm1434, %v1432
          %v1436 = vld [vmem:[%s1017] sm:$0xff]
          %s1437 = scalar_lea.vmem [#allocation8], 8
          %v1438 = vld [vmem:[%s1437] sm:$0xff]
          %v1439 = vsub.f32 %v1438, %v1436
          %v1440 = vmul.f32 %v1439, 1.442695
          %v1441 = vpow.pop %v1440
          %v1442 = vmul.f32 %v1441, %v1419
          %s1443 = scalar_lea.vmem [#allocation7], 8
          %v1444 = vld [vmem:[%s1443] sm:$0xff]
          %1446 = vset.pattern.permute.xlu0 0
          %1447 = vperm.xlu0 %1446, %v1442
          %v1448 = vpop.permute.xlu0 %1447
          %v1450 = vmul.f32 %v1444, %v1448
          %s1451 = scalar_lea.vmem %s647, 8 [#allocation19]
          %1452 = vst.msk [vmem:[%s1451] sm:$0xff] %vm830, %v1450
          %v1453 = vld [vmem:[%s1174] sm:$0xff]
          %v1454 = vrcp.pop %v1453
          %v1455 = vmul.f32 1.0, %v1454
          %v1456 = vld [vmem:[%s1182] sm:$0xff]
          %1458 = vset.pattern.permute.xlu0 0
          %1459 = vperm.xlu0 %1458, %v1455
          %v1460 = vpop.permute.xlu0 %1459
          %v1462 = vmul.f32 %v1456, %v1460
          %v1463 = vpack.c.bf16 %v1462, %v1462
          %v1465 = vunpack.c.l.b16 %v1463
          %v1466 = vpack.c.b16 %v1465, %v1465
          %1467 = vrot.lane.b32.xlu0 %v1466, 16
          %v1468 = vpop.permute.xlu0 %1467
          %vm1470 = vcmask 191616
          %1471 = vst.msk [vmem:[#allocation6] sm:$0xf] %vm1470, %v1468
          %v1472 = vld [vmem:[%s1157] sm:$0xff]
          %s1473 = scalar_lea.vmem [#allocation8], 16
          %v1474 = vld [vmem:[%s1473] sm:$0xff]
          %v1475 = vsub.f32 %v1474, %v1472
          %v1476 = vmul.f32 %v1475, 1.442695
          %v1477 = vpow.pop %v1476
          %v1478 = vmul.f32 %v1477, %v1455
          %s1479 = scalar_lea.vmem [#allocation7], 16
          %v1480 = vld [vmem:[%s1479] sm:$0xff]
          %1482 = vset.pattern.permute.xlu0 0
          %1483 = vperm.xlu0 %1482, %v1478
          %v1484 = vpop.permute.xlu0 %1483
          %v1486 = vmul.f32 %v1480, %v1484
          %s1487 = scalar_lea.vmem %s647, 16 [#allocation19]
          %1488 = vst.msk [vmem:[%s1487] sm:$0xff] %vm830, %v1486
          %v1489 = vld [vmem:[%s1314] sm:$0xff]
          %v1490 = vrcp.pop %v1489
          %v1491 = vmul.f32 1.0, %v1490
          %v1492 = vld [vmem:[%s1322] sm:$0xff]
          %1494 = vset.pattern.permute.xlu0 0
          %1495 = vperm.xlu0 %1494, %v1491
          %v1496 = vpop.permute.xlu0 %1495
          %v1498 = vmul.f32 %v1492, %v1496
          %v1499 = vpack.c.bf16 %v1498, %v1498
          %v1501 = vunpack.c.l.b16 %v1499
          %v1502 = vpack.c.b16 %v1501, %v1501
          %1503 = vrot.lane.b32.xlu0 %v1502, 24
          %v1504 = vpop.permute.xlu0 %1503
          %vm1506 = vcmask 257216
          %1507 = vst.msk [vmem:[#allocation6] sm:$0xf] %vm1506, %v1504
          %v1508 = vld [vmem:[%s1297] sm:$0xff]
          %s1509 = scalar_lea.vmem [#allocation8], 24
          %v1510 = vld [vmem:[%s1509] sm:$0xff]
          %v1511 = vsub.f32 %v1510, %v1508
          %v1512 = vmul.f32 %v1511, 1.442695
          %v1513 = vpow.pop %v1512
          %v1514 = vmul.f32 %v1513, %v1491
          %s1515 = scalar_lea.vmem [#allocation7], 24
          %v1516 = vld [vmem:[%s1515] sm:$0xff]
          %1518 = vset.pattern.permute.xlu0 0
          %1519 = vperm.xlu0 %1518, %v1514
          %v1520 = vpop.permute.xlu0 %1519
          %v1522 = vmul.f32 %v1516, %v1520
          %s1523 = scalar_lea.vmem %s647, 24 [#allocation19]
          %1524 = vst.msk [vmem:[%s1523] sm:$0xff] %vm830, %v1522
          %v1525 = vld [vmem:[#allocation6] sm:$0xf]
          %v1526 = vld [vmem:[#allocation14] sm:$0xf]
          %v1527 = vld [vmem:[#allocation14 + $0x4] sm:$0xf]
          %v1528 = vld [vmem:[#allocation14 + $0x8] sm:$0xf]
          %v1529 = vld [vmem:[#allocation14 + $0xc] sm:$0xf]
          %v1530 = vld [vmem:[%s654] sm:$0xff]
          %v1535 = vunpack.c.l.b16 %v1526
          %v1536 = vunpack.c.l.b16 %v1527
          %v1537 = vunpack.c.l.b16 %v1528
          %v1538 = vunpack.c.l.b16 %v1529
          %v1539 = vpack.c.b16 %v1536, %v1535
          %v1540 = vpack.c.b16 %v1538, %v1537
          %v1544 = vsel %vm782, %v1525, 0
          %1546 = vmatprep.subr.bf16.mxu0 0
          %1547 = vmatpush1.bf16.msra.mxu0 0
          %1548 = vmatprep.subr.bf16.mxu0 0
          %1549 = vmatpush1.bf16.msra.mxu0 0
          %1550 = vmatprep.subr.bf16.mxu0 0
          %1551 = vmatpush1.bf16.msra.mxu0 0
          %1552 = vmatprep.subr.bf16.mxu0 0
          %1553 = vmatpush1.bf16.msra.mxu0 0
          %1554 = vmatprep.subr.bf16.mxu0 0
          %1555 = vmatpush1.bf16.msra.mxu0 0
          %1556 = vmatprep.subr.bf16.mxu0 0
          %1557 = vmatpush1.bf16.msra.mxu0 0
          %1558 = vmatprep.subr.bf16.mxu0 0
          %1559 = vmatpush1.bf16.msra.mxu0 %v1540
          %1560 = vmatprep.subr.bf16.mxu0 0
          %1561 = vmatpush1.bf16.msra.mxu0 %v1539
          %1562 = vmatprep.subr.bf16.mxu0 0
          %1563 = vmatpush2.bf16.msra.mxu0 0
          %1564 = vmatprep.subr.bf16.mxu0 0
          %1565 = vmatpush2.bf16.msra.mxu0 0
          %1566 = vmatprep.subr.bf16.mxu0 0
          %1567 = vmatpush2.bf16.msra.mxu0 0
          %1568 = vmatprep.subr.bf16.mxu0 0
          %1569 = vmatpush2.bf16.msra.mxu0 0
          %1570 = vmatprep.subr.bf16.mxu0 0
          %1571 = vmatpush2.bf16.msra.mxu0 0
          %1572 = vmatprep.subr.bf16.mxu0 0
          %1573 = vmatpush2.bf16.msra.mxu0 0
          %1574 = vmatprep.subr.bf16.mxu0 0
          %1575 = vmatpush2.bf16.msra.mxu0 0
          %1576 = vmatprep.subr.bf16.mxu0 0
          %1577 = vmatpush2.bf16.msra.mxu0 0
          %1578 = vmatprep.mubr.bf16.mxu0 0
          %1579 = vmatmul.mubr.bf16.gmra.mxu0 %v1544
          %v1580 = vpop.f32.mrf.mxu0
          %v1581 = vadd.f32 %v1530, %v1580
          %v1582 = vpop.f32.mrf.mxu0
          %v1583 = vpop.f32.mrf.mxu0
          %v1584 = vpop.f32.mrf.mxu0
          %1585 = vdwg.mxu0
          %v1586 = vsel %vm782, %v1581, 0.0
          %1587 = vadd.xlane.f32.xlu0 %v1586
          %v1588 = vpop.xlane.xlu0 %1587
          %v1589 = vrcp.pop 32.0
          %v1590 = vmul.f32 %v1588, %v1589
          %v1591 = vsub.f32 %v1581, %v1590
          %v1592 = vmul.f32 %v1591, %v1591
          %v1593 = vsel %vm782, %v1592, 0.0
          %1594 = vadd.xlane.f32.xlu0 %v1593
          %v1595 = vpop.xlane.xlu0 %1594
          %v1596 = vmul.f32 %v1595, %v1589
          %v1597 = vadd.f32 %v1596, 1e-06
          %v1598 = vrsqrt.pop %v1597
          %v1599 = vmul.f32 %v1591, %v1598
          %v1600 = vld [vmem:[%s6] sm:$0x1]
          %v1602 = vlaneseq
          %v1603 = vshrl.u32 %v1602, 7
          %v1604 = vsub.s32 0, %v1603
          %v1605 = vrot.slane %v1600, %v1604
          %v1607 = vmul.f32 %v1599, %v1605
          %v1608 = vld [vmem:[%s7] sm:$0x1]
          %v1610 = vlaneseq
          %v1611 = vshrl.u32 %v1610, 7
          %v1612 = vsub.s32 0, %v1611
          %v1613 = vrot.slane %v1608, %v1612
          %v1615 = vadd.f32 %v1607, %v1613
          %v1616 = vpack.c.bf16 %v1615, %v1615
          %v1617 = vld [vmem:[#allocation15] sm:$0xf]
          %v1618 = vld [vmem:[#allocation15 + $0x4] sm:$0xf]
          %v1619 = vld [vmem:[#allocation15 + $0x8] sm:$0xf]
          %v1620 = vld [vmem:[#allocation15 + $0xc] sm:$0xf]
          %v1621 = vld [vmem:[#allocation17] sm:$0x1]
          %v1623 = vlaneseq
          %v1624 = vshrl.u32 %v1623, 7
          %v1625 = vsub.s32 0, %v1624
          %v1626 = vrot.slane %v1621, %v1625
          %v1632 = vunpack.c.l.b16 %v1617
          %v1633 = vunpack.c.l.b16 %v1618
          %v1634 = vunpack.c.l.b16 %v1619
          %v1635 = vunpack.c.l.b16 %v1620
          %v1636 = vpack.c.b16 %v1633, %v1632
          %v1637 = vpack.c.b16 %v1635, %v1634
          %v1641 = vsel %vm782, %v1616, 0
          %1643 = vmatprep.subr.bf16.mxu0 0
          %1644 = vmatpush1.bf16.msra.mxu0 0
          %1645 = vmatprep.subr.bf16.mxu0 0
          %1646 = vmatpush1.bf16.msra.mxu0 0
          %1647 = vmatprep.subr.bf16.mxu0 0
          %1648 = vmatpush1.bf16.msra.mxu0 0
          %1649 = vmatprep.subr.bf16.mxu0 0
          %1650 = vmatpush1.bf16.msra.mxu0 0
          %1651 = vmatprep.subr.bf16.mxu0 0
          %1652 = vmatpush1.bf16.msra.mxu0 0
          %1653 = vmatprep.subr.bf16.mxu0 0
          %1654 = vmatpush1.bf16.msra.mxu0 0
          %1655 = vmatprep.subr.bf16.mxu0 0
          %1656 = vmatpush1.bf16.msra.mxu0 %v1637
          %1657 = vmatprep.subr.bf16.mxu0 0
          %1658 = vmatpush1.bf16.msra.mxu0 %v1636
          %1659 = vmatprep.subr.bf16.mxu0 0
          %1660 = vmatpush2.bf16.msra.mxu0 0
          %1661 = vmatprep.subr.bf16.mxu0 0
          %1662 = vmatpush2.bf16.msra.mxu0 0
          %1663 = vmatprep.subr.bf16.mxu0 0
          %1664 = vmatpush2.bf16.msra.mxu0 0
          %1665 = vmatprep.subr.bf16.mxu0 0
          %1666 = vmatpush2.bf16.msra.mxu0 0
          %1667 = vmatprep.subr.bf16.mxu0 0
          %1668 = vmatpush2.bf16.msra.mxu0 0
          %1669 = vmatprep.subr.bf16.mxu0 0
          %1670 = vmatpush2.bf16.msra.mxu0 0
          %1671 = vmatprep.subr.bf16.mxu0 0
          %1672 = vmatpush2.bf16.msra.mxu0 0
          %1673 = vmatprep.subr.bf16.mxu0 0
          %1674 = vmatpush2.bf16.msra.mxu0 0
          %1675 = vmatprep.mubr.bf16.mxu0 0
          %1676 = vmatmul.mubr.bf16.gmra.mxu0 %v1641
          %v1677 = vpop.f32.mrf.mxu0
          %v1678 = vadd.f32 %v1626, %v1677
          %v1679 = vpop.f32.mrf.mxu0
          %v1680 = vpop.f32.mrf.mxu0
          %v1681 = vpop.f32.mrf.mxu0
          %1682 = vdwg.mxu0
          %v1683 = vmax.f32 %v1678, 0.0
          %v1684 = vpack.c.bf16 %v1683, %v1683
          %v1685 = vld [vmem:[%s10] sm:$0xf]
          %v1686 = vld [vmem:[%s10 + $0x4] sm:$0xf]
          %v1687 = vld [vmem:[%s10 + $0x8] sm:$0xf]
          %v1688 = vld [vmem:[%s10 + $0xc] sm:$0xf]
          %v1689 = vld [vmem:[%s10 + $0x10] sm:$0xf]
          %v1690 = vld [vmem:[%s10 + $0x14] sm:$0xf]
          %v1691 = vld [vmem:[%s10 + $0x18] sm:$0xf]
          %v1692 = vld [vmem:[%s10 + $0x1c] sm:$0xf]
          %v1693 = vld [vmem:[%s11] sm:$0x1]
          %v1695 = vlaneseq
          %v1696 = vshrl.u32 %v1695, 7
          %v1697 = vsub.s32 0, %v1696
          %v1698 = vrot.slane %v1693, %v1697
          %v1708 = vunpack.c.l.b16 %v1685
          %v1709 = vunpack.c.l.b16 %v1686
          %v1710 = vunpack.c.l.b16 %v1687
          %v1711 = vunpack.c.l.b16 %v1688
          %v1712 = vunpack.c.l.b16 %v1689
          %v1713 = vunpack.c.l.b16 %v1690
          %v1714 = vunpack.c.l.b16 %v1691
          %v1715 = vunpack.c.l.b16 %v1692
          %v1716 = vpack.c.b16 %v1709, %v1708
          %v1717 = vpack.c.b16 %v1711, %v1710
          %v1718 = vpack.c.b16 %v1713, %v1712
          %v1719 = vpack.c.b16 %v1715, %v1714
          %vm1724 = vcmask 523264
          %v1726 = vsel %vm1724, %v1684, 0
          %1728 = vmatprep.subr.bf16.mxu0 0
          %1729 = vmatpush1.bf16.msra.mxu0 0
          %1730 = vmatprep.subr.bf16.mxu0 0
          %1731 = vmatpush1.bf16.msra.mxu0 0
          %1732 = vmatprep.subr.bf16.mxu0 0
          %1733 = vmatpush1.bf16.msra.mxu0 0
          %1734 = vmatprep.subr.bf16.mxu0 0
          %1735 = vmatpush1.bf16.msra.mxu0 0
          %1736 = vmatprep.subr.bf16.mxu0 0
          %1737 = vmatpush1.bf16.msra.mxu0 %v1719
          %1738 = vmatprep.subr.bf16.mxu0 0
          %1739 = vmatpush1.bf16.msra.mxu0 %v1718
          %1740 = vmatprep.subr.bf16.mxu0 0
          %1741 = vmatpush1.bf16.msra.mxu0 %v1717
          %1742 = vmatprep.subr.bf16.mxu0 0
          %1743 = vmatpush1.bf16.msra.mxu0 %v1716
          %1744 = vmatprep.subr.bf16.mxu0 0
          %1745 = vmatpush2.bf16.msra.mxu0 0
          %1746 = vmatprep.subr.bf16.mxu0 0
          %1747 = vmatpush2.bf16.msra.mxu0 0
          %1748 = vmatprep.subr.bf16.mxu0 0
          %1749 = vmatpush2.bf16.msra.mxu0 0
          %1750 = vmatprep.subr.bf16.mxu0 0
          %1751 = vmatpush2.bf16.msra.mxu0 0
          %1752 = vmatprep.subr.bf16.mxu0 0
          %1753 = vmatpush2.bf16.msra.mxu0 0
          %1754 = vmatprep.subr.bf16.mxu0 0
          %1755 = vmatpush2.bf16.msra.mxu0 0
          %1756 = vmatprep.subr.bf16.mxu0 0
          %1757 = vmatpush2.bf16.msra.mxu0 0
          %1758 = vmatprep.subr.bf16.mxu0 0
          %1759 = vmatpush2.bf16.msra.mxu0 0
          %1760 = vmatprep.mubr.bf16.mxu0 0
          %1761 = vmatmul.mubr.bf16.gmra.mxu0 %v1726
          %v1762 = vpop.f32.mrf.mxu0
          %v1763 = vadd.f32 %v1698, %v1762
          %v1764 = vpop.f32.mrf.mxu0
          %v1765 = vpop.f32.mrf.mxu0
          %v1766 = vpop.f32.mrf.mxu0
          %1767 = vdwg.mxu0
          %v1768 = vadd.f32 %v1763, %v1615
          %v1769 = vsel %vm782, %v1768, 0.0
          %1770 = vadd.xlane.f32.xlu0 %v1769
          %v1771 = vpop.xlane.xlu0 %1770
          %v1772 = vmul.f32 %v1771, %v1589
          %v1773 = vsub.f32 %v1768, %v1772
          %v1774 = vmul.f32 %v1773, %v1773
          %v1775 = vsel %vm782, %v1774, 0.0
          %1776 = vadd.xlane.f32.xlu0 %v1775
          %v1777 = vpop.xlane.xlu0 %1776
          %v1778 = vmul.f32 %v1777, %v1589
          %v1779 = vadd.f32 %v1778, 1e-06
          %v1780 = vrsqrt.pop %v1779
          %v1781 = vmul.f32 %v1773, %v1780
          %v1782 = vld [vmem:[%s12] sm:$0x1]
          %v1784 = vlaneseq
          %v1785 = vshrl.u32 %v1784, 7
          %v1786 = vsub.s32 0, %v1785
          %v1787 = vrot.slane %v1782, %v1786
          %v1789 = vmul.f32 %v1781, %v1787
          %v1790 = vld [vmem:[%s13] sm:$0x1]
          %v1792 = vlaneseq
          %v1793 = vshrl.u32 %v1792, 7
          %v1794 = vsub.s32 0, %v1793
          %v1795 = vrot.slane %v1790, %v1794
          %v1797 = vadd.f32 %v1789, %v1795
          %1798 = vst.msk [vmem:[%s640] sm:$0xff] %vm782, %v1797
        $region104: #{tpu_custom_call.1} parent=75 // pred_fallthru
          _
        %s1799 = sand.u32 %s384, 1
        %s1800 = scalar_lea.sflag [#allocation11], %s1799
        %s1801 = sand.u32 %s384, 1
        %s1802 = smul.addr %s1801, 8
        %s1803 = scalar_lea.vmem [#allocation18], %s1802
        %s1804 = sand.u32 %s412, 1
        %s1805 = scalar_lea.sflag [#allocation20], %s1804
        %s1806 = sand.u32 %s412, 1
        %s1807 = smul.addr %s1806, 32
        %s1808 = scalar_lea.vmem [#allocation19], %s1807
        // Predicated region
        $region105: #{tpu_custom_call.1} parent=75 // pred_check
          %p1809 = pneg %p394
        $region106: #{tpu_custom_call.1} parent=75 // pred_check_branch
          %1811 = sbr.rel (%p1809) target = $region108
        $region107: #{tpu_custom_call.1} parent=75 // pred_region
          %s1813 = ssub.s32 128, 128
          %1814 = vsyncadd %s1800, %s1813
          %s1815 = sadd.s32 %s44, %s43
          %s1816 = smul.addr %s1815, 128
          %s1817 = scalar_lea.hbm %s14, %s1816
          %s1819 = sshll.u32 %s1803, 4
          %s1820 = int_to_ptr.vmem [resolvable:$true] %s1819
          %1822 = dma.vmem_to_hbm [thread:$0]  %s1820, 128, %s1817, %s1800
        $region108: #{tpu_custom_call.1} parent=75 // pred_fallthru
          _
        // Predicated region
        $region109: #{tpu_custom_call.1} parent=75 // pred_check
          %p1823 = pneg %p422
        $region110: #{tpu_custom_call.1} parent=75 // pred_check_branch
          %1825 = sbr.rel (%p1823) target = $region112
        $region111: #{tpu_custom_call.1} parent=75 // pred_region
          %s1827 = ssub.s32 512, 512
          %1828 = vsyncadd %s1805, %s1827
          %s1829 = smul.addr %s43, 4
          %s1830 = sadd.s32 %s44, %s1829
          %s1831 = smul.addr %s1830, 128
          %s1832 = scalar_lea.hbm %s15, %s1831
          %s1833 = sshll.u32 %s1808, 4
          %s1834 = int_to_ptr.vmem [resolvable:$true] %s1833
          %1839 = dma.vmem_to_hbm [thread:$0]  %s1834, 512, %s1832, %s1805, 128, 128, 8
        $region112: #{tpu_custom_call.1} parent=75 // pred_fallthru
          _
      $region76: #{tpu_custom_call.1} parent=5 // pred_fallthru
        _
      %p1840 = scmp.le.s32.totalorder 2, %s33
      // Predicated region
      $region113: #{tpu_custom_call.1} parent=5 // pred_check
        %p1841 = pneg %p1840
      $region114: #{tpu_custom_call.1} parent=5 // pred_check_branch
        %1843 = sbr.rel (%p1841) target = $region116
      $region115: #{tpu_custom_call.1} parent=5 // pred_region
        %s1844 = ssub.s32 %s33, 2
        // Predicated region
        $region117: #{tpu_custom_call.1} parent=115 // pred_check
          %p1845 = pneg %p400
        $region118: #{tpu_custom_call.1} parent=115 // pred_check_branch
          %1847 = sbr.rel (%p1845) target = $region120
        $region119: #{tpu_custom_call.1} parent=115 // pred_region
          %s1848 = sand.u32 %s385, 1
          %s1849 = scalar_lea.sflag [#allocation11], %s1848
          %s1850 = sand.u32 %s385, 1
          %s1851 = smul.addr %s1850, 8
          %s1852 = scalar_lea.vmem [#allocation18], %s1851
          %1853 = dma.done %s1849, 128
        $region120: #{tpu_custom_call.1} parent=115 // pred_fallthru
          _
        // Predicated region
        $region121: #{tpu_custom_call.1} parent=115 // pred_check
          %p1854 = pneg %p428
        $region122: #{tpu_custom_call.1} parent=115 // pred_check_branch
          %1856 = sbr.rel (%p1854) target = $region124
        $region123: #{tpu_custom_call.1} parent=115 // pred_region
          %s1857 = sand.u32 %s413, 1
          %s1858 = scalar_lea.sflag [#allocation20], %s1857
          %s1859 = sand.u32 %s413, 1
          %s1860 = smul.addr %s1859, 32
          %s1861 = scalar_lea.vmem [#allocation19], %s1860
          %1862 = dma.done %s1858, 512
        $region124: #{tpu_custom_call.1} parent=115 // pred_fallthru
          _
      $region116: #{tpu_custom_call.1} parent=5 // pred_fallthru
        _
    $region6: #{tpu_custom_call.1} parent=1 // loop_footer
      %s37 = sadd.s32 1, %s33
    $region7: #{tpu_custom_call.1} parent=1 // loop_footer_branch
      %32 = sbr.rel target = $region3
    $region8: #{tpu_custom_call.1} parent=1 // loop_exit
      _
    %1863 = vsyncpa [#allocation10], 1
    %s1864 = scalar_lea.sflag [#allocation10], 1
    %1865 = vsyncpa %s1864, 1
    %1866 = vsyncpa [#allocation13], 1
    %1867 = vsyncpa [#allocation16], 1
    %1868 = vsyncpa [#allocation11], 1
    %s1869 = scalar_lea.sflag [#allocation11], 1
    %1870 = vsyncpa %s1869, 1
    %1871 = vsyncpa [#allocation20], 1
    %s1872 = scalar_lea.sflag [#allocation20], 1
    %1873 = vsyncpa %s1872, 1

</llo_original>
